<compile_context>
chip_gen: v7x
topology: tpu7x:2x2x1
jax: 0.10.0
libtpu: 0.0.40
codegen_flags: <defaults>
</compile_context>

<pallas_src>
import functools

import jax
import jax.numpy as jnp
from jax.experimental import pallas as pl
from jax.experimental.pallas import tpu as pltpu


def miml_kernel(x_ref, w13_ref, b13_ref, w2_ref, b2_ref, w4_ref, b4_ref,
                yprob_ref, att_ref, *, block_bags, n_instances, hidden):
    """One grid step processes `block_bags` bags of `n_instances` instances.

    x_ref         : (block_bags*n_instances, L)  matmul dtype (bf16 by default)
    w13_ref       : (L, 2*hidden)                fused [iclassifier | det] layer 1
    b13_ref       : (1, 2*hidden)  f32
    w2_ref/w4_ref : (hidden, K)                  layer 2 of each branch
    b2_ref/b4_ref : (1, K)         f32
    yprob_ref     : (block_bags, K)
    att_ref       : (block_bags, n_instances, K)
    """
    x = x_ref[...]                                             # (rows, L)

    # Fused first layer: both branches share the same LHS -> one MXU pass.
    h = jnp.dot(x, w13_ref[...], preferred_element_type=jnp.float32)
    h = jnp.maximum(h + b13_ref[...], 0.0)                     # (rows, 2D) f32

    h1 = h[:, :hidden].astype(w2_ref.dtype)                    # iclassifier hidden
    h2 = h[:, hidden:].astype(w4_ref.dtype)                    # det hidden

    y_logits = jnp.dot(h1, w2_ref[...],
                       preferred_element_type=jnp.float32) + b2_ref[...]
    z_logits = jnp.dot(h2, w4_ref[...],
                       preferred_element_type=jnp.float32) + b4_ref[...]

    k = y_logits.shape[-1]
    y_logits = y_logits.reshape(block_bags, n_instances, k)
    z_logits = z_logits.reshape(block_bags, n_instances, k)

    # softmax over the instance axis (PyTorch softmax(z, dim=1)), per bag & label.
    z_max = jnp.max(z_logits, axis=1, keepdims=True)
    z_exp = jnp.exp(z_logits - z_max)
    z_sum = jnp.sum(z_exp, axis=1, keepdims=True)
    z = z_exp * pl.reciprocal(z_sum, approx=True)              # EUP vrcp, ~free

    att = z * jax.nn.sigmoid(y_logits)                         # (TB, N, K) f32
    att_ref[...] = att
    yprob_ref[...] = jnp.sum(att, axis=1)                      # (TB, K)


def _pick_block_bags(batch, n_instances):
    """Choose bags-per-step: sublane-aligned output blocks, >=2 grid steps when
    possible (v7x megacore), and ~128-256 MXU rows per step."""
    divisors = [tb for tb in range(1, batch + 1) if batch % tb == 0]

    def goodness(tb):
        rows = tb * n_instances
        return (
            tb % 8 == 0 or tb == batch,   # sublane-aligned (TB, K) output blocks
            batch // tb >= 2,             # >= 2 grid steps (two v7x TensorCores)
            rows >= 128,                  # decent MXU row occupancy
            -abs(rows - 256),             # aim for ~256-row LHS tiles
        )

    return max(divisors, key=goodness)


def miml_forward(x, params, *, block_bags=None, matmul_dtype=jnp.bfloat16):
    """x: (B, N, L) float32. params: dict of pre-transposed (in, out) weights."""
    B, N, L = x.shape
    D = params["w1"].shape[1]
    K = params["w2"].shape[1]

    if block_bags is None:
        block_bags = _pick_block_bags(B, N)
    TB = block_bags
    assert B % TB == 0, "batch must be divisible by block_bags"
    rows = TB * N

    # Fused first-layer params; matmul operands stored in bf16, biases in f32.
    w13 = jnp.concatenate([params["w1"], params["w3"]], axis=1).astype(matmul_dtype)
    b13 = jnp.concatenate([params["b1"], params["b3"]]).reshape(1, 2 * D).astype(jnp.float32)
    w2 = params["w2"].astype(matmul_dtype)
    w4 = params["w4"].astype(matmul_dtype)
    b2 = params["b2"].reshape(1, K).astype(jnp.float32)
    b4 = params["b4"].reshape(1, K).astype(jnp.float32)

    # Flatten bags x instances into MXU rows; cast once (halves the x DMA).
    x2 = x.reshape(B * N, L).astype(matmul_dtype)

    kernel = functools.partial(miml_kernel, block_bags=TB, n_instances=N, hidden=D)

    out_shape = (
        jax.ShapeDtypeStruct((B, K), jnp.float32),      # Y_prob
        jax.ShapeDtypeStruct((B, N, K), jnp.float32),   # att_both
    )

    wbytes = jnp.dtype(matmul_dtype).itemsize
    cost = pl.CostEstimate(
        flops=2 * B * N * (L * 2 * D + 2 * D * K),
        transcendentals=3 * B * N * K,
        bytes_accessed=(B * N * L * wbytes
                        + (L * 2 * D + 2 * D * K) * wbytes
                        + (2 * D + 2 * K) * 4
                        + (B * K + B * N * K) * 4),
    )

    # Explicit VMEM budget (single-buffered weights + double-buffered x/outputs
    # + rough activation headroom); keeps v7x's 64 MiB happy at production sizes.
    weight_bytes = (L * 2 * D + 2 * D * K) * wbytes + (2 * D + 2 * K) * 4
    step_bytes = rows * L * wbytes + (TB * K + TB * N * K) * 4
    act_bytes = 3 * rows * 2 * D * 4
    vmem_limit = int(min(max(2 * (weight_bytes + 2 * step_bytes + act_bytes),
                             32 * 1024 * 1024),
                         100 * 1024 * 1024))

    def build(single_buffer_weights):
        w_kwargs = {}
        if single_buffer_weights:
            # Constant index map -> double-buffering the weights is pure VMEM waste.
            w_kwargs = dict(pipeline_mode=pl.Buffered(1))

        def const_spec(shape):
            return pl.BlockSpec(shape, lambda i: (0,) * len(shape), **w_kwargs)

        grid_spec = pltpu.PrefetchScalarGridSpec(
            num_scalar_prefetch=0,
            grid=(B // TB,),
            in_specs=[
                pl.BlockSpec((rows, L), lambda i: (i, 0)),     # x: TB bags per step
                const_spec((L, 2 * D)), const_spec((1, 2 * D)),
                const_spec((D, K)), const_spec((1, K)),
                const_spec((D, K)), const_spec((1, K)),
            ],
            out_specs=[
                pl.BlockSpec((TB, K), lambda i: (i, 0)),       # Y_prob (sublane-dense)
                pl.BlockSpec((TB, N, K), lambda i: (i, 0, 0)),  # att_both
            ],
        )
        return pl.pallas_call(
            kernel,
            grid_spec=grid_spec,
            out_shape=out_shape,
            cost_estimate=cost,
            compiler_params=pltpu.CompilerParams(
                dimension_semantics=("parallel",),
                vmem_limit_bytes=vmem_limit,
            ),
        )

    args = (x2, w13, b13, w2, b2, w4, b4)
    try:
        y_prob, att = build(single_buffer_weights=True)(*args)
    except Exception:
        # pl.Buffered(1) not supported by this jax version -> default buffering.
        y_prob, att = build(single_buffer_weights=False)(*args)

    # Y_hat is one VPU compare on a tiny array: cheaper in the wrapper than as an
    # extra narrow masked-store output stream from the kernel.
    y_hat = (y_prob >= 0.5).astype(jnp.float32)
    return y_prob, y_hat, att


def miml_reference(x, params):
    """Pure-JAX (f32) reference mirroring the PyTorch forward."""
    def mlp(x, w1, b1, w2, b2):
        h = jnp.maximum(x @ w1 + b1, 0.0)
        return h @ w2 + b2

    y = mlp(x, params["w1"], params["b1"], params["w2"], params["b2"])
    z = mlp(x, params["w3"], params["b3"], params["w4"], params["b4"])
    z = jax.nn.softmax(z, axis=1)
    att = z * jax.nn.sigmoid(y)
    y_prob = jnp.sum(att, axis=1)
    y_hat = (y_prob >= 0.5).astype(jnp.float32)
    return y_prob, y_hat, att


if __name__ == "__main__":
    # Small shapes consistent with the module: bags of N instances of dim L and
    # two (L -> D -> K) MLP heads.  (Production: L=2048, D=1024, K=n_labels.)
    B, N, L, D, K = 32, 8, 256, 128, 16

    key = jax.random.PRNGKey(0)
    keys = jax.random.split(key, 9)

    def init_linear(kw, kb, fan_in, fan_out):
        # Deterministic, PyTorch-Linear-like uniform init; stored as (in, out).
        bound = 1.0 / jnp.sqrt(fan_in)
        w = jax.random.uniform(kw, (fan_in, fan_out), jnp.float32, -bound, bound)
        b = jax.random.uniform(kb, (fan_out,), jnp.float32, -bound, bound)
        return w, b

    w1, b1 = init_linear(keys[0], keys[1], L, D)
    w2, b2 = init_linear(keys[2], keys[3], D, K)
    w3, b3 = init_linear(keys[4], keys[5], L, D)
    w4, b4 = init_linear(keys[6], keys[7], D, K)
    params = dict(w1=w1, b1=b1, w2=w2, b2=b2, w3=w3, b3=b3, w4=w4, b4=b4)

    x = jax.random.normal(keys[8], (B, N, L), jnp.float32)

    y_prob, y_hat, att = jax.block_until_ready(miml_forward(x, params))
    y_prob_ref, y_hat_ref, att_ref = miml_reference(x, params)

    # bf16 matmul operands + approximate reciprocal -> loosened tolerances.
    assert jnp.allclose(y_prob, y_prob_ref, atol=3e-2, rtol=3e-2), \
        float(jnp.max(jnp.abs(y_prob - y_prob_ref)))
    assert jnp.allclose(att, att_ref, atol=3e-2, rtol=3e-2), \
        float(jnp.max(jnp.abs(att - att_ref)))
    # Y_hat is a hard threshold of Y_prob: check self-consistency, and agreement
    # with the f32 reference away from the 0.5 decision boundary (bf16 can
    # legitimately flip exact ties).
    assert jnp.array_equal(y_hat, (y_prob >= 0.5).astype(jnp.float32))
    away = jnp.abs(y_prob_ref - 0.5) > 0.05
    assert bool(jnp.all(jnp.where(away, y_hat == y_hat_ref, True)))

    print("KERNEL_OK")
</pallas_src>

<mosaic_0001>
module attributes {stable_mosaic.version = 11 : i64} {
  func.func @miml_kernel(%arg0: i32, %arg1: memref<128x256xbf16, #tpu.memory_space<vmem>>, %arg2: memref<256x256xbf16, #tpu.memory_space<vmem>>, %arg3: memref<1x256xf32, #tpu.memory_space<vmem>>, %arg4: memref<128x16xbf16, #tpu.memory_space<vmem>>, %arg5: memref<1x16xf32, #tpu.memory_space<vmem>>, %arg6: memref<128x16xbf16, #tpu.memory_space<vmem>>, %arg7: memref<1x16xf32, #tpu.memory_space<vmem>>, %arg8: memref<16x16xf32, #tpu.memory_space<vmem>>, %arg9: memref<16x8x16xf32, #tpu.memory_space<vmem>>) attributes {dimension_semantics = [#tpu.dimension_semantics<parallel>], iteration_bounds = array<i64: 2>, scalar_prefetch = 0 : i64, scratch_operands = 0 : i64, tpu.core_type = #tpu.core_type<tc>, window_params = [{transform_indices = @transform_0, window_bounds = array<i64: 128, 256>}, {pipeline_mode = #tpu.pipeline_mode<synchronous>, transform_indices = @transform_1, window_bounds = array<i64: 256, 256>}, {pipeline_mode = #tpu.pipeline_mode<synchronous>, transform_indices = @transform_2, window_bounds = array<i64: 1, 256>}, {pipeline_mode = #tpu.pipeline_mode<synchronous>, transform_indices = @transform_3, window_bounds = array<i64: 128, 16>}, {pipeline_mode = #tpu.pipeline_mode<synchronous>, transform_indices = @transform_4, window_bounds = array<i64: 1, 16>}, {pipeline_mode = #tpu.pipeline_mode<synchronous>, transform_indices = @transform_5, window_bounds = array<i64: 128, 16>}, {pipeline_mode = #tpu.pipeline_mode<synchronous>, transform_indices = @transform_6, window_bounds = array<i64: 1, 16>}, {transform_indices = @transform_7, window_bounds = array<i64: 16, 16>}, {transform_indices = @transform_8, window_bounds = array<i64: 16, 8, 16>}]} {
    %c0 = arith.constant 0 : index
    %c0_0 = arith.constant 0 : index
    %0 = vector.load %arg1[%c0, %c0_0] : memref<128x256xbf16, #tpu.memory_space<vmem>>, vector<128x256xbf16>
    %c0_1 = arith.constant 0 : index
    %c0_2 = arith.constant 0 : index
    %1 = vector.load %arg2[%c0_1, %c0_2] : memref<256x256xbf16, #tpu.memory_space<vmem>>, vector<256x256xbf16>
    %cst = arith.constant dense<0.000000e+00> : vector<128x256xf32>
    %2 = tpu.matmul %0, %1, %cst {dimension_numbers = #tpu.dot_dimension_numbers<[1], [0], [0], [1], [0, 0, 1, 1], [], []>} : vector<128x256xbf16>, vector<256x256xbf16>, vector<128x256xf32> -> vector<128x256xf32>
    %c0_3 = arith.constant 0 : index
    %c0_4 = arith.constant 0 : index
    %3 = vector.load %arg3[%c0_3, %c0_4] : memref<1x256xf32, #tpu.memory_space<vmem>>, vector<1x256xf32>
    %4 = vector.broadcast %3 : vector<1x256xf32> to vector<128x256xf32>
    %5 = arith.addf %2, %4 : vector<128x256xf32>
    %cst_5 = arith.constant 0.000000e+00 : f32
    %6 = vector.broadcast %cst_5 : f32 to vector<128x256xf32>
    %7 = arith.maximumf %5, %6 : vector<128x256xf32>
    %8 = vector.extract_strided_slice %7 {offsets = [0, 0], sizes = [128, 128], strides = [1, 1]} : vector<128x256xf32> to vector<128x128xf32>
    %9 = arith.truncf %8 : vector<128x128xf32> to vector<128x128xbf16>
    %10 = vector.extract_strided_slice %7 {offsets = [0, 128], sizes = [128, 128], strides = [1, 1]} : vector<128x256xf32> to vector<128x128xf32>
    %11 = arith.truncf %10 : vector<128x128xf32> to vector<128x128xbf16>
    %c0_6 = arith.constant 0 : index
    %c0_7 = arith.constant 0 : index
    %12 = vector.load %arg4[%c0_6, %c0_7] : memref<128x16xbf16, #tpu.memory_space<vmem>>, vector<128x16xbf16>
    %cst_8 = arith.constant dense<0.000000e+00> : vector<128x16xf32>
    %13 = tpu.matmul %9, %12, %cst_8 {dimension_numbers = #tpu.dot_dimension_numbers<[1], [0], [0], [1], [0, 0, 1, 1], [], []>} : vector<128x128xbf16>, vector<128x16xbf16>, vector<128x16xf32> -> vector<128x16xf32>
    %c0_9 = arith.constant 0 : index
    %c0_10 = arith.constant 0 : index
    %14 = vector.load %arg5[%c0_9, %c0_10] : memref<1x16xf32, #tpu.memory_space<vmem>>, vector<1x16xf32>
    %15 = vector.broadcast %14 : vector<1x16xf32> to vector<128x16xf32>
    %16 = arith.addf %13, %15 : vector<128x16xf32>
    %c0_11 = arith.constant 0 : index
    %c0_12 = arith.constant 0 : index
    %17 = vector.load %arg6[%c0_11, %c0_12] : memref<128x16xbf16, #tpu.memory_space<vmem>>, vector<128x16xbf16>
    %cst_13 = arith.constant dense<0.000000e+00> : vector<128x16xf32>
    %18 = tpu.matmul %11, %17, %cst_13 {dimension_numbers = #tpu.dot_dimension_numbers<[1], [0], [0], [1], [0, 0, 1, 1], [], []>} : vector<128x128xbf16>, vector<128x16xbf16>, vector<128x16xf32> -> vector<128x16xf32>
    %c0_14 = arith.constant 0 : index
    %c0_15 = arith.constant 0 : index
    %19 = vector.load %arg7[%c0_14, %c0_15] : memref<1x16xf32, #tpu.memory_space<vmem>>, vector<1x16xf32>
    %20 = vector.broadcast %19 : vector<1x16xf32> to vector<128x16xf32>
    %21 = arith.addf %18, %20 : vector<128x16xf32>
    %22 = vector.shape_cast %16 : vector<128x16xf32> to vector<16x8x16xf32>
    %23 = vector.shape_cast %21 : vector<128x16xf32> to vector<16x8x16xf32>
    %cst_16 = arith.constant dense<0xFF800000> : vector<16x16xf32>
    %24 = vector.multi_reduction <maximumf>, %23, %cst_16 [1] : vector<16x8x16xf32> to vector<16x16xf32>
    %25 = vector.shape_cast %24 : vector<16x16xf32> to vector<16x1x16xf32>
    %26 = vector.broadcast %25 : vector<16x1x16xf32> to vector<16x8x16xf32>
    %27 = arith.subf %23, %26 : vector<16x8x16xf32>
    %28 = math.exp %27 : vector<16x8x16xf32>
    %cst_17 = arith.constant dense<0.000000e+00> : vector<16x16xf32>
    %29 = vector.multi_reduction <add>, %28, %cst_17 [1] : vector<16x8x16xf32> to vector<16x16xf32>
    %30 = vector.shape_cast %29 : vector<16x16xf32> to vector<16x1x16xf32>
    %31 = tpu.reciprocal %30 {approx = true} : vector<16x1x16xf32> -> vector<16x1x16xf32>
    %32 = vector.broadcast %31 : vector<16x1x16xf32> to vector<16x8x16xf32>
    %33 = arith.mulf %28, %32 : vector<16x8x16xf32>
    %34 = arith.negf %22 : vector<16x8x16xf32>
    %35 = math.exp %34 : vector<16x8x16xf32>
    %cst_18 = arith.constant 1.000000e+00 : f32
    %36 = vector.broadcast %cst_18 : f32 to vector<16x8x16xf32>
    %37 = arith.addf %36, %35 : vector<16x8x16xf32>
    %38 = arith.divf %36, %37 : vector<16x8x16xf32>
    %39 = arith.mulf %33, %38 : vector<16x8x16xf32>
    %c0_19 = arith.constant 0 : index
    %c0_20 = arith.constant 0 : index
    %c0_21 = arith.constant 0 : index
    %40 = vector.load %arg9[%c0_19, %c0_20, %c0_21] : memref<16x8x16xf32, #tpu.memory_space<vmem>>, vector<16x8x16xf32>
    tpu.vector_store %arg9[%c0_19, %c0_20, %c0_21], %39 {strides = array<i32>} : memref<16x8x16xf32, #tpu.memory_space<vmem>>, vector<16x8x16xf32>,
    %cst_22 = arith.constant dense<0.000000e+00> : vector<16x16xf32>
    %41 = vector.multi_reduction <add>, %39, %cst_22 [1] : vector<16x8x16xf32> to vector<16x16xf32>
    %c0_23 = arith.constant 0 : index
    %c0_24 = arith.constant 0 : index
    %42 = vector.load %arg8[%c0_23, %c0_24] : memref<16x16xf32, #tpu.memory_space<vmem>>, vector<16x16xf32>
    tpu.vector_store %arg8[%c0_23, %c0_24], %41 {strides = array<i32>} : memref<16x16xf32, #tpu.memory_space<vmem>>, vector<16x16xf32>,
    return
  }
  func.func @transform_0(%arg0: i32) -> (i32, i32) {
    %c0_i32 = arith.constant 0 : i32
    %c0_i32_0 = arith.constant 0 : i32
    return %arg0, %c0_i32 : i32, i32
  }
  func.func @transform_1(%arg0: i32) -> (i32, i32) {
    %c0_i32 = arith.constant 0 : i32
    %c0_i32_0 = arith.constant 0 : i32
    %c0_i32_1 = arith.constant 0 : i32
    return %c0_i32, %c0_i32_0 : i32, i32
  }
  func.func @transform_2(%arg0: i32) -> (i32, i32) {
    %c0_i32 = arith.constant 0 : i32
    %c0_i32_0 = arith.constant 0 : i32
    %c0_i32_1 = arith.constant 0 : i32
    return %c0_i32, %c0_i32_0 : i32, i32
  }
  func.func @transform_3(%arg0: i32) -> (i32, i32) {
    %c0_i32 = arith.constant 0 : i32
    %c0_i32_0 = arith.constant 0 : i32
    %c0_i32_1 = arith.constant 0 : i32
    return %c0_i32, %c0_i32_0 : i32, i32
  }
  func.func @transform_4(%arg0: i32) -> (i32, i32) {
    %c0_i32 = arith.constant 0 : i32
    %c0_i32_0 = arith.constant 0 : i32
    %c0_i32_1 = arith.constant 0 : i32
    return %c0_i32, %c0_i32_0 : i32, i32
  }
  func.func @transform_5(%arg0: i32) -> (i32, i32) {
    %c0_i32 = arith.constant 0 : i32
    %c0_i32_0 = arith.constant 0 : i32
    %c0_i32_1 = arith.constant 0 : i32
    return %c0_i32, %c0_i32_0 : i32, i32
  }
  func.func @transform_6(%arg0: i32) -> (i32, i32) {
    %c0_i32 = arith.constant 0 : i32
    %c0_i32_0 = arith.constant 0 : i32
    %c0_i32_1 = arith.constant 0 : i32
    return %c0_i32, %c0_i32_0 : i32, i32
  }
  func.func @transform_7(%arg0: i32) -> (i32, i32) {
    %c0_i32 = arith.constant 0 : i32
    %c0_i32_0 = arith.constant 0 : i32
    return %arg0, %c0_i32 : i32, i32
  }
  func.func @transform_8(%arg0: i32) -> (i32, i32, i32) {
    %c0_i32 = arith.constant 0 : i32
    %c0_i32_0 = arith.constant 0 : i32
    %c0_i32_1 = arith.constant 0 : i32
    return %arg0, %c0_i32, %c0_i32_0 : i32, i32, i32
  }
}

module attributes {stable_mosaic.version = 11 : i64} {
  func.func @miml_kernel(%arg0: i32, %arg1: memref<128x256xbf16, #tpu.memory_space<vmem>>, %arg2: memref<256x256xbf16, #tpu.memory_space<vmem>>, %arg3: memref<1x256xf32, #tpu.memory_space<vmem>>, %arg4: memref<128x16xbf16, #tpu.memory_space<vmem>>, %arg5: memref<1x16xf32, #tpu.memory_space<vmem>>, %arg6: memref<128x16xbf16, #tpu.memory_space<vmem>>, %arg7: memref<1x16xf32, #tpu.memory_space<vmem>>, %arg8: memref<16x16xf32, #tpu.memory_space<vmem>>, %arg9: memref<16x8x16xf32, #tpu.memory_space<vmem>>) attributes {dimension_semantics = [#tpu.dimension_semantics<parallel>], iteration_bounds = array<i64: 2>, scalar_prefetch = 0 : i64, scratch_operands = 0 : i64, tpu.core_type = #tpu.core_type<tc>, window_params = [{transform_indices = @transform_0, window_bounds = array<i64: 128, 256>}, {pipeline_mode = #tpu.pipeline_mode<synchronous>, transform_indices = @transform_1, window_bounds = array<i64: 256, 256>}, {pipeline_mode = #tpu.pipeline_mode<synchronous>, transform_indices = @transform_2, window_bounds = array<i64: 1, 256>}, {pipeline_mode = #tpu.pipeline_mode<synchronous>, transform_indices = @transform_3, window_bounds = array<i64: 128, 16>}, {pipeline_mode = #tpu.pipeline_mode<synchronous>, transform_indices = @transform_4, window_bounds = array<i64: 1, 16>}, {pipeline_mode = #tpu.pipeline_mode<synchronous>, transform_indices = @transform_5, window_bounds = array<i64: 128, 16>}, {pipeline_mode = #tpu.pipeline_mode<synchronous>, transform_indices = @transform_6, window_bounds = array<i64: 1, 16>}, {transform_indices = @transform_7, window_bounds = array<i64: 16, 16>}, {transform_indices = @transform_8, window_bounds = array<i64: 16, 8, 16>}]} {
    %c0 = arith.constant 0 : index
    %c0_0 = arith.constant 0 : index
    %0 = vector.load %arg1[%c0, %c0_0] : memref<128x256xbf16, #tpu.memory_space<vmem>>, vector<128x256xbf16>
    %c0_1 = arith.constant 0 : index
    %c0_2 = arith.constant 0 : index
    %1 = vector.load %arg2[%c0_1, %c0_2] : memref<256x256xbf16, #tpu.memory_space<vmem>>, vector<256x256xbf16>
    %cst = arith.constant dense<0.000000e+00> : vector<128x256xf32>
    %2 = tpu.matmul %0, %1, %cst {dimension_numbers = #tpu.dot_dimension_numbers<[1], [0], [0], [1], [0, 0, 1, 1], [], []>} : vector<128x256xbf16>, vector<256x256xbf16>, vector<128x256xf32> -> vector<128x256xf32>
    %c0_3 = arith.constant 0 : index
    %c0_4 = arith.constant 0 : index
    %3 = vector.load %arg3[%c0_3, %c0_4] : memref<1x256xf32, #tpu.memory_space<vmem>>, vector<1x256xf32>
    %4 = vector.broadcast %3 : vector<1x256xf32> to vector<128x256xf32>
    %5 = arith.addf %2, %4 : vector<128x256xf32>
    %cst_5 = arith.constant 0.000000e+00 : f32
    %6 = vector.broadcast %cst_5 : f32 to vector<128x256xf32>
    %7 = arith.maximumf %5, %6 : vector<128x256xf32>
    %8 = vector.extract_strided_slice %7 {offsets = [0, 0], sizes = [128, 128], strides = [1, 1]} : vector<128x256xf32> to vector<128x128xf32>
    %9 = arith.truncf %8 : vector<128x128xf32> to vector<128x128xbf16>
    %10 = vector.extract_strided_slice %7 {offsets = [0, 128], sizes = [128, 128], strides = [1, 1]} : vector<128x256xf32> to vector<128x128xf32>
    %11 = arith.truncf %10 : vector<128x128xf32> to vector<128x128xbf16>
    %c0_6 = arith.constant 0 : index
    %c0_7 = arith.constant 0 : index
    %12 = vector.load %arg4[%c0_6, %c0_7] : memref<128x16xbf16, #tpu.memory_space<vmem>>, vector<128x16xbf16>
    %cst_8 = arith.constant dense<0.000000e+00> : vector<128x16xf32>
    %13 = tpu.matmul %9, %12, %cst_8 {dimension_numbers = #tpu.dot_dimension_numbers<[1], [0], [0], [1], [0, 0, 1, 1], [], []>} : vector<128x128xbf16>, vector<128x16xbf16>, vector<128x16xf32> -> vector<128x16xf32>
    %c0_9 = arith.constant 0 : index
    %c0_10 = arith.constant 0 : index
    %14 = vector.load %arg5[%c0_9, %c0_10] : memref<1x16xf32, #tpu.memory_space<vmem>>, vector<1x16xf32>
    %15 = vector.broadcast %14 : vector<1x16xf32> to vector<128x16xf32>
    %16 = arith.addf %13, %15 : vector<128x16xf32>
    %c0_11 = arith.constant 0 : index
    %c0_12 = arith.constant 0 : index
    %17 = vector.load %arg6[%c0_11, %c0_12] : memref<128x16xbf16, #tpu.memory_space<vmem>>, vector<128x16xbf16>
    %cst_13 = arith.constant dense<0.000000e+00> : vector<128x16xf32>
    %18 = tpu.matmul %11, %17, %cst_13 {dimension_numbers = #tpu.dot_dimension_numbers<[1], [0], [0], [1], [0, 0, 1, 1], [], []>} : vector<128x128xbf16>, vector<128x16xbf16>, vector<128x16xf32> -> vector<128x16xf32>
    %c0_14 = arith.constant 0 : index
    %c0_15 = arith.constant 0 : index
    %19 = vector.load %arg7[%c0_14, %c0_15] : memref<1x16xf32, #tpu.memory_space<vmem>>, vector<1x16xf32>
    %20 = vector.broadcast %19 : vector<1x16xf32> to vector<128x16xf32>
    %21 = arith.addf %18, %20 : vector<128x16xf32>
    %22 = vector.shape_cast %16 : vector<128x16xf32> to vector<16x8x16xf32>
    %23 = vector.shape_cast %21 : vector<128x16xf32> to vector<16x8x16xf32>
    %cst_16 = arith.constant dense<0xFF800000> : vector<16x16xf32>
    %24 = vector.multi_reduction <maximumf>, %23, %cst_16 [1] : vector<16x8x16xf32> to vector<16x16xf32>
    %25 = vector.shape_cast %24 : vector<16x16xf32> to vector<16x1x16xf32>
    %26 = vector.broadcast %25 : vector<16x1x16xf32> to vector<16x8x16xf32>
    %27 = arith.subf %23, %26 : vector<16x8x16xf32>
    %28 = math.exp %27 : vector<16x8x16xf32>
    %cst_17 = arith.constant dense<0.000000e+00> : vector<16x16xf32>
    %29 = vector.multi_reduction <add>, %28, %cst_17 [1] : vector<16x8x16xf32> to vector<16x16xf32>
    %30 = vector.shape_cast %29 : vector<16x16xf32> to vector<16x1x16xf32>
    %31 = tpu.reciprocal %30 {approx = true} : vector<16x1x16xf32> -> vector<16x1x16xf32>
    %32 = vector.broadcast %31 : vector<16x1x16xf32> to vector<16x8x16xf32>
    %33 = arith.mulf %28, %32 : vector<16x8x16xf32>
    %34 = arith.negf %22 : vector<16x8x16xf32>
    %35 = math.exp %34 : vector<16x8x16xf32>
    %cst_18 = arith.constant 1.000000e+00 : f32
    %36 = vector.broadcast %cst_18 : f32 to vector<16x8x16xf32>
    %37 = arith.addf %36, %35 : vector<16x8x16xf32>
    %38 = arith.divf %36, %37 : vector<16x8x16xf32>
    %39 = arith.mulf %33, %38 : vector<16x8x16xf32>
    %c0_19 = arith.constant 0 : index
    %c0_20 = arith.constant 0 : index
    %c0_21 = arith.constant 0 : index
    %40 = vector.load %arg9[%c0_19, %c0_20, %c0_21] : memref<16x8x16xf32, #tpu.memory_space<vmem>>, vector<16x8x16xf32>
    tpu.vector_store %arg9[%c0_19, %c0_20, %c0_21], %39 {strides = array<i32>} : memref<16x8x16xf32, #tpu.memory_space<vmem>>, vector<16x8x16xf32>,
    %cst_22 = arith.constant dense<0.000000e+00> : vector<16x16xf32>
    %41 = vector.multi_reduction <add>, %39, %cst_22 [1] : vector<16x8x16xf32> to vector<16x16xf32>
    %c0_23 = arith.constant 0 : index
    %c0_24 = arith.constant 0 : index
    %42 = vector.load %arg8[%c0_23, %c0_24] : memref<16x16xf32, #tpu.memory_space<vmem>>, vector<16x16xf32>
    tpu.vector_store %arg8[%c0_23, %c0_24], %41 {strides = array<i32>} : memref<16x16xf32, #tpu.memory_space<vmem>>, vector<16x16xf32>,
    return
  }
  func.func @transform_0(%arg0: i32) -> (i32, i32) {
    %c0_i32 = arith.constant 0 : i32
    %c0_i32_0 = arith.constant 0 : i32
    return %arg0, %c0_i32 : i32, i32
  }
  func.func @transform_1(%arg0: i32) -> (i32, i32) {
    %c0_i32 = arith.constant 0 : i32
    %c0_i32_0 = arith.constant 0 : i32
    %c0_i32_1 = arith.constant 0 : i32
    return %c0_i32, %c0_i32_0 : i32, i32
  }
  func.func @transform_2(%arg0: i32) -> (i32, i32) {
    %c0_i32 = arith.constant 0 : i32
    %c0_i32_0 = arith.constant 0 : i32
    %c0_i32_1 = arith.constant 0 : i32
    return %c0_i32, %c0_i32_0 : i32, i32
  }
  func.func @transform_3(%arg0: i32) -> (i32, i32) {
    %c0_i32 = arith.constant 0 : i32
    %c0_i32_0 = arith.constant 0 : i32
    %c0_i32_1 = arith.constant 0 : i32
    return %c0_i32, %c0_i32_0 : i32, i32
  }
  func.func @transform_4(%arg0: i32) -> (i32, i32) {
    %c0_i32 = arith.constant 0 : i32
    %c0_i32_0 = arith.constant 0 : i32
    %c0_i32_1 = arith.constant 0 : i32
    return %c0_i32, %c0_i32_0 : i32, i32
  }
  func.func @transform_5(%arg0: i32) -> (i32, i32) {
    %c0_i32 = arith.constant 0 : i32
    %c0_i32_0 = arith.constant 0 : i32
    %c0_i32_1 = arith.constant 0 : i32
    return %c0_i32, %c0_i32_0 : i32, i32
  }
  func.func @transform_6(%arg0: i32) -> (i32, i32) {
    %c0_i32 = arith.constant 0 : i32
    %c0_i32_0 = arith.constant 0 : i32
    %c0_i32_1 = arith.constant 0 : i32
    return %c0_i32, %c0_i32_0 : i32, i32
  }
  func.func @transform_7(%arg0: i32) -> (i32, i32) {
    %c0_i32 = arith.constant 0 : i32
    %c0_i32_0 = arith.constant 0 : i32
    return %arg0, %c0_i32 : i32, i32
  }
  func.func @transform_8(%arg0: i32) -> (i32, i32, i32) {
    %c0_i32 = arith.constant 0 : i32
    %c0_i32_0 = arith.constant 0 : i32
    %c0_i32_1 = arith.constant 0 : i32
    return %arg0, %c0_i32, %c0_i32_0 : i32, i32, i32
  }
}

</mosaic_0001>

<llo_original>
// kernel: tpu_custom_call.1
$region0: #{tpu_custom_call.1}
  #allocation0 [shape = 'u32[]', space=smem, size = 0x4, offset = 0x4, fixed_abs, tag = 'smem constant byte address 0x4 - core index']
  #allocation1 [shape = 'u32[144,128]{1,0:T(1,128)}', space=vmem, size = 0x12000, scoped, tag = 'internal scratch']
  %s0 = inlined_call_operand.hbm [shape: bf16[256,256], index: 0, kind: input, shape index: {}]
  %s1 = inlined_call_operand.hbm [shape: bf16[256,256], index: 1, kind: input, shape index: {}]
  %s2 = inlined_call_operand.vmem [shape: f32[1,256], index: 2, kind: input, shape index: {}]
  %s3 = inlined_call_operand.vmem [shape: bf16[128,16], index: 3, kind: input, shape index: {}]
  %s4 = inlined_call_operand.vmem [shape: f32[1,16], index: 4, kind: input, shape index: {}]
  %s5 = inlined_call_operand.vmem [shape: bf16[128,16], index: 5, kind: input, shape index: {}]
  %s6 = inlined_call_operand.vmem [shape: f32[1,16], index: 6, kind: input, shape index: {}]
  %s7 = inlined_call_operand.vmem [shape: f32[32,16], index: 7, kind: output, shape index: {0}]
  %s8 = inlined_call_operand.vmem [shape: f32[32,8,16], index: 8, kind: output, shape index: {1}]
  %9 = xla_tuple %s7, %s8
  %s10 = sld [smem:[#allocation0]]
  $region77: #{tpu_custom_call.1} parent=0
    _
  %s12 = ssub.s32 1, %s10
  %s13 = scalar_select 0, %s12, %s10
  $region1: #{tpu_custom_call.1} parent=0
    #allocation2 [shape = 'u8[131072]{0}', space=vmem, size = 0x20000, scoped, tag = 'input window, operand 0']
    #allocation3 [shape = 's32[2]{0}', space=sflag, size = 0x8, scoped, tag = 'scoped memory for tpu_custom_call.1']
    #allocation4 [shape = 'u8[131072]{0}', space=vmem, size = 0x20000, scoped, tag = 'input window, operand 1, single buffered']
    #allocation5 [shape = 's32[1]{0}', space=sflag, size = 0x4, scoped, tag = 'scoped memory for tpu_custom_call.1']
    %14 = vsyncpa [#allocation3], 0
    %s15 = scalar_lea.sflag [#allocation3], 1
    %16 = vsyncpa %s15, 0
    %17 = vsyncpa [#allocation5], 0
    loop: start=0, step=1, limit=4
    $region2: #{tpu_custom_call.1} parent=1 // loop_pre_header
      _
    $region3: #{tpu_custom_call.1} parent=1 // loop_header
      %s19 = sphi 0, %s23
      %p20 = scmp.ge.s32.totalorder %s19, 4
      %s29 = sphi 0, %s31
      %s32 = sphi 0, %s29
      %s33 = sphi 0, %s32
      %s49 = sphi 0, %s33
      %s53 = sphi 0, %s53
      %s55 = sphi 0, %s53
      %s56 = sphi 0, %s55
      %s70 = sphi 0, %s56
      %s74 = sphi 0, %s74
      %s76 = sphi 0, %s74
      %s77 = sphi 0, %s76
      %s91 = sphi 0, %s77
      %s95 = sphi 0, %s95
      %s97 = sphi 0, %s95
      %s98 = sphi 0, %s97
      %s112 = sphi 0, %s98
      %s116 = sphi 0, %s116
      %s118 = sphi 0, %s116
      %s119 = sphi 0, %s118
      %s133 = sphi 0, %s119
      %s137 = sphi 0, %s137
      %s139 = sphi 0, %s137
      %s140 = sphi 0, %s139
      %s154 = sphi 0, %s140
      %s158 = sphi 0, %s158
      %s160 = sphi 0, %s158
      %s161 = sphi 0, %s160
      %s175 = sphi 0, %s161
      %s181 = sphi 0, %s183
      %s184 = sphi 0, %s181
      %s185 = sphi 0, %s184
      %s201 = sphi 0, %s185
      %s207 = sphi 0, %s209
      %s210 = sphi 0, %s207
      %s211 = sphi 0, %s210
      %s227 = sphi 0, %s211
    $region4: #{tpu_custom_call.1} parent=1 // loop_header_branch
      %22 = sbr.rel (%p20) target = $region8
    $region5: #{tpu_custom_call.1} parent=1 // loop_body
      %s24 = ssub.s32 %s19, 1
      %s25 = ssub.s32 %s19, 2
      %s26 = sadd.s32 %s19, 1
      %s27 = ssub.s32 %s19, %s26
      %p28 = scmp.eq.s32.totalorder %s27, 0
      %s30 = sadd.s32 %s29, 1
      %s31 = scalar_select %p28, %s29, %s30
      %p34 = pneg %p28
      %p35 = scmp.eq.s32.totalorder %s19, 1
      %p36 = por %p34, %p35
      %p37 = scmp.ne.s32.totalorder %s29, %s32
      %p38 = scmp.eq.s32.totalorder %s19, 0
      %p39 = por %p37, %p38
      %p40 = scmp.ne.s32.totalorder %s29, %s32
      %p41 = scmp.eq.s32.totalorder %s24, 1
      %p42 = por %p40, %p41
      %p43 = scmp.ne.s32.totalorder %s32, %s33
      %p44 = scmp.eq.s32.totalorder %s24, 0
      %p45 = por %p43, %p44
      %p46 = scmp.ne.s32.totalorder %s32, %s33
      %p47 = scmp.eq.s32.totalorder %s25, 1
      %p48 = por %p46, %p47
      %p50 = scmp.ne.s32.totalorder %s33, %s49
      %p51 = scmp.eq.s32.totalorder %s25, 0
      %p52 = por %p50, %p51
      %s54 = sadd.s32 %s53, 1
      %p57 = scmp.eq.s32.totalorder %s19, 1
      %p58 = scmp.ne.s32.totalorder %s53, %s55
      %p59 = scmp.eq.s32.totalorder %s19, 0
      %p60 = por %p58, %p59
      %p61 = scmp.ne.s32.totalorder %s53, %s55
      %p62 = scmp.eq.s32.totalorder %s24, 1
      %p63 = por %p61, %p62
      %p64 = scmp.ne.s32.totalorder %s55, %s56
      %p65 = scmp.eq.s32.totalorder %s24, 0
      %p66 = por %p64, %p65
      %p67 = scmp.ne.s32.totalorder %s55, %s56
      %p68 = scmp.eq.s32.totalorder %s25, 1
      %p69 = por %p67, %p68
      %p71 = scmp.ne.s32.totalorder %s56, %s70
      %p72 = scmp.eq.s32.totalorder %s25, 0
      %p73 = por %p71, %p72
      %s75 = sadd.s32 %s74, 1
      %p78 = scmp.eq.s32.totalorder %s19, 1
      %p79 = scmp.ne.s32.totalorder %s74, %s76
      %p80 = scmp.eq.s32.totalorder %s19, 0
      %p81 = por %p79, %p80
      %p82 = scmp.ne.s32.totalorder %s74, %s76
      %p83 = scmp.eq.s32.totalorder %s24, 1
      %p84 = por %p82, %p83
      %p85 = scmp.ne.s32.totalorder %s76, %s77
      %p86 = scmp.eq.s32.totalorder %s24, 0
      %p87 = por %p85, %p86
      %p88 = scmp.ne.s32.totalorder %s76, %s77
      %p89 = scmp.eq.s32.totalorder %s25, 1
      %p90 = por %p88, %p89
      %p92 = scmp.ne.s32.totalorder %s77, %s91
      %p93 = scmp.eq.s32.totalorder %s25, 0
      %p94 = por %p92, %p93
      %s96 = sadd.s32 %s95, 1
      %p99 = scmp.eq.s32.totalorder %s19, 1
      %p100 = scmp.ne.s32.totalorder %s95, %s97
      %p101 = scmp.eq.s32.totalorder %s19, 0
      %p102 = por %p100, %p101
      %p103 = scmp.ne.s32.totalorder %s95, %s97
      %p104 = scmp.eq.s32.totalorder %s24, 1
      %p105 = por %p103, %p104
      %p106 = scmp.ne.s32.totalorder %s97, %s98
      %p107 = scmp.eq.s32.totalorder %s24, 0
      %p108 = por %p106, %p107
      %p109 = scmp.ne.s32.totalorder %s97, %s98
      %p110 = scmp.eq.s32.totalorder %s25, 1
      %p111 = por %p109, %p110
      %p113 = scmp.ne.s32.totalorder %s98, %s112
      %p114 = scmp.eq.s32.totalorder %s25, 0
      %p115 = por %p113, %p114
      %s117 = sadd.s32 %s116, 1
      %p120 = scmp.eq.s32.totalorder %s19, 1
      %p121 = scmp.ne.s32.totalorder %s116, %s118
      %p122 = scmp.eq.s32.totalorder %s19, 0
      %p123 = por %p121, %p122
      %p124 = scmp.ne.s32.totalorder %s116, %s118
      %p125 = scmp.eq.s32.totalorder %s24, 1
      %p126 = por %p124, %p125
      %p127 = scmp.ne.s32.totalorder %s118, %s119
      %p128 = scmp.eq.s32.totalorder %s24, 0
      %p129 = por %p127, %p128
      %p130 = scmp.ne.s32.totalorder %s118, %s119
      %p131 = scmp.eq.s32.totalorder %s25, 1
      %p132 = por %p130, %p131
      %p134 = scmp.ne.s32.totalorder %s119, %s133
      %p135 = scmp.eq.s32.totalorder %s25, 0
      %p136 = por %p134, %p135
      %s138 = sadd.s32 %s137, 1
      %p141 = scmp.eq.s32.totalorder %s19, 1
      %p142 = scmp.ne.s32.totalorder %s137, %s139
      %p143 = scmp.eq.s32.totalorder %s19, 0
      %p144 = por %p142, %p143
      %p145 = scmp.ne.s32.totalorder %s137, %s139
      %p146 = scmp.eq.s32.totalorder %s24, 1
      %p147 = por %p145, %p146
      %p148 = scmp.ne.s32.totalorder %s139, %s140
      %p149 = scmp.eq.s32.totalorder %s24, 0
      %p150 = por %p148, %p149
      %p151 = scmp.ne.s32.totalorder %s139, %s140
      %p152 = scmp.eq.s32.totalorder %s25, 1
      %p153 = por %p151, %p152
      %p155 = scmp.ne.s32.totalorder %s140, %s154
      %p156 = scmp.eq.s32.totalorder %s25, 0
      %p157 = por %p155, %p156
      %s159 = sadd.s32 %s158, 1
      %p162 = scmp.eq.s32.totalorder %s19, 1
      %p163 = scmp.ne.s32.totalorder %s158, %s160
      %p164 = scmp.eq.s32.totalorder %s19, 0
      %p165 = por %p163, %p164
      %p166 = scmp.ne.s32.totalorder %s158, %s160
      %p167 = scmp.eq.s32.totalorder %s24, 1
      %p168 = por %p166, %p167
      %p169 = scmp.ne.s32.totalorder %s160, %s161
      %p170 = scmp.eq.s32.totalorder %s24, 0
      %p171 = por %p169, %p170
      %p172 = scmp.ne.s32.totalorder %s160, %s161
      %p173 = scmp.eq.s32.totalorder %s25, 1
      %p174 = por %p172, %p173
      %p176 = scmp.ne.s32.totalorder %s161, %s175
      %p177 = scmp.eq.s32.totalorder %s25, 0
      %p178 = por %p176, %p177
      %s179 = ssub.s32 %s19, %s26
      %p180 = scmp.eq.s32.totalorder %s179, 0
      %s182 = sadd.s32 %s181, 1
      %s183 = scalar_select %p180, %s181, %s182
      %p186 = pneg %p180
      %p187 = scmp.eq.s32.totalorder %s19, 1
      %p188 = por %p186, %p187
      %p189 = scmp.ne.s32.totalorder %s181, %s184
      %p190 = scmp.eq.s32.totalorder %s19, 0
      %p191 = por %p189, %p190
      %p192 = scmp.ne.s32.totalorder %s181, %s184
      %p193 = scmp.eq.s32.totalorder %s24, 1
      %p194 = por %p192, %p193
      %p195 = scmp.ne.s32.totalorder %s184, %s185
      %p196 = scmp.eq.s32.totalorder %s24, 0
      %p197 = por %p195, %p196
      %p198 = scmp.ne.s32.totalorder %s184, %s185
      %p199 = scmp.eq.s32.totalorder %s25, 1
      %p200 = por %p198, %p199
      %p202 = scmp.ne.s32.totalorder %s185, %s201
      %p203 = scmp.eq.s32.totalorder %s25, 0
      %p204 = por %p202, %p203
      %s205 = ssub.s32 %s19, %s26
      %p206 = scmp.eq.s32.totalorder %s205, 0
      %s208 = sadd.s32 %s207, 1
      %s209 = scalar_select %p206, %s207, %s208
      %p212 = pneg %p206
      %p213 = scmp.eq.s32.totalorder %s19, 1
      %p214 = por %p212, %p213
      %p215 = scmp.ne.s32.totalorder %s207, %s210
      %p216 = scmp.eq.s32.totalorder %s19, 0
      %p217 = por %p215, %p216
      %p218 = scmp.ne.s32.totalorder %s207, %s210
      %p219 = scmp.eq.s32.totalorder %s24, 1
      %p220 = por %p218, %p219
      %p221 = scmp.ne.s32.totalorder %s210, %s211
      %p222 = scmp.eq.s32.totalorder %s24, 0
      %p223 = por %p221, %p222
      %p224 = scmp.ne.s32.totalorder %s210, %s211
      %p225 = scmp.eq.s32.totalorder %s25, 1
      %p226 = por %p224, %p225
      %p228 = scmp.ne.s32.totalorder %s211, %s227
      %p229 = scmp.eq.s32.totalorder %s25, 0
      %p230 = por %p228, %p229
      %p231 = scmp.le.s32.totalorder 1, %s19
      %p232 = scmp.lt.s32.totalorder %s19, 3
      %p233 = pnand %p231, %p232
      %p234 = pneg %p233
      // Predicated region
      $region9: #{tpu_custom_call.1} parent=5 // pred_check
        _
      $region10: #{tpu_custom_call.1} parent=5 // pred_check_branch
        %236 = sbr.rel (%p233) target = $region12
      $region11: #{tpu_custom_call.1} parent=5 // pred_region
        %s237 = ssub.s32 %s19, 1
        // Predicated region
        $region13: #{tpu_custom_call.1} parent=11 // pred_check
          %p238 = pneg %p66
        $region14: #{tpu_custom_call.1} parent=11 // pred_check_branch
          %240 = sbr.rel (%p238) target = $region16
        $region15: #{tpu_custom_call.1} parent=11 // pred_region
          %s242 = ssub.s32 4096, 4096
          %243 = vsyncadd [#allocation5], %s242
          %s244 = sshll.u32 [#allocation4], 4
          %s245 = int_to_ptr.vmem [resolvable:$true] %s244
          %250 = dma.hbm_to_vmem [thread:$0]  %s1, 4096, %s245, [#allocation5], 128, 128, 8
        $region16: #{tpu_custom_call.1} parent=11 // pred_fallthru
          _
        // Predicated region
        $region17: #{tpu_custom_call.1} parent=11 // pred_check
          %p251 = pneg %p87
        $region18: #{tpu_custom_call.1} parent=11 // pred_check_branch
          %253 = sbr.rel (%p251) target = $region20
        $region19: #{tpu_custom_call.1} parent=11 // pred_region
          _
        $region20: #{tpu_custom_call.1} parent=11 // pred_fallthru
          _
        // Predicated region
        $region21: #{tpu_custom_call.1} parent=11 // pred_check
          %p254 = pneg %p108
        $region22: #{tpu_custom_call.1} parent=11 // pred_check_branch
          %256 = sbr.rel (%p254) target = $region24
        $region23: #{tpu_custom_call.1} parent=11 // pred_region
          _
        $region24: #{tpu_custom_call.1} parent=11 // pred_fallthru
          _
        // Predicated region
        $region25: #{tpu_custom_call.1} parent=11 // pred_check
          %p257 = pneg %p129
        $region26: #{tpu_custom_call.1} parent=11 // pred_check_branch
          %259 = sbr.rel (%p257) target = $region28
        $region27: #{tpu_custom_call.1} parent=11 // pred_region
          _
        $region28: #{tpu_custom_call.1} parent=11 // pred_fallthru
          _
        // Predicated region
        $region29: #{tpu_custom_call.1} parent=11 // pred_check
          %p260 = pneg %p150
        $region30: #{tpu_custom_call.1} parent=11 // pred_check_branch
          %262 = sbr.rel (%p260) target = $region32
        $region31: #{tpu_custom_call.1} parent=11 // pred_region
          _
        $region32: #{tpu_custom_call.1} parent=11 // pred_fallthru
          _
        // Predicated region
        $region33: #{tpu_custom_call.1} parent=11 // pred_check
          %p263 = pneg %p171
        $region34: #{tpu_custom_call.1} parent=11 // pred_check_branch
          %265 = sbr.rel (%p263) target = $region36
        $region35: #{tpu_custom_call.1} parent=11 // pred_region
          _
        $region36: #{tpu_custom_call.1} parent=11 // pred_fallthru
          _
      $region12: #{tpu_custom_call.1} parent=5 // pred_fallthru
        _
      %p266 = scmp.lt.s32.totalorder %s19, 2
      // Predicated region
      $region37: #{tpu_custom_call.1} parent=5 // pred_check
        %p267 = pneg %p266
      $region38: #{tpu_custom_call.1} parent=5 // pred_check_branch
        %269 = sbr.rel (%p267) target = $region40
      $region39: #{tpu_custom_call.1} parent=5 // pred_region
        // Predicated region
        $region41: #{tpu_custom_call.1} parent=39 // pred_check
          %p270 = pneg %p39
        $region42: #{tpu_custom_call.1} parent=39 // pred_check_branch
          %272 = sbr.rel (%p270) target = $region44
        $region43: #{tpu_custom_call.1} parent=39 // pred_region
          %s273 = sand.u32 %s29, 1
          %s274 = scalar_lea.sflag [#allocation3], %s273
          %s275 = sand.u32 %s29, 1
          %s276 = smul.addr %s275, 128
          %s277 = scalar_lea.vmem [#allocation2], %s276
          %s278 = smul.u32 16, %s19
          %s280 = ssub.s32 2048, 2048
          %281 = vsyncadd %s274, %s280
          %s282 = smul.addr %s278, 2
          %s283 = smul.addr %s282, 64
          %s284 = scalar_lea.hbm %s0, %s283
          %s285 = sshll.u32 %s277, 4
          %s286 = int_to_ptr.vmem [resolvable:$true] %s285
          %291 = dma.hbm_to_vmem [thread:$0]  %s284, 2048, %s286, %s274, 128, 128, 8
        $region44: #{tpu_custom_call.1} parent=39 // pred_fallthru
          _
      $region40: #{tpu_custom_call.1} parent=5 // pred_fallthru
        _
      %p292 = scmp.le.s32.totalorder 1, %s19
      %p293 = scmp.lt.s32.totalorder %s19, 3
      %p294 = pnand %p292, %p293
      %p295 = pneg %p294
      // Predicated region
      $region45: #{tpu_custom_call.1} parent=5 // pred_check
        _
      $region46: #{tpu_custom_call.1} parent=5 // pred_check_branch
        %297 = sbr.rel (%p294) target = $region48
      $region47: #{tpu_custom_call.1} parent=5 // pred_region
        %s298 = ssub.s32 %s19, 1
        %s299 = sand.u32 %s32, 1
        %s300 = scalar_lea.sflag [#allocation3], %s299
        %s301 = sand.u32 %s32, 1
        %s302 = smul.addr %s301, 128
        %s303 = scalar_lea.vmem [#allocation2], %s302
        // Predicated region
        $region49: #{tpu_custom_call.1} parent=47 // pred_check
          %p304 = pneg %p45
        $region50: #{tpu_custom_call.1} parent=47 // pred_check_branch
          %306 = sbr.rel (%p304) target = $region52
        $region51: #{tpu_custom_call.1} parent=47 // pred_region
          %307 = dma.done %s300, 2048
        $region52: #{tpu_custom_call.1} parent=47 // pred_fallthru
          _
        // Predicated region
        $region53: #{tpu_custom_call.1} parent=47 // pred_check
          %p308 = pneg %p66
        $region54: #{tpu_custom_call.1} parent=47 // pred_check_branch
          %310 = sbr.rel (%p308) target = $region56
        $region55: #{tpu_custom_call.1} parent=47 // pred_region
          %311 = dma.done [#allocation5], 4096
        $region56: #{tpu_custom_call.1} parent=47 // pred_fallthru
          _
        %s312 = sand.u32 %s32, 1
        %s313 = scalar_lea.sflag [#allocation3], %s312
        %s314 = sand.u32 %s32, 1
        %s315 = smul.addr %s314, 128
        %s316 = scalar_lea.vmem [#allocation2], %s315
        %p317 = pneg %p45
        %p318 = pneg %p42
        %p319 = pneg %p66
        %p320 = pneg %p63
        %p321 = pneg %p87
        %p322 = pneg %p84
        %p323 = pneg %p108
        %p324 = pneg %p105
        %p325 = pneg %p129
        %p326 = pneg %p126
        %p327 = pneg %p150
        %p328 = pneg %p147
        %p329 = pneg %p171
        %p330 = pneg %p168
        %p331 = pneg %p197
        %p332 = pneg %p194
        %s333 = smul.u32 2, %s24
        %p334 = scmp.lt.s32.totalorder %s333, 3
        %s335 = scalar_select %p334, %s333, 3
        %s336 = smul.addr %s335, 8
        %s337 = scalar_lea.vmem %s7, %s336
        %p338 = pneg %p223
        %p339 = pneg %p220
        %s340 = smul.u32 16, %s24
        %p341 = scmp.lt.s32.totalorder %s340, 31
        %s342 = scalar_select %p341, %s340, 31
        %s343 = smul.addr %s342, 8
        %s344 = scalar_lea.vmem %s8, %s343
        %s345 = smul.u32 16, %s24
        %s346 = smul.u32 2, %s24
        %p347 = scmp.lt.s32.totalorder %s346, 3
        %s348 = scalar_select %p347, %s346, 3
        %s349 = smul.addr %s348, 8
        %s350 = scalar_lea.vmem %s7, %s349
        %s351 = smul.u32 2, %s24
        %s352 = smul.u32 16, %s24
        %p353 = scmp.lt.s32.totalorder %s352, 31
        %s354 = scalar_select %p353, %s352, 31
        %s355 = smul.addr %s354, 8
        %s356 = scalar_lea.vmem %s8, %s355
        %s357 = smul.u32 16, %s24
        %v359 = vld [vmem:[%s303] sm:$0xff]
        %v360 = vld [vmem:[%s303 + $0x8] sm:$0xff]
        %v361 = vld [vmem:[%s303 + $0x10] sm:$0xff]
        %v362 = vld [vmem:[%s303 + $0x18] sm:$0xff]
        %v363 = vld [vmem:[%s303 + $0x20] sm:$0xff]
        %v364 = vld [vmem:[%s303 + $0x28] sm:$0xff]
        %v365 = vld [vmem:[%s303 + $0x30] sm:$0xff]
        %v366 = vld [vmem:[%s303 + $0x38] sm:$0xff]
        %v367 = vld [vmem:[%s303 + $0x40] sm:$0xff]
        %v368 = vld [vmem:[%s303 + $0x48] sm:$0xff]
        %v369 = vld [vmem:[%s303 + $0x50] sm:$0xff]
        %v370 = vld [vmem:[%s303 + $0x58] sm:$0xff]
        %v371 = vld [vmem:[%s303 + $0x60] sm:$0xff]
        %v372 = vld [vmem:[%s303 + $0x68] sm:$0xff]
        %v373 = vld [vmem:[%s303 + $0x70] sm:$0xff]
        %v374 = vld [vmem:[%s303 + $0x78] sm:$0xff]
        %v375 = vld [vmem:[#allocation4] sm:$0xff]
        %v376 = vld [vmem:[#allocation4 + $0x8] sm:$0xff]
        %v377 = vld [vmem:[#allocation4 + $0x10] sm:$0xff]
        %v378 = vld [vmem:[#allocation4 + $0x18] sm:$0xff]
        %v379 = vld [vmem:[#allocation4 + $0x20] sm:$0xff]
        %v380 = vld [vmem:[#allocation4 + $0x28] sm:$0xff]
        %v381 = vld [vmem:[#allocation4 + $0x30] sm:$0xff]
        %v382 = vld [vmem:[#allocation4 + $0x38] sm:$0xff]
        %v383 = vld [vmem:[#allocation4 + $0x40] sm:$0xff]
        %v384 = vld [vmem:[#allocation4 + $0x48] sm:$0xff]
        %v385 = vld [vmem:[#allocation4 + $0x50] sm:$0xff]
        %v386 = vld [vmem:[#allocation4 + $0x58] sm:$0xff]
        %v387 = vld [vmem:[#allocation4 + $0x60] sm:$0xff]
        %v388 = vld [vmem:[#allocation4 + $0x68] sm:$0xff]
        %v389 = vld [vmem:[#allocation4 + $0x70] sm:$0xff]
        %v390 = vld [vmem:[#allocation4 + $0x78] sm:$0xff]
        %v391 = vld [vmem:[#allocation4 + $0x80] sm:$0xff]
        %v392 = vld [vmem:[#allocation4 + $0x88] sm:$0xff]
        %v393 = vld [vmem:[#allocation4 + $0x90] sm:$0xff]
        %v394 = vld [vmem:[#allocation4 + $0x98] sm:$0xff]
        %v395 = vld [vmem:[#allocation4 + $0xa0] sm:$0xff]
        %v396 = vld [vmem:[#allocation4 + $0xa8] sm:$0xff]
        %v397 = vld [vmem:[#allocation4 + $0xb0] sm:$0xff]
        %v398 = vld [vmem:[#allocation4 + $0xb8] sm:$0xff]
        %v399 = vld [vmem:[#allocation4 + $0xc0] sm:$0xff]
        %v400 = vld [vmem:[#allocation4 + $0xc8] sm:$0xff]
        %v401 = vld [vmem:[#allocation4 + $0xd0] sm:$0xff]
        %v402 = vld [vmem:[#allocation4 + $0xd8] sm:$0xff]
        %v403 = vld [vmem:[#allocation4 + $0xe0] sm:$0xff]
        %v404 = vld [vmem:[#allocation4 + $0xe8] sm:$0xff]
        %v405 = vld [vmem:[#allocation4 + $0xf0] sm:$0xff]
        %v406 = vld [vmem:[#allocation4 + $0xf8] sm:$0xff]
        %v407 = vld [vmem:[%s2] sm:$0x3]
        %v409 = vlaneseq
        %v410 = vshrl.u32 %v409, 7
        %v411 = vsub.s32 0, %v410
        %v412 = vrot.slane %v407, %v411
        %v413 = vlaneseq
        %v414 = vshrl.u32 %v413, 7
        %v415 = vsub.s32 1, %v414
        %v416 = vrot.slane %v407, %v415
        %v435 = vunpack.c.l.b16 %v359
        %v436 = vunpack.c.h.b16 %v359
        %v437 = vunpack.c.l.b16 %v360
        %v438 = vunpack.c.h.b16 %v360
        %v439 = vunpack.c.l.b16 %v361
        %v440 = vunpack.c.h.b16 %v361
        %v441 = vunpack.c.l.b16 %v362
        %v442 = vunpack.c.h.b16 %v362
        %v443 = vunpack.c.l.b16 %v363
        %v444 = vunpack.c.h.b16 %v363
        %v445 = vunpack.c.l.b16 %v364
        %v446 = vunpack.c.h.b16 %v364
        %v447 = vunpack.c.l.b16 %v365
        %v448 = vunpack.c.h.b16 %v365
        %v449 = vunpack.c.l.b16 %v366
        %v450 = vunpack.c.h.b16 %v366
        %v451 = vunpack.c.l.b16 %v367
        %v452 = vunpack.c.h.b16 %v367
        %v453 = vunpack.c.l.b16 %v368
        %v454 = vunpack.c.h.b16 %v368
        %v455 = vunpack.c.l.b16 %v369
        %v456 = vunpack.c.h.b16 %v369
        %v457 = vunpack.c.l.b16 %v370
        %v458 = vunpack.c.h.b16 %v370
        %v459 = vunpack.c.l.b16 %v371
        %v460 = vunpack.c.h.b16 %v371
        %v461 = vunpack.c.l.b16 %v372
        %v462 = vunpack.c.h.b16 %v372
        %v463 = vunpack.c.l.b16 %v373
        %v464 = vunpack.c.h.b16 %v373
        %v465 = vunpack.c.l.b16 %v374
        %v466 = vunpack.c.h.b16 %v374
        %v467 = vpack.c.b16 %v437, %v435
        %v468 = vpack.c.b16 %v438, %v436
        %v469 = vpack.c.b16 %v441, %v439
        %v470 = vpack.c.b16 %v442, %v440
        %v471 = vpack.c.b16 %v445, %v443
        %v472 = vpack.c.b16 %v446, %v444
        %v473 = vpack.c.b16 %v449, %v447
        %v474 = vpack.c.b16 %v450, %v448
        %v475 = vpack.c.b16 %v453, %v451
        %v476 = vpack.c.b16 %v454, %v452
        %v477 = vpack.c.b16 %v457, %v455
        %v478 = vpack.c.b16 %v458, %v456
        %v479 = vpack.c.b16 %v461, %v459
        %v480 = vpack.c.b16 %v462, %v460
        %v481 = vpack.c.b16 %v465, %v463
        %v482 = vpack.c.b16 %v466, %v464
        %v531 = vunpack.c.l.b16 %v375
        %v532 = vunpack.c.h.b16 %v375
        %v533 = vunpack.c.l.b16 %v376
        %v534 = vunpack.c.h.b16 %v376
        %v535 = vunpack.c.l.b16 %v377
        %v536 = vunpack.c.h.b16 %v377
        %v537 = vunpack.c.l.b16 %v378
        %v538 = vunpack.c.h.b16 %v378
        %v539 = vunpack.c.l.b16 %v379
        %v540 = vunpack.c.h.b16 %v379
        %v541 = vunpack.c.l.b16 %v380
        %v542 = vunpack.c.h.b16 %v380
        %v543 = vunpack.c.l.b16 %v381
        %v544 = vunpack.c.h.b16 %v381
        %v545 = vunpack.c.l.b16 %v382
        %v546 = vunpack.c.h.b16 %v382
        %v547 = vunpack.c.l.b16 %v383
        %v548 = vunpack.c.h.b16 %v383
        %v549 = vunpack.c.l.b16 %v384
        %v550 = vunpack.c.h.b16 %v384
        %v551 = vunpack.c.l.b16 %v385
        %v552 = vunpack.c.h.b16 %v385
        %v553 = vunpack.c.l.b16 %v386
        %v554 = vunpack.c.h.b16 %v386
        %v555 = vunpack.c.l.b16 %v387
        %v556 = vunpack.c.h.b16 %v387
        %v557 = vunpack.c.l.b16 %v388
        %v558 = vunpack.c.h.b16 %v388
        %v559 = vunpack.c.l.b16 %v389
        %v560 = vunpack.c.h.b16 %v389
        %v561 = vunpack.c.l.b16 %v390
        %v562 = vunpack.c.h.b16 %v390
        %v563 = vunpack.c.l.b16 %v391
        %v564 = vunpack.c.h.b16 %v391
        %v565 = vunpack.c.l.b16 %v392
        %v566 = vunpack.c.h.b16 %v392
        %v567 = vunpack.c.l.b16 %v393
        %v568 = vunpack.c.h.b16 %v393
        %v569 = vunpack.c.l.b16 %v394
        %v570 = vunpack.c.h.b16 %v394
        %v571 = vunpack.c.l.b16 %v395
        %v572 = vunpack.c.h.b16 %v395
        %v573 = vunpack.c.l.b16 %v396
        %v574 = vunpack.c.h.b16 %v396
        %v575 = vunpack.c.l.b16 %v397
        %v576 = vunpack.c.h.b16 %v397
        %v577 = vunpack.c.l.b16 %v398
        %v578 = vunpack.c.h.b16 %v398
        %v579 = vunpack.c.l.b16 %v399
        %v580 = vunpack.c.h.b16 %v399
        %v581 = vunpack.c.l.b16 %v400
        %v582 = vunpack.c.h.b16 %v400
        %v583 = vunpack.c.l.b16 %v401
        %v584 = vunpack.c.h.b16 %v401
        %v585 = vunpack.c.l.b16 %v402
        %v586 = vunpack.c.h.b16 %v402
        %v587 = vunpack.c.l.b16 %v403
        %v588 = vunpack.c.h.b16 %v403
        %v589 = vunpack.c.l.b16 %v404
        %v590 = vunpack.c.h.b16 %v404
        %v591 = vunpack.c.l.b16 %v405
        %v592 = vunpack.c.h.b16 %v405
        %v593 = vunpack.c.l.b16 %v406
        %v594 = vunpack.c.h.b16 %v406
        %v595 = vpack.c.b16 %v533, %v531
        %v596 = vpack.c.b16 %v534, %v532
        %v597 = vpack.c.b16 %v537, %v535
        %v598 = vpack.c.b16 %v538, %v536
        %v599 = vpack.c.b16 %v541, %v539
        %v600 = vpack.c.b16 %v542, %v540
        %v601 = vpack.c.b16 %v545, %v543
        %v602 = vpack.c.b16 %v546, %v544
        %v603 = vpack.c.b16 %v549, %v547
        %v604 = vpack.c.b16 %v550, %v548
        %v605 = vpack.c.b16 %v553, %v551
        %v606 = vpack.c.b16 %v554, %v552
        %v607 = vpack.c.b16 %v557, %v555
        %v608 = vpack.c.b16 %v558, %v556
        %v609 = vpack.c.b16 %v561, %v559
        %v610 = vpack.c.b16 %v562, %v560
        %v611 = vpack.c.b16 %v565, %v563
        %v612 = vpack.c.b16 %v566, %v564
        %v613 = vpack.c.b16 %v569, %v567
        %v614 = vpack.c.b16 %v570, %v568
        %v615 = vpack.c.b16 %v573, %v571
        %v616 = vpack.c.b16 %v574, %v572
        %v617 = vpack.c.b16 %v577, %v575
        %v618 = vpack.c.b16 %v578, %v576
        %v619 = vpack.c.b16 %v581, %v579
        %v620 = vpack.c.b16 %v582, %v580
        %v621 = vpack.c.b16 %v585, %v583
        %v622 = vpack.c.b16 %v586, %v584
        %v623 = vpack.c.b16 %v589, %v587
        %v624 = vpack.c.b16 %v590, %v588
        %v625 = vpack.c.b16 %v593, %v591
        %v626 = vpack.c.b16 %v594, %v592
        %659 = vmatprep.subr.bf16.mxu0 %v596
        %660 = vmatpush1.bf16.msra.mxu0 %v595
        %661 = vmatprep.subr.bf16.mxu0 %v598
        %662 = vmatpush1.bf16.msra.mxu0 %v597
        %663 = vmatprep.subr.bf16.mxu0 %v600
        %664 = vmatpush1.bf16.msra.mxu0 %v599
        %665 = vmatprep.subr.bf16.mxu0 %v602
        %666 = vmatpush1.bf16.msra.mxu0 %v601
        %667 = vmatprep.subr.bf16.mxu0 %v604
        %668 = vmatpush1.bf16.msra.mxu0 %v603
        %669 = vmatprep.subr.bf16.mxu0 %v606
        %670 = vmatpush1.bf16.msra.mxu0 %v605
        %671 = vmatprep.subr.bf16.mxu0 %v608
        %672 = vmatpush1.bf16.msra.mxu0 %v607
        %673 = vmatprep.subr.bf16.mxu0 %v610
        %674 = vmatpush1.bf16.msra.mxu0 %v609
        %675 = vmatprep.subr.bf16.mxu0 %v612
        %676 = vmatpush1.bf16.msra.mxu0 %v611
        %677 = vmatprep.subr.bf16.mxu0 %v614
        %678 = vmatpush1.bf16.msra.mxu0 %v613
        %679 = vmatprep.subr.bf16.mxu0 %v616
        %680 = vmatpush1.bf16.msra.mxu0 %v615
        %681 = vmatprep.subr.bf16.mxu0 %v618
        %682 = vmatpush1.bf16.msra.mxu0 %v617
        %683 = vmatprep.subr.bf16.mxu0 %v620
        %684 = vmatpush1.bf16.msra.mxu0 %v619
        %685 = vmatprep.subr.bf16.mxu0 %v622
        %686 = vmatpush1.bf16.msra.mxu0 %v621
        %687 = vmatprep.subr.bf16.mxu0 %v624
        %688 = vmatpush1.bf16.msra.mxu0 %v623
        %689 = vmatprep.subr.bf16.mxu0 %v626
        %690 = vmatpush1.bf16.msra.mxu0 %v625
        %691 = vmatprep.mubr.bf16.mxu0 %v468
        %692 = vmatmul.mubr.bf16.gmra.mrb[0].mxu0 %v467
        %v693 = vpop.f32.mrb[0].mxu0
        %v694 = vadd.f32 %v412, %v693
        %v695 = vpop.f32.mrb[0].mxu0
        %v696 = vadd.f32 %v416, %v695
        %v697 = vpop.f32.mrb[0].mxu0
        %v698 = vadd.f32 %v412, %v697
        %v699 = vpop.f32.mrb[0].mxu0
        %v700 = vadd.f32 %v416, %v699
        %701 = vmatprep.mubr.bf16.mxu0 %v470
        %702 = vmatmul.mubr.bf16.gmra.mrb[0].mxu0 %v469
        %v703 = vpop.f32.mrb[0].mxu0
        %v704 = vadd.f32 %v412, %v703
        %v705 = vpop.f32.mrb[0].mxu0
        %v706 = vadd.f32 %v416, %v705
        %v707 = vpop.f32.mrb[0].mxu0
        %v708 = vadd.f32 %v412, %v707
        %v709 = vpop.f32.mrb[0].mxu0
        %v710 = vadd.f32 %v416, %v709
        %711 = vmatprep.mubr.bf16.mxu0 %v472
        %712 = vmatmul.mubr.bf16.gmra.mrb[0].mxu0 %v471
        %v713 = vpop.f32.mrb[0].mxu0
        %v714 = vadd.f32 %v412, %v713
        %v715 = vpop.f32.mrb[0].mxu0
        %v716 = vadd.f32 %v416, %v715
        %v717 = vpop.f32.mrb[0].mxu0
        %v718 = vadd.f32 %v412, %v717
        %v719 = vpop.f32.mrb[0].mxu0
        %v720 = vadd.f32 %v416, %v719
        %721 = vmatprep.mubr.bf16.mxu0 %v474
        %722 = vmatmul.mubr.bf16.gmra.mrb[0].mxu0 %v473
        %v723 = vpop.f32.mrb[0].mxu0
        %v724 = vadd.f32 %v412, %v723
        %v725 = vpop.f32.mrb[0].mxu0
        %v726 = vadd.f32 %v416, %v725
        %v727 = vpop.f32.mrb[0].mxu0
        %v728 = vadd.f32 %v412, %v727
        %v729 = vpop.f32.mrb[0].mxu0
        %v730 = vadd.f32 %v416, %v729
        %731 = vmatprep.mubr.bf16.mxu0 %v476
        %732 = vmatmul.mubr.bf16.gmra.mrb[0].mxu0 %v475
        %v733 = vpop.f32.mrb[0].mxu0
        %v734 = vadd.f32 %v412, %v733
        %v735 = vpop.f32.mrb[0].mxu0
        %v736 = vadd.f32 %v416, %v735
        %v737 = vpop.f32.mrb[0].mxu0
        %v738 = vadd.f32 %v412, %v737
        %v739 = vpop.f32.mrb[0].mxu0
        %v740 = vadd.f32 %v416, %v739
        %741 = vmatprep.mubr.bf16.mxu0 %v478
        %742 = vmatmul.mubr.bf16.gmra.mrb[0].mxu0 %v477
        %v743 = vpop.f32.mrb[0].mxu0
        %v744 = vadd.f32 %v412, %v743
        %v745 = vpop.f32.mrb[0].mxu0
        %v746 = vadd.f32 %v416, %v745
        %v747 = vpop.f32.mrb[0].mxu0
        %v748 = vadd.f32 %v412, %v747
        %v749 = vpop.f32.mrb[0].mxu0
        %v750 = vadd.f32 %v416, %v749
        %751 = vmatprep.mubr.bf16.mxu0 %v480
        %752 = vmatmul.mubr.bf16.gmra.mrb[0].mxu0 %v479
        %v753 = vpop.f32.mrb[0].mxu0
        %v754 = vadd.f32 %v412, %v753
        %v755 = vpop.f32.mrb[0].mxu0
        %v756 = vadd.f32 %v416, %v755
        %v757 = vpop.f32.mrb[0].mxu0
        %v758 = vadd.f32 %v412, %v757
        %v759 = vpop.f32.mrb[0].mxu0
        %v760 = vadd.f32 %v416, %v759
        %761 = vmatprep.mubr.bf16.mxu0 %v482
        %762 = vmatmul.mubr.bf16.gmra.mrb[0].mxu0 %v481
        %v763 = vpop.f32.mrb[0].mxu0
        %v764 = vadd.f32 %v412, %v763
        %v765 = vpop.f32.mrb[0].mxu0
        %v766 = vadd.f32 %v416, %v765
        %v767 = vpop.f32.mrb[0].mxu0
        %v768 = vadd.f32 %v412, %v767
        %v769 = vpop.f32.mrb[0].mxu0
        %v770 = vadd.f32 %v416, %v769
        %771 = vdwg.mxu0
        %v772 = vmax.f32 %v694, 0.0
        %v773 = vmax.f32 %v696, 0.0
        %v774 = vmax.f32 %v698, 0.0
        %v775 = vmax.f32 %v700, 0.0
        %v776 = vmax.f32 %v704, 0.0
        %v777 = vmax.f32 %v706, 0.0
        %v778 = vmax.f32 %v708, 0.0
        %v779 = vmax.f32 %v710, 0.0
        %v780 = vmax.f32 %v714, 0.0
        %v781 = vmax.f32 %v716, 0.0
        %v782 = vmax.f32 %v718, 0.0
        %v783 = vmax.f32 %v720, 0.0
        %v784 = vmax.f32 %v724, 0.0
        %v785 = vmax.f32 %v726, 0.0
        %v786 = vmax.f32 %v728, 0.0
        %v787 = vmax.f32 %v730, 0.0
        %v788 = vmax.f32 %v734, 0.0
        %v789 = vmax.f32 %v736, 0.0
        %v790 = vmax.f32 %v738, 0.0
        %v791 = vmax.f32 %v740, 0.0
        %v792 = vmax.f32 %v744, 0.0
        %v793 = vmax.f32 %v746, 0.0
        %v794 = vmax.f32 %v748, 0.0
        %v795 = vmax.f32 %v750, 0.0
        %v796 = vmax.f32 %v754, 0.0
        %v797 = vmax.f32 %v756, 0.0
        %v798 = vmax.f32 %v758, 0.0
        %v799 = vmax.f32 %v760, 0.0
        %v800 = vmax.f32 %v764, 0.0
        %v801 = vmax.f32 %v766, 0.0
        %v802 = vmax.f32 %v768, 0.0
        %v803 = vmax.f32 %v770, 0.0
        %v804 = vpack.c.bf16 %v774, %v772
        %v805 = vpack.c.bf16 %v778, %v776
        %v806 = vpack.c.bf16 %v782, %v780
        %v807 = vpack.c.bf16 %v786, %v784
        %v808 = vpack.c.bf16 %v790, %v788
        %v809 = vpack.c.bf16 %v794, %v792
        %v810 = vpack.c.bf16 %v798, %v796
        %v811 = vpack.c.bf16 %v802, %v800
        %v812 = vpack.c.bf16 %v775, %v773
        %v813 = vpack.c.bf16 %v779, %v777
        %v814 = vpack.c.bf16 %v783, %v781
        %v815 = vpack.c.bf16 %v787, %v785
        %v816 = vpack.c.bf16 %v791, %v789
        %v817 = vpack.c.bf16 %v795, %v793
        %v818 = vpack.c.bf16 %v799, %v797
        %v819 = vpack.c.bf16 %v803, %v801
        %v820 = vld [vmem:[%s3] sm:$0xf]
        %v821 = vld [vmem:[%s3 + $0x4] sm:$0xf]
        %v822 = vld [vmem:[%s3 + $0x8] sm:$0xf]
        %v823 = vld [vmem:[%s3 + $0xc] sm:$0xf]
        %v824 = vld [vmem:[%s3 + $0x10] sm:$0xf]
        %v825 = vld [vmem:[%s3 + $0x14] sm:$0xf]
        %v826 = vld [vmem:[%s3 + $0x18] sm:$0xf]
        %v827 = vld [vmem:[%s3 + $0x1c] sm:$0xf]
        %v828 = vld [vmem:[%s3 + $0x20] sm:$0xf]
        %v829 = vld [vmem:[%s3 + $0x24] sm:$0xf]
        %v830 = vld [vmem:[%s3 + $0x28] sm:$0xf]
        %v831 = vld [vmem:[%s3 + $0x2c] sm:$0xf]
        %v832 = vld [vmem:[%s3 + $0x30] sm:$0xf]
        %v833 = vld [vmem:[%s3 + $0x34] sm:$0xf]
        %v834 = vld [vmem:[%s3 + $0x38] sm:$0xf]
        %v835 = vld [vmem:[%s3 + $0x3c] sm:$0xf]
        %v836 = vld [vmem:[%s4] sm:$0x1]
        %v838 = vlaneseq
        %v839 = vshrl.u32 %v838, 7
        %v840 = vsub.s32 0, %v839
        %v841 = vrot.slane %v836, %v840
        %v859 = vunpack.c.l.b16 %v820
        %v860 = vunpack.c.l.b16 %v821
        %v861 = vunpack.c.l.b16 %v822
        %v862 = vunpack.c.l.b16 %v823
        %v863 = vunpack.c.l.b16 %v824
        %v864 = vunpack.c.l.b16 %v825
        %v865 = vunpack.c.l.b16 %v826
        %v866 = vunpack.c.l.b16 %v827
        %v867 = vunpack.c.l.b16 %v828
        %v868 = vunpack.c.l.b16 %v829
        %v869 = vunpack.c.l.b16 %v830
        %v870 = vunpack.c.l.b16 %v831
        %v871 = vunpack.c.l.b16 %v832
        %v872 = vunpack.c.l.b16 %v833
        %v873 = vunpack.c.l.b16 %v834
        %v874 = vunpack.c.l.b16 %v835
        %v875 = vpack.c.b16 %v860, %v859
        %v876 = vpack.c.b16 %v862, %v861
        %v877 = vpack.c.b16 %v864, %v863
        %v878 = vpack.c.b16 %v866, %v865
        %v879 = vpack.c.b16 %v868, %v867
        %v880 = vpack.c.b16 %v870, %v869
        %v881 = vpack.c.b16 %v872, %v871
        %v882 = vpack.c.b16 %v874, %v873
        %891 = vmatprep.subr.bf16.mxu0 0
        %892 = vmatpush1.bf16.msra.mxu0 %v875
        %893 = vmatprep.subr.bf16.mxu0 0
        %894 = vmatpush1.bf16.msra.mxu0 %v876
        %895 = vmatprep.subr.bf16.mxu0 0
        %896 = vmatpush1.bf16.msra.mxu0 %v877
        %897 = vmatprep.subr.bf16.mxu0 0
        %898 = vmatpush1.bf16.msra.mxu0 %v878
        %899 = vmatprep.subr.bf16.mxu0 0
        %900 = vmatpush1.bf16.msra.mxu0 %v879
        %901 = vmatprep.subr.bf16.mxu0 0
        %902 = vmatpush1.bf16.msra.mxu0 %v880
        %903 = vmatprep.subr.bf16.mxu0 0
        %904 = vmatpush1.bf16.msra.mxu0 %v881
        %905 = vmatprep.subr.bf16.mxu0 0
        %906 = vmatpush1.bf16.msra.mxu0 %v882
        %907 = vmatprep.subr.bf16.mxu0 0
        %908 = vmatpush1.bf16.msra.mxu0 0
        %909 = vmatprep.subr.bf16.mxu0 0
        %910 = vmatpush1.bf16.msra.mxu0 0
        %911 = vmatprep.subr.bf16.mxu0 0
        %912 = vmatpush1.bf16.msra.mxu0 0
        %913 = vmatprep.subr.bf16.mxu0 0
        %914 = vmatpush1.bf16.msra.mxu0 0
        %915 = vmatprep.subr.bf16.mxu0 0
        %916 = vmatpush1.bf16.msra.mxu0 0
        %917 = vmatprep.subr.bf16.mxu0 0
        %918 = vmatpush1.bf16.msra.mxu0 0
        %919 = vmatprep.subr.bf16.mxu0 0
        %920 = vmatpush1.bf16.msra.mxu0 0
        %921 = vmatprep.subr.bf16.mxu0 0
        %922 = vmatpush1.bf16.msra.mxu0 0
        %923 = vmatprep.mubr.bf16.mxu0 0
        %924 = vmatmul.mubr.bf16.gmra.mrb[0].mxu0 %v804
        %v925 = vpop.f32.mrb[0].mxu0
        %v926 = vadd.f32 %v841, %v925
        %v927 = vpop.f32.mrb[0].mxu0
        %v928 = vpop.f32.mrb[0].mxu0
        %v929 = vadd.f32 %v841, %v928
        %v930 = vpop.f32.mrb[0].mxu0
        %931 = vmatprep.mubr.bf16.mxu0 0
        %932 = vmatmul.mubr.bf16.gmra.mrb[0].mxu0 %v805
        %v933 = vpop.f32.mrb[0].mxu0
        %v934 = vadd.f32 %v841, %v933
        %v935 = vpop.f32.mrb[0].mxu0
        %v936 = vpop.f32.mrb[0].mxu0
        %v937 = vadd.f32 %v841, %v936
        %v938 = vpop.f32.mrb[0].mxu0
        %939 = vmatprep.mubr.bf16.mxu0 0
        %940 = vmatmul.mubr.bf16.gmra.mrb[0].mxu0 %v806
        %v941 = vpop.f32.mrb[0].mxu0
        %v942 = vadd.f32 %v841, %v941
        %v943 = vpop.f32.mrb[0].mxu0
        %v944 = vpop.f32.mrb[0].mxu0
        %v945 = vadd.f32 %v841, %v944
        %v946 = vpop.f32.mrb[0].mxu0
        %947 = vmatprep.mubr.bf16.mxu0 0
        %948 = vmatmul.mubr.bf16.gmra.mrb[0].mxu0 %v807
        %v949 = vpop.f32.mrb[0].mxu0
        %v950 = vadd.f32 %v841, %v949
        %v951 = vpop.f32.mrb[0].mxu0
        %v952 = vpop.f32.mrb[0].mxu0
        %v953 = vadd.f32 %v841, %v952
        %v954 = vpop.f32.mrb[0].mxu0
        %955 = vmatprep.mubr.bf16.mxu0 0
        %956 = vmatmul.mubr.bf16.gmra.mrb[0].mxu0 %v808
        %v957 = vpop.f32.mrb[0].mxu0
        %v958 = vadd.f32 %v841, %v957
        %v959 = vpop.f32.mrb[0].mxu0
        %v960 = vpop.f32.mrb[0].mxu0
        %v961 = vadd.f32 %v841, %v960
        %v962 = vpop.f32.mrb[0].mxu0
        %963 = vmatprep.mubr.bf16.mxu0 0
        %964 = vmatmul.mubr.bf16.gmra.mrb[0].mxu0 %v809
        %v965 = vpop.f32.mrb[0].mxu0
        %v966 = vadd.f32 %v841, %v965
        %v967 = vpop.f32.mrb[0].mxu0
        %v968 = vpop.f32.mrb[0].mxu0
        %v969 = vadd.f32 %v841, %v968
        %v970 = vpop.f32.mrb[0].mxu0
        %971 = vmatprep.mubr.bf16.mxu0 0
        %972 = vmatmul.mubr.bf16.gmra.mrb[0].mxu0 %v810
        %v973 = vpop.f32.mrb[0].mxu0
        %v974 = vadd.f32 %v841, %v973
        %v975 = vpop.f32.mrb[0].mxu0
        %v976 = vpop.f32.mrb[0].mxu0
        %v977 = vadd.f32 %v841, %v976
        %v978 = vpop.f32.mrb[0].mxu0
        %979 = vmatprep.mubr.bf16.mxu0 0
        %980 = vmatmul.mubr.bf16.gmra.mrb[0].mxu0 %v811
        %v981 = vpop.f32.mrb[0].mxu0
        %v982 = vadd.f32 %v841, %v981
        %v983 = vpop.f32.mrb[0].mxu0
        %v984 = vpop.f32.mrb[0].mxu0
        %v985 = vadd.f32 %v841, %v984
        %v986 = vpop.f32.mrb[0].mxu0
        %987 = vdwg.mxu0
        %v988 = vld [vmem:[%s5] sm:$0xf]
        %v989 = vld [vmem:[%s5 + $0x4] sm:$0xf]
        %v990 = vld [vmem:[%s5 + $0x8] sm:$0xf]
        %v991 = vld [vmem:[%s5 + $0xc] sm:$0xf]
        %v992 = vld [vmem:[%s5 + $0x10] sm:$0xf]
        %v993 = vld [vmem:[%s5 + $0x14] sm:$0xf]
        %v994 = vld [vmem:[%s5 + $0x18] sm:$0xf]
        %v995 = vld [vmem:[%s5 + $0x1c] sm:$0xf]
        %v996 = vld [vmem:[%s5 + $0x20] sm:$0xf]
        %v997 = vld [vmem:[%s5 + $0x24] sm:$0xf]
        %v998 = vld [vmem:[%s5 + $0x28] sm:$0xf]
        %v999 = vld [vmem:[%s5 + $0x2c] sm:$0xf]
        %v1000 = vld [vmem:[%s5 + $0x30] sm:$0xf]
        %v1001 = vld [vmem:[%s5 + $0x34] sm:$0xf]
        %v1002 = vld [vmem:[%s5 + $0x38] sm:$0xf]
        %v1003 = vld [vmem:[%s5 + $0x3c] sm:$0xf]
        %v1004 = vld [vmem:[%s6] sm:$0x1]
        %v1006 = vlaneseq
        %v1007 = vshrl.u32 %v1006, 7
        %v1008 = vsub.s32 0, %v1007
        %v1009 = vrot.slane %v1004, %v1008
        %v1027 = vunpack.c.l.b16 %v988
        %v1028 = vunpack.c.l.b16 %v989
        %v1029 = vunpack.c.l.b16 %v990
        %v1030 = vunpack.c.l.b16 %v991
        %v1031 = vunpack.c.l.b16 %v992
        %v1032 = vunpack.c.l.b16 %v993
        %v1033 = vunpack.c.l.b16 %v994
        %v1034 = vunpack.c.l.b16 %v995
        %v1035 = vunpack.c.l.b16 %v996
        %v1036 = vunpack.c.l.b16 %v997
        %v1037 = vunpack.c.l.b16 %v998
        %v1038 = vunpack.c.l.b16 %v999
        %v1039 = vunpack.c.l.b16 %v1000
        %v1040 = vunpack.c.l.b16 %v1001
        %v1041 = vunpack.c.l.b16 %v1002
        %v1042 = vunpack.c.l.b16 %v1003
        %v1043 = vpack.c.b16 %v1028, %v1027
        %v1044 = vpack.c.b16 %v1030, %v1029
        %v1045 = vpack.c.b16 %v1032, %v1031
        %v1046 = vpack.c.b16 %v1034, %v1033
        %v1047 = vpack.c.b16 %v1036, %v1035
        %v1048 = vpack.c.b16 %v1038, %v1037
        %v1049 = vpack.c.b16 %v1040, %v1039
        %v1050 = vpack.c.b16 %v1042, %v1041
        %1059 = vmatprep.subr.bf16.mxu0 0
        %1060 = vmatpush1.bf16.msra.mxu0 %v1043
        %1061 = vmatprep.subr.bf16.mxu0 0
        %1062 = vmatpush1.bf16.msra.mxu0 %v1044
        %1063 = vmatprep.subr.bf16.mxu0 0
        %1064 = vmatpush1.bf16.msra.mxu0 %v1045
        %1065 = vmatprep.subr.bf16.mxu0 0
        %1066 = vmatpush1.bf16.msra.mxu0 %v1046
        %1067 = vmatprep.subr.bf16.mxu0 0
        %1068 = vmatpush1.bf16.msra.mxu0 %v1047
        %1069 = vmatprep.subr.bf16.mxu0 0
        %1070 = vmatpush1.bf16.msra.mxu0 %v1048
        %1071 = vmatprep.subr.bf16.mxu0 0
        %1072 = vmatpush1.bf16.msra.mxu0 %v1049
        %1073 = vmatprep.subr.bf16.mxu0 0
        %1074 = vmatpush1.bf16.msra.mxu0 %v1050
        %1075 = vmatprep.subr.bf16.mxu0 0
        %1076 = vmatpush1.bf16.msra.mxu0 0
        %1077 = vmatprep.subr.bf16.mxu0 0
        %1078 = vmatpush1.bf16.msra.mxu0 0
        %1079 = vmatprep.subr.bf16.mxu0 0
        %1080 = vmatpush1.bf16.msra.mxu0 0
        %1081 = vmatprep.subr.bf16.mxu0 0
        %1082 = vmatpush1.bf16.msra.mxu0 0
        %1083 = vmatprep.subr.bf16.mxu0 0
        %1084 = vmatpush1.bf16.msra.mxu0 0
        %1085 = vmatprep.subr.bf16.mxu0 0
        %1086 = vmatpush1.bf16.msra.mxu0 0
        %1087 = vmatprep.subr.bf16.mxu0 0
        %1088 = vmatpush1.bf16.msra.mxu0 0
        %1089 = vmatprep.subr.bf16.mxu0 0
        %1090 = vmatpush1.bf16.msra.mxu0 0
        %1091 = vmatprep.mubr.bf16.mxu0 0
        %1092 = vmatmul.mubr.bf16.gmra.mrb[0].mxu0 %v812
        %v1093 = vpop.f32.mrb[0].mxu0
        %v1094 = vadd.f32 %v1009, %v1093
        %v1095 = vpop.f32.mrb[0].mxu0
        %v1096 = vpop.f32.mrb[0].mxu0
        %v1097 = vadd.f32 %v1009, %v1096
        %v1098 = vpop.f32.mrb[0].mxu0
        %1099 = vmatprep.mubr.bf16.mxu0 0
        %1100 = vmatmul.mubr.bf16.gmra.mrb[0].mxu0 %v813
        %v1101 = vpop.f32.mrb[0].mxu0
        %v1102 = vadd.f32 %v1009, %v1101
        %v1103 = vpop.f32.mrb[0].mxu0
        %v1104 = vpop.f32.mrb[0].mxu0
        %v1105 = vadd.f32 %v1009, %v1104
        %v1106 = vpop.f32.mrb[0].mxu0
        %1107 = vmatprep.mubr.bf16.mxu0 0
        %1108 = vmatmul.mubr.bf16.gmra.mrb[0].mxu0 %v814
        %v1109 = vpop.f32.mrb[0].mxu0
        %v1110 = vadd.f32 %v1009, %v1109
        %v1111 = vpop.f32.mrb[0].mxu0
        %v1112 = vpop.f32.mrb[0].mxu0
        %v1113 = vadd.f32 %v1009, %v1112
        %v1114 = vpop.f32.mrb[0].mxu0
        %1115 = vmatprep.mubr.bf16.mxu0 0
        %1116 = vmatmul.mubr.bf16.gmra.mrb[0].mxu0 %v815
        %v1117 = vpop.f32.mrb[0].mxu0
        %v1118 = vadd.f32 %v1009, %v1117
        %v1119 = vpop.f32.mrb[0].mxu0
        %v1120 = vpop.f32.mrb[0].mxu0
        %v1121 = vadd.f32 %v1009, %v1120
        %v1122 = vpop.f32.mrb[0].mxu0
        %1123 = vmatprep.mubr.bf16.mxu0 0
        %1124 = vmatmul.mubr.bf16.gmra.mrb[0].mxu0 %v816
        %v1125 = vpop.f32.mrb[0].mxu0
        %v1126 = vadd.f32 %v1009, %v1125
        %v1127 = vpop.f32.mrb[0].mxu0
        %v1128 = vpop.f32.mrb[0].mxu0
        %v1129 = vadd.f32 %v1009, %v1128
        %v1130 = vpop.f32.mrb[0].mxu0
        %1131 = vmatprep.mubr.bf16.mxu0 0
        %1132 = vmatmul.mubr.bf16.gmra.mrb[0].mxu0 %v817
        %v1133 = vpop.f32.mrb[0].mxu0
        %v1134 = vadd.f32 %v1009, %v1133
        %v1135 = vpop.f32.mrb[0].mxu0
        %v1136 = vpop.f32.mrb[0].mxu0
        %v1137 = vadd.f32 %v1009, %v1136
        %v1138 = vpop.f32.mrb[0].mxu0
        %1139 = vmatprep.mubr.bf16.mxu0 0
        %1140 = vmatmul.mubr.bf16.gmra.mrb[0].mxu0 %v818
        %v1141 = vpop.f32.mrb[0].mxu0
        %v1142 = vadd.f32 %v1009, %v1141
        %v1143 = vpop.f32.mrb[0].mxu0
        %v1144 = vpop.f32.mrb[0].mxu0
        %v1145 = vadd.f32 %v1009, %v1144
        %v1146 = vpop.f32.mrb[0].mxu0
        %1147 = vmatprep.mubr.bf16.mxu0 0
        %1148 = vmatmul.mubr.bf16.gmra.mrb[0].mxu0 %v819
        %v1149 = vpop.f32.mrb[0].mxu0
        %v1150 = vadd.f32 %v1009, %v1149
        %v1151 = vpop.f32.mrb[0].mxu0
        %v1152 = vpop.f32.mrb[0].mxu0
        %v1153 = vadd.f32 %v1009, %v1152
        %v1154 = vpop.f32.mrb[0].mxu0
        %1155 = vdwg.mxu0
        %vm1156 = vcmask 130048
        %v1157 = vsel %vm1156, %v1094, -inf
        %v1158 = vrot.slane %v1157, 4
        %v1159 = vmax.f32 %v1157, %v1158
        %v1160 = vrot.slane %v1159, 2
        %v1161 = vmax.f32 %v1159, %v1160
        %v1162 = vrot.slane %v1161, 1
        %v1163 = vmax.f32 %v1161, %v1162
        %v1164 = vsel %vm1156, %v1097, -inf
        %v1165 = vrot.slane %v1164, 4
        %v1166 = vmax.f32 %v1164, %v1165
        %v1167 = vrot.slane %v1166, 2
        %v1168 = vmax.f32 %v1166, %v1167
        %v1169 = vrot.slane %v1168, 1
        %v1170 = vmax.f32 %v1168, %v1169
        %v1171 = vsel %vm1156, %v1102, -inf
        %v1172 = vrot.slane %v1171, 4
        %v1173 = vmax.f32 %v1171, %v1172
        %v1174 = vrot.slane %v1173, 2
        %v1175 = vmax.f32 %v1173, %v1174
        %v1176 = vrot.slane %v1175, 1
        %v1177 = vmax.f32 %v1175, %v1176
        %v1178 = vsel %vm1156, %v1105, -inf
        %v1179 = vrot.slane %v1178, 4
        %v1180 = vmax.f32 %v1178, %v1179
        %v1181 = vrot.slane %v1180, 2
        %v1182 = vmax.f32 %v1180, %v1181
        %v1183 = vrot.slane %v1182, 1
        %v1184 = vmax.f32 %v1182, %v1183
        %v1185 = vsel %vm1156, %v1110, -inf
        %v1186 = vrot.slane %v1185, 4
        %v1187 = vmax.f32 %v1185, %v1186
        %v1188 = vrot.slane %v1187, 2
        %v1189 = vmax.f32 %v1187, %v1188
        %v1190 = vrot.slane %v1189, 1
        %v1191 = vmax.f32 %v1189, %v1190
        %v1192 = vsel %vm1156, %v1113, -inf
        %v1193 = vrot.slane %v1192, 4
        %v1194 = vmax.f32 %v1192, %v1193
        %v1195 = vrot.slane %v1194, 2
        %v1196 = vmax.f32 %v1194, %v1195
        %v1197 = vrot.slane %v1196, 1
        %v1198 = vmax.f32 %v1196, %v1197
        %v1199 = vsel %vm1156, %v1118, -inf
        %v1200 = vrot.slane %v1199, 4
        %v1201 = vmax.f32 %v1199, %v1200
        %v1202 = vrot.slane %v1201, 2
        %v1203 = vmax.f32 %v1201, %v1202
        %v1204 = vrot.slane %v1203, 1
        %v1205 = vmax.f32 %v1203, %v1204
        %v1206 = vsel %vm1156, %v1121, -inf
        %v1207 = vrot.slane %v1206, 4
        %v1208 = vmax.f32 %v1206, %v1207
        %v1209 = vrot.slane %v1208, 2
        %v1210 = vmax.f32 %v1208, %v1209
        %v1211 = vrot.slane %v1210, 1
        %v1212 = vmax.f32 %v1210, %v1211
        %v1213 = vsel %vm1156, %v1126, -inf
        %v1214 = vrot.slane %v1213, 4
        %v1215 = vmax.f32 %v1213, %v1214
        %v1216 = vrot.slane %v1215, 2
        %v1217 = vmax.f32 %v1215, %v1216
        %v1218 = vrot.slane %v1217, 1
        %v1219 = vmax.f32 %v1217, %v1218
        %v1220 = vsel %vm1156, %v1129, -inf
        %v1221 = vrot.slane %v1220, 4
        %v1222 = vmax.f32 %v1220, %v1221
        %v1223 = vrot.slane %v1222, 2
        %v1224 = vmax.f32 %v1222, %v1223
        %v1225 = vrot.slane %v1224, 1
        %v1226 = vmax.f32 %v1224, %v1225
        %v1227 = vsel %vm1156, %v1134, -inf
        %v1228 = vrot.slane %v1227, 4
        %v1229 = vmax.f32 %v1227, %v1228
        %v1230 = vrot.slane %v1229, 2
        %v1231 = vmax.f32 %v1229, %v1230
        %v1232 = vrot.slane %v1231, 1
        %v1233 = vmax.f32 %v1231, %v1232
        %v1234 = vsel %vm1156, %v1137, -inf
        %v1235 = vrot.slane %v1234, 4
        %v1236 = vmax.f32 %v1234, %v1235
        %v1237 = vrot.slane %v1236, 2
        %v1238 = vmax.f32 %v1236, %v1237
        %v1239 = vrot.slane %v1238, 1
        %v1240 = vmax.f32 %v1238, %v1239
        %v1241 = vsel %vm1156, %v1142, -inf
        %v1242 = vrot.slane %v1241, 4
        %v1243 = vmax.f32 %v1241, %v1242
        %v1244 = vrot.slane %v1243, 2
        %v1245 = vmax.f32 %v1243, %v1244
        %v1246 = vrot.slane %v1245, 1
        %v1247 = vmax.f32 %v1245, %v1246
        %v1248 = vsel %vm1156, %v1145, -inf
        %v1249 = vrot.slane %v1248, 4
        %v1250 = vmax.f32 %v1248, %v1249
        %v1251 = vrot.slane %v1250, 2
        %v1252 = vmax.f32 %v1250, %v1251
        %v1253 = vrot.slane %v1252, 1
        %v1254 = vmax.f32 %v1252, %v1253
        %v1255 = vsel %vm1156, %v1150, -inf
        %v1256 = vrot.slane %v1255, 4
        %v1257 = vmax.f32 %v1255, %v1256
        %v1258 = vrot.slane %v1257, 2
        %v1259 = vmax.f32 %v1257, %v1258
        %v1260 = vrot.slane %v1259, 1
        %v1261 = vmax.f32 %v1259, %v1260
        %v1262 = vsel %vm1156, %v1153, -inf
        %v1263 = vrot.slane %v1262, 4
        %v1264 = vmax.f32 %v1262, %v1263
        %v1265 = vrot.slane %v1264, 2
        %v1266 = vmax.f32 %v1264, %v1265
        %v1267 = vrot.slane %v1266, 1
        %v1268 = vmax.f32 %v1266, %v1267
        %v1269 = vsub.f32 %v1094, %v1163
        %v1270 = vsub.f32 %v1097, %v1170
        %v1271 = vsub.f32 %v1102, %v1177
        %v1272 = vsub.f32 %v1105, %v1184
        %v1273 = vsub.f32 %v1110, %v1191
        %v1274 = vsub.f32 %v1113, %v1198
        %v1275 = vsub.f32 %v1118, %v1205
        %v1276 = vsub.f32 %v1121, %v1212
        %v1277 = vsub.f32 %v1126, %v1219
        %v1278 = vsub.f32 %v1129, %v1226
        %v1279 = vsub.f32 %v1134, %v1233
        %v1280 = vsub.f32 %v1137, %v1240
        %v1281 = vsub.f32 %v1142, %v1247
        %v1282 = vsub.f32 %v1145, %v1254
        %v1283 = vsub.f32 %v1150, %v1261
        %v1284 = vsub.f32 %v1153, %v1268
        %v1285 = vmul.f32 %v1269, 1.442695
        %v1286 = vpow.pop %v1285
        %v1287 = vmul.f32 %v1270, 1.442695
        %v1288 = vpow.pop %v1287
        %v1289 = vmul.f32 %v1271, 1.442695
        %v1290 = vpow.pop %v1289
        %v1291 = vmul.f32 %v1272, 1.442695
        %v1292 = vpow.pop %v1291
        %v1293 = vmul.f32 %v1273, 1.442695
        %v1294 = vpow.pop %v1293
        %v1295 = vmul.f32 %v1274, 1.442695
        %v1296 = vpow.pop %v1295
        %v1297 = vmul.f32 %v1275, 1.442695
        %v1298 = vpow.pop %v1297
        %v1299 = vmul.f32 %v1276, 1.442695
        %v1300 = vpow.pop %v1299
        %v1301 = vmul.f32 %v1277, 1.442695
        %v1302 = vpow.pop %v1301
        %v1303 = vmul.f32 %v1278, 1.442695
        %v1304 = vpow.pop %v1303
        %v1305 = vmul.f32 %v1279, 1.442695
        %v1306 = vpow.pop %v1305
        %v1307 = vmul.f32 %v1280, 1.442695
        %v1308 = vpow.pop %v1307
        %v1309 = vmul.f32 %v1281, 1.442695
        %v1310 = vpow.pop %v1309
        %v1311 = vmul.f32 %v1282, 1.442695
        %v1312 = vpow.pop %v1311
        %v1313 = vmul.f32 %v1283, 1.442695
        %v1314 = vpow.pop %v1313
        %v1315 = vmul.f32 %v1284, 1.442695
        %v1316 = vpow.pop %v1315
        %v1317 = vsel %vm1156, %v1286, 0.0
        %v1318 = vrot.slane %v1317, 4
        %v1319 = vadd.f32 %v1317, %v1318
        %v1320 = vrot.slane %v1319, 2
        %v1321 = vadd.f32 %v1319, %v1320
        %v1322 = vrot.slane %v1321, 1
        %v1323 = vadd.f32 %v1321, %v1322
        %v1324 = vsel %vm1156, %v1288, 0.0
        %v1325 = vrot.slane %v1324, 4
        %v1326 = vadd.f32 %v1324, %v1325
        %v1327 = vrot.slane %v1326, 2
        %v1328 = vadd.f32 %v1326, %v1327
        %v1329 = vrot.slane %v1328, 1
        %v1330 = vadd.f32 %v1328, %v1329
        %v1331 = vsel %vm1156, %v1290, 0.0
        %v1332 = vrot.slane %v1331, 4
        %v1333 = vadd.f32 %v1331, %v1332
        %v1334 = vrot.slane %v1333, 2
        %v1335 = vadd.f32 %v1333, %v1334
        %v1336 = vrot.slane %v1335, 1
        %v1337 = vadd.f32 %v1335, %v1336
        %v1338 = vsel %vm1156, %v1292, 0.0
        %v1339 = vrot.slane %v1338, 4
        %v1340 = vadd.f32 %v1338, %v1339
        %v1341 = vrot.slane %v1340, 2
        %v1342 = vadd.f32 %v1340, %v1341
        %v1343 = vrot.slane %v1342, 1
        %v1344 = vadd.f32 %v1342, %v1343
        %v1345 = vsel %vm1156, %v1294, 0.0
        %v1346 = vrot.slane %v1345, 4
        %v1347 = vadd.f32 %v1345, %v1346
        %v1348 = vrot.slane %v1347, 2
        %v1349 = vadd.f32 %v1347, %v1348
        %v1350 = vrot.slane %v1349, 1
        %v1351 = vadd.f32 %v1349, %v1350
        %v1352 = vsel %vm1156, %v1296, 0.0
        %v1353 = vrot.slane %v1352, 4
        %v1354 = vadd.f32 %v1352, %v1353
        %v1355 = vrot.slane %v1354, 2
        %v1356 = vadd.f32 %v1354, %v1355
        %v1357 = vrot.slane %v1356, 1
        %v1358 = vadd.f32 %v1356, %v1357
        %v1359 = vsel %vm1156, %v1298, 0.0
        %v1360 = vrot.slane %v1359, 4
        %v1361 = vadd.f32 %v1359, %v1360
        %v1362 = vrot.slane %v1361, 2
        %v1363 = vadd.f32 %v1361, %v1362
        %v1364 = vrot.slane %v1363, 1
        %v1365 = vadd.f32 %v1363, %v1364
        %v1366 = vsel %vm1156, %v1300, 0.0
        %v1367 = vrot.slane %v1366, 4
        %v1368 = vadd.f32 %v1366, %v1367
        %v1369 = vrot.slane %v1368, 2
        %v1370 = vadd.f32 %v1368, %v1369
        %v1371 = vrot.slane %v1370, 1
        %v1372 = vadd.f32 %v1370, %v1371
        %v1373 = vsel %vm1156, %v1302, 0.0
        %v1374 = vrot.slane %v1373, 4
        %v1375 = vadd.f32 %v1373, %v1374
        %v1376 = vrot.slane %v1375, 2
        %v1377 = vadd.f32 %v1375, %v1376
        %v1378 = vrot.slane %v1377, 1
        %v1379 = vadd.f32 %v1377, %v1378
        %v1380 = vsel %vm1156, %v1304, 0.0
        %v1381 = vrot.slane %v1380, 4
        %v1382 = vadd.f32 %v1380, %v1381
        %v1383 = vrot.slane %v1382, 2
        %v1384 = vadd.f32 %v1382, %v1383
        %v1385 = vrot.slane %v1384, 1
        %v1386 = vadd.f32 %v1384, %v1385
        %v1387 = vsel %vm1156, %v1306, 0.0
        %v1388 = vrot.slane %v1387, 4
        %v1389 = vadd.f32 %v1387, %v1388
        %v1390 = vrot.slane %v1389, 2
        %v1391 = vadd.f32 %v1389, %v1390
        %v1392 = vrot.slane %v1391, 1
        %v1393 = vadd.f32 %v1391, %v1392
        %v1394 = vsel %vm1156, %v1308, 0.0
        %v1395 = vrot.slane %v1394, 4
        %v1396 = vadd.f32 %v1394, %v1395
        %v1397 = vrot.slane %v1396, 2
        %v1398 = vadd.f32 %v1396, %v1397
        %v1399 = vrot.slane %v1398, 1
        %v1400 = vadd.f32 %v1398, %v1399
        %v1401 = vsel %vm1156, %v1310, 0.0
        %v1402 = vrot.slane %v1401, 4
        %v1403 = vadd.f32 %v1401, %v1402
        %v1404 = vrot.slane %v1403, 2
        %v1405 = vadd.f32 %v1403, %v1404
        %v1406 = vrot.slane %v1405, 1
        %v1407 = vadd.f32 %v1405, %v1406
        %v1408 = vsel %vm1156, %v1312, 0.0
        %v1409 = vrot.slane %v1408, 4
        %v1410 = vadd.f32 %v1408, %v1409
        %v1411 = vrot.slane %v1410, 2
        %v1412 = vadd.f32 %v1410, %v1411
        %v1413 = vrot.slane %v1412, 1
        %v1414 = vadd.f32 %v1412, %v1413
        %v1415 = vsel %vm1156, %v1314, 0.0
        %v1416 = vrot.slane %v1415, 4
        %v1417 = vadd.f32 %v1415, %v1416
        %v1418 = vrot.slane %v1417, 2
        %v1419 = vadd.f32 %v1417, %v1418
        %v1420 = vrot.slane %v1419, 1
        %v1421 = vadd.f32 %v1419, %v1420
        %v1422 = vsel %vm1156, %v1316, 0.0
        %v1423 = vrot.slane %v1422, 4
        %v1424 = vadd.f32 %v1422, %v1423
        %v1425 = vrot.slane %v1424, 2
        %v1426 = vadd.f32 %v1424, %v1425
        %v1427 = vrot.slane %v1426, 1
        %v1428 = vadd.f32 %v1426, %v1427
        %v1429 = vrcp.pop %v1323
        %v1430 = vrcp.pop %v1330
        %v1431 = vrcp.pop %v1337
        %v1432 = vrcp.pop %v1344
        %v1433 = vrcp.pop %v1351
        %v1434 = vrcp.pop %v1358
        %v1435 = vrcp.pop %v1365
        %v1436 = vrcp.pop %v1372
        %v1437 = vrcp.pop %v1379
        %v1438 = vrcp.pop %v1386
        %v1439 = vrcp.pop %v1393
        %v1440 = vrcp.pop %v1400
        %v1441 = vrcp.pop %v1407
        %v1442 = vrcp.pop %v1414
        %v1443 = vrcp.pop %v1421
        %v1444 = vrcp.pop %v1428
        %v1445 = vmul.f32 %v1286, %v1429
        %v1446 = vmul.f32 %v1288, %v1430
        %v1447 = vmul.f32 %v1290, %v1431
        %v1448 = vmul.f32 %v1292, %v1432
        %v1449 = vmul.f32 %v1294, %v1433
        %v1450 = vmul.f32 %v1296, %v1434
        %v1451 = vmul.f32 %v1298, %v1435
        %v1452 = vmul.f32 %v1300, %v1436
        %v1453 = vmul.f32 %v1302, %v1437
        %v1454 = vmul.f32 %v1304, %v1438
        %v1455 = vmul.f32 %v1306, %v1439
        %v1456 = vmul.f32 %v1308, %v1440
        %v1457 = vmul.f32 %v1310, %v1441
        %v1458 = vmul.f32 %v1312, %v1442
        %v1459 = vmul.f32 %v1314, %v1443
        %v1460 = vmul.f32 %v1316, %v1444
        %v1461 = vxor.u32 %v926, 2147483648
        %v1462 = vxor.u32 %v929, 2147483648
        %v1463 = vxor.u32 %v934, 2147483648
        %v1464 = vxor.u32 %v937, 2147483648
        %v1465 = vxor.u32 %v942, 2147483648
        %v1466 = vxor.u32 %v945, 2147483648
        %v1467 = vxor.u32 %v950, 2147483648
        %v1468 = vxor.u32 %v953, 2147483648
        %v1469 = vxor.u32 %v958, 2147483648
        %v1470 = vxor.u32 %v961, 2147483648
        %v1471 = vxor.u32 %v966, 2147483648
        %v1472 = vxor.u32 %v969, 2147483648
        %v1473 = vxor.u32 %v974, 2147483648
        %v1474 = vxor.u32 %v977, 2147483648
        %v1475 = vxor.u32 %v982, 2147483648
        %v1476 = vxor.u32 %v985, 2147483648
        %v1477 = vmul.f32 %v1461, 1.442695
        %v1478 = vpow.pop %v1477
        %v1479 = vmul.f32 %v1462, 1.442695
        %v1480 = vpow.pop %v1479
        %v1481 = vmul.f32 %v1463, 1.442695
        %v1482 = vpow.pop %v1481
        %v1483 = vmul.f32 %v1464, 1.442695
        %v1484 = vpow.pop %v1483
        %v1485 = vmul.f32 %v1465, 1.442695
        %v1486 = vpow.pop %v1485
        %v1487 = vmul.f32 %v1466, 1.442695
        %v1488 = vpow.pop %v1487
        %v1489 = vmul.f32 %v1467, 1.442695
        %v1490 = vpow.pop %v1489
        %v1491 = vmul.f32 %v1468, 1.442695
        %v1492 = vpow.pop %v1491
        %v1493 = vmul.f32 %v1469, 1.442695
        %v1494 = vpow.pop %v1493
        %v1495 = vmul.f32 %v1470, 1.442695
        %v1496 = vpow.pop %v1495
        %v1497 = vmul.f32 %v1471, 1.442695
        %v1498 = vpow.pop %v1497
        %v1499 = vmul.f32 %v1472, 1.442695
        %v1500 = vpow.pop %v1499
        %v1501 = vmul.f32 %v1473, 1.442695
        %v1502 = vpow.pop %v1501
        %v1503 = vmul.f32 %v1474, 1.442695
        %v1504 = vpow.pop %v1503
        %v1505 = vmul.f32 %v1475, 1.442695
        %v1506 = vpow.pop %v1505
        %v1507 = vmul.f32 %v1476, 1.442695
        %v1508 = vpow.pop %v1507
        %v1509 = vadd.f32 %v1478, 1.0
        %v1510 = vadd.f32 %v1480, 1.0
        %v1511 = vadd.f32 %v1482, 1.0
        %v1512 = vadd.f32 %v1484, 1.0
        %v1513 = vadd.f32 %v1486, 1.0
        %v1514 = vadd.f32 %v1488, 1.0
        %v1515 = vadd.f32 %v1490, 1.0
        %v1516 = vadd.f32 %v1492, 1.0
        %v1517 = vadd.f32 %v1494, 1.0
        %v1518 = vadd.f32 %v1496, 1.0
        %v1519 = vadd.f32 %v1498, 1.0
        %v1520 = vadd.f32 %v1500, 1.0
        %v1521 = vadd.f32 %v1502, 1.0
        %v1522 = vadd.f32 %v1504, 1.0
        %v1523 = vadd.f32 %v1506, 1.0
        %v1524 = vadd.f32 %v1508, 1.0
        %v1525 = vrcp.pop %v1509
        %v1526 = vmul.f32 1.0, %v1525
        %v1527 = vrcp.pop %v1510
        %v1528 = vmul.f32 1.0, %v1527
        %v1529 = vrcp.pop %v1511
        %v1530 = vmul.f32 1.0, %v1529
        %v1531 = vrcp.pop %v1512
        %v1532 = vmul.f32 1.0, %v1531
        %v1533 = vrcp.pop %v1513
        %v1534 = vmul.f32 1.0, %v1533
        %v1535 = vrcp.pop %v1514
        %v1536 = vmul.f32 1.0, %v1535
        %v1537 = vrcp.pop %v1515
        %v1538 = vmul.f32 1.0, %v1537
        %v1539 = vrcp.pop %v1516
        %v1540 = vmul.f32 1.0, %v1539
        %v1541 = vrcp.pop %v1517
        %v1542 = vmul.f32 1.0, %v1541
        %v1543 = vrcp.pop %v1518
        %v1544 = vmul.f32 1.0, %v1543
        %v1545 = vrcp.pop %v1519
        %v1546 = vmul.f32 1.0, %v1545
        %v1547 = vrcp.pop %v1520
        %v1548 = vmul.f32 1.0, %v1547
        %v1549 = vrcp.pop %v1521
        %v1550 = vmul.f32 1.0, %v1549
        %v1551 = vrcp.pop %v1522
        %v1552 = vmul.f32 1.0, %v1551
        %v1553 = vrcp.pop %v1523
        %v1554 = vmul.f32 1.0, %v1553
        %v1555 = vrcp.pop %v1524
        %v1556 = vmul.f32 1.0, %v1555
        %v1557 = vmul.f32 %v1445, %v1526
        %v1558 = vmul.f32 %v1446, %v1528
        %v1559 = vmul.f32 %v1447, %v1530
        %v1560 = vmul.f32 %v1448, %v1532
        %v1561 = vmul.f32 %v1449, %v1534
        %v1562 = vmul.f32 %v1450, %v1536
        %v1563 = vmul.f32 %v1451, %v1538
        %v1564 = vmul.f32 %v1452, %v1540
        %v1565 = vmul.f32 %v1453, %v1542
        %v1566 = vmul.f32 %v1454, %v1544
        %v1567 = vmul.f32 %v1455, %v1546
        %v1568 = vmul.f32 %v1456, %v1548
        %v1569 = vmul.f32 %v1457, %v1550
        %v1570 = vmul.f32 %v1458, %v1552
        %v1571 = vmul.f32 %v1459, %v1554
        %v1572 = vmul.f32 %v1460, %v1556
        %1573 = vst.msk [vmem:[%s356] sm:$0xff] %vm1156, %v1557
        %1574 = vst.msk [vmem:[%s356 + $0x8] sm:$0xff] %vm1156, %v1558
        %1575 = vst.msk [vmem:[%s356 + $0x10] sm:$0xff] %vm1156, %v1559
        %1576 = vst.msk [vmem:[%s356 + $0x18] sm:$0xff] %vm1156, %v1560
        %1577 = vst.msk [vmem:[%s356 + $0x20] sm:$0xff] %vm1156, %v1561
        %1578 = vst.msk [vmem:[%s356 + $0x28] sm:$0xff] %vm1156, %v1562
        %1579 = vst.msk [vmem:[%s356 + $0x30] sm:$0xff] %vm1156, %v1563
        %1580 = vst.msk [vmem:[%s356 + $0x38] sm:$0xff] %vm1156, %v1564
        %1581 = vst.msk [vmem:[%s356 + $0x40] sm:$0xff] %vm1156, %v1565
        %1582 = vst.msk [vmem:[%s356 + $0x48] sm:$0xff] %vm1156, %v1566
        %1583 = vst.msk [vmem:[%s356 + $0x50] sm:$0xff] %vm1156, %v1567
        %1584 = vst.msk [vmem:[%s356 + $0x58] sm:$0xff] %vm1156, %v1568
        %1585 = vst.msk [vmem:[%s356 + $0x60] sm:$0xff] %vm1156, %v1569
        %1586 = vst.msk [vmem:[%s356 + $0x68] sm:$0xff] %vm1156, %v1570
        %1587 = vst.msk [vmem:[%s356 + $0x70] sm:$0xff] %vm1156, %v1571
        %1588 = vst.msk [vmem:[%s356 + $0x78] sm:$0xff] %vm1156, %v1572
        %v1589 = vsel %vm1156, %v1557, 0.0
        %v1590 = vrot.slane %v1589, 4
        %v1591 = vadd.f32 %v1589, %v1590
        %v1592 = vrot.slane %v1591, 2
        %v1593 = vadd.f32 %v1591, %v1592
        %v1594 = vrot.slane %v1593, 1
        %v1595 = vadd.f32 %v1593, %v1594
        %v1596 = vsel %vm1156, %v1558, 0.0
        %v1597 = vrot.slane %v1596, 4
        %v1598 = vadd.f32 %v1596, %v1597
        %v1599 = vrot.slane %v1598, 2
        %v1600 = vadd.f32 %v1598, %v1599
        %v1601 = vrot.slane %v1600, 1
        %v1602 = vadd.f32 %v1600, %v1601
        %v1603 = vsel %vm1156, %v1559, 0.0
        %v1604 = vrot.slane %v1603, 4
        %v1605 = vadd.f32 %v1603, %v1604
        %v1606 = vrot.slane %v1605, 2
        %v1607 = vadd.f32 %v1605, %v1606
        %v1608 = vrot.slane %v1607, 1
        %v1609 = vadd.f32 %v1607, %v1608
        %v1610 = vsel %vm1156, %v1560, 0.0
        %v1611 = vrot.slane %v1610, 4
        %v1612 = vadd.f32 %v1610, %v1611
        %v1613 = vrot.slane %v1612, 2
        %v1614 = vadd.f32 %v1612, %v1613
        %v1615 = vrot.slane %v1614, 1
        %v1616 = vadd.f32 %v1614, %v1615
        %v1617 = vsel %vm1156, %v1561, 0.0
        %v1618 = vrot.slane %v1617, 4
        %v1619 = vadd.f32 %v1617, %v1618
        %v1620 = vrot.slane %v1619, 2
        %v1621 = vadd.f32 %v1619, %v1620
        %v1622 = vrot.slane %v1621, 1
        %v1623 = vadd.f32 %v1621, %v1622
        %v1624 = vsel %vm1156, %v1562, 0.0
        %v1625 = vrot.slane %v1624, 4
        %v1626 = vadd.f32 %v1624, %v1625
        %v1627 = vrot.slane %v1626, 2
        %v1628 = vadd.f32 %v1626, %v1627
        %v1629 = vrot.slane %v1628, 1
        %v1630 = vadd.f32 %v1628, %v1629
        %v1631 = vsel %vm1156, %v1563, 0.0
        %v1632 = vrot.slane %v1631, 4
        %v1633 = vadd.f32 %v1631, %v1632
        %v1634 = vrot.slane %v1633, 2
        %v1635 = vadd.f32 %v1633, %v1634
        %v1636 = vrot.slane %v1635, 1
        %v1637 = vadd.f32 %v1635, %v1636
        %v1638 = vsel %vm1156, %v1564, 0.0
        %v1639 = vrot.slane %v1638, 4
        %v1640 = vadd.f32 %v1638, %v1639
        %v1641 = vrot.slane %v1640, 2
        %v1642 = vadd.f32 %v1640, %v1641
        %v1643 = vrot.slane %v1642, 1
        %v1644 = vadd.f32 %v1642, %v1643
        %v1645 = vsel %vm1156, %v1565, 0.0
        %v1646 = vrot.slane %v1645, 4
        %v1647 = vadd.f32 %v1645, %v1646
        %v1648 = vrot.slane %v1647, 2
        %v1649 = vadd.f32 %v1647, %v1648
        %v1650 = vrot.slane %v1649, 1
        %v1651 = vadd.f32 %v1649, %v1650
        %v1652 = vsel %vm1156, %v1566, 0.0
        %v1653 = vrot.slane %v1652, 4
        %v1654 = vadd.f32 %v1652, %v1653
        %v1655 = vrot.slane %v1654, 2
        %v1656 = vadd.f32 %v1654, %v1655
        %v1657 = vrot.slane %v1656, 1
        %v1658 = vadd.f32 %v1656, %v1657
        %v1659 = vsel %vm1156, %v1567, 0.0
        %v1660 = vrot.slane %v1659, 4
        %v1661 = vadd.f32 %v1659, %v1660
        %v1662 = vrot.slane %v1661, 2
        %v1663 = vadd.f32 %v1661, %v1662
        %v1664 = vrot.slane %v1663, 1
        %v1665 = vadd.f32 %v1663, %v1664
        %v1666 = vsel %vm1156, %v1568, 0.0
        %v1667 = vrot.slane %v1666, 4
        %v1668 = vadd.f32 %v1666, %v1667
        %v1669 = vrot.slane %v1668, 2
        %v1670 = vadd.f32 %v1668, %v1669
        %v1671 = vrot.slane %v1670, 1
        %v1672 = vadd.f32 %v1670, %v1671
        %v1673 = vsel %vm1156, %v1569, 0.0
        %v1674 = vrot.slane %v1673, 4
        %v1675 = vadd.f32 %v1673, %v1674
        %v1676 = vrot.slane %v1675, 2
        %v1677 = vadd.f32 %v1675, %v1676
        %v1678 = vrot.slane %v1677, 1
        %v1679 = vadd.f32 %v1677, %v1678
        %v1680 = vsel %vm1156, %v1570, 0.0
        %v1681 = vrot.slane %v1680, 4
        %v1682 = vadd.f32 %v1680, %v1681
        %v1683 = vrot.slane %v1682, 2
        %v1684 = vadd.f32 %v1682, %v1683
        %v1685 = vrot.slane %v1684, 1
        %v1686 = vadd.f32 %v1684, %v1685
        %v1687 = vsel %vm1156, %v1571, 0.0
        %v1688 = vrot.slane %v1687, 4
        %v1689 = vadd.f32 %v1687, %v1688
        %v1690 = vrot.slane %v1689, 2
        %v1691 = vadd.f32 %v1689, %v1690
        %v1692 = vrot.slane %v1691, 1
        %v1693 = vadd.f32 %v1691, %v1692
        %v1694 = vsel %vm1156, %v1572, 0.0
        %v1695 = vrot.slane %v1694, 4
        %v1696 = vadd.f32 %v1694, %v1695
        %v1697 = vrot.slane %v1696, 2
        %v1698 = vadd.f32 %v1696, %v1697
        %v1699 = vrot.slane %v1698, 1
        %v1700 = vadd.f32 %v1698, %v1699
        %vm1717 = vcmask 1041409
        %v1718 = vsel %vm1717, %v1602, %v1595
        %vm1719 = vcmask 1042434
        %v1720 = vsel %vm1719, %v1609, %v1718
        %vm1721 = vcmask 1043459
        %v1722 = vsel %vm1721, %v1616, %v1720
        %vm1723 = vcmask 1044484
        %v1724 = vsel %vm1723, %v1623, %v1722
        %vm1725 = vcmask 1045509
        %v1726 = vsel %vm1725, %v1630, %v1724
        %vm1727 = vcmask 1046534
        %v1728 = vsel %vm1727, %v1637, %v1726
        %vm1729 = vcmask 1047559
        %v1730 = vsel %vm1729, %v1644, %v1728
        %v1731 = vsel %vm1717, %v1658, %v1651
        %v1732 = vsel %vm1719, %v1665, %v1731
        %v1733 = vsel %vm1721, %v1672, %v1732
        %v1734 = vsel %vm1723, %v1679, %v1733
        %v1735 = vsel %vm1725, %v1686, %v1734
        %v1736 = vsel %vm1727, %v1693, %v1735
        %v1737 = vsel %vm1729, %v1700, %v1736
        %1740 = vst.msk [vmem:[%s350] sm:$0xff] %vm1156, %v1730
        %1741 = vst.msk [vmem:[%s350 + $0x8] sm:$0xff] %vm1156, %v1737
        %s1742 = smul.u32 2, %s24
        %p1743 = scmp.lt.s32.totalorder %s1742, 3
        %s1744 = scalar_select %p1743, %s1742, 3
        %s1745 = smul.addr %s1744, 8
        %s1746 = scalar_lea.vmem %s7, %s1745
        %s1747 = smul.u32 16, %s24
        %p1748 = scmp.lt.s32.totalorder %s1747, 31
        %s1749 = scalar_select %p1748, %s1747, 31
        %s1750 = smul.addr %s1749, 8
        %s1751 = scalar_lea.vmem %s8, %s1750
        // Predicated region
        $region57: #{tpu_custom_call.1} parent=47 // pred_check
          %p1752 = pneg %p194
        $region58: #{tpu_custom_call.1} parent=47 // pred_check_branch
          %1754 = sbr.rel (%p1752) target = $region60
        $region59: #{tpu_custom_call.1} parent=47 // pred_region
          %s1755 = smul.u32 2, %s24
        $region60: #{tpu_custom_call.1} parent=47 // pred_fallthru
          _
        // Predicated region
        $region61: #{tpu_custom_call.1} parent=47 // pred_check
          %p1756 = pneg %p220
        $region62: #{tpu_custom_call.1} parent=47 // pred_check_branch
          %1758 = sbr.rel (%p1756) target = $region64
        $region63: #{tpu_custom_call.1} parent=47 // pred_region
          %s1759 = smul.u32 16, %s24
        $region64: #{tpu_custom_call.1} parent=47 // pred_fallthru
          _
      $region48: #{tpu_custom_call.1} parent=5 // pred_fallthru
        _
      %p1760 = scmp.le.s32.totalorder 2, %s19
      // Predicated region
      $region65: #{tpu_custom_call.1} parent=5 // pred_check
        %p1761 = pneg %p1760
      $region66: #{tpu_custom_call.1} parent=5 // pred_check_branch
        %1763 = sbr.rel (%p1761) target = $region68
      $region67: #{tpu_custom_call.1} parent=5 // pred_region
        %s1764 = ssub.s32 %s19, 2
        // Predicated region
        $region69: #{tpu_custom_call.1} parent=67 // pred_check
          %p1765 = pneg %p200
        $region70: #{tpu_custom_call.1} parent=67 // pred_check_branch
          %1767 = sbr.rel (%p1765) target = $region72
        $region71: #{tpu_custom_call.1} parent=67 // pred_region
          %s1768 = smul.u32 2, %s25
          %p1769 = scmp.lt.s32.totalorder %s1768, 3
          %s1770 = scalar_select %p1769, %s1768, 3
          %s1771 = smul.addr %s1770, 8
          %s1772 = scalar_lea.vmem %s7, %s1771
        $region72: #{tpu_custom_call.1} parent=67 // pred_fallthru
          _
        // Predicated region
        $region73: #{tpu_custom_call.1} parent=67 // pred_check
          %p1773 = pneg %p226
        $region74: #{tpu_custom_call.1} parent=67 // pred_check_branch
          %1775 = sbr.rel (%p1773) target = $region76
        $region75: #{tpu_custom_call.1} parent=67 // pred_region
          %s1776 = smul.u32 16, %s25
          %p1777 = scmp.lt.s32.totalorder %s1776, 31
          %s1778 = scalar_select %p1777, %s1776, 31
          %s1779 = smul.addr %s1778, 8
          %s1780 = scalar_lea.vmem %s8, %s1779
        $region76: #{tpu_custom_call.1} parent=67 // pred_fallthru
          _
      $region68: #{tpu_custom_call.1} parent=5 // pred_fallthru
        _
    $region6: #{tpu_custom_call.1} parent=1 // loop_footer
      %s23 = sadd.s32 1, %s19
    $region7: #{tpu_custom_call.1} parent=1 // loop_footer_branch
      %18 = sbr.rel target = $region3
    $region8: #{tpu_custom_call.1} parent=1 // loop_exit
      _
    %1781 = vsyncpa [#allocation3], 1
    %s1782 = scalar_lea.sflag [#allocation3], 1
    %1783 = vsyncpa %s1782, 1
    %1784 = vsyncpa [#allocation5], 1

// kernel: tpu_custom_call.1
$region0: #{tpu_custom_call.1}
  #allocation0 [shape = 'u32[]', space=smem, size = 0x4, offset = 0x4, fixed_abs, tag = 'smem constant byte address 0x4 - core index']
  #allocation1 [shape = 'u32[144,128]{1,0:T(1,128)}', space=vmem, size = 0x12000, scoped, tag = 'internal scratch']
  %s0 = inlined_call_operand.hbm [shape: bf16[256,256], index: 0, kind: input, shape index: {}]
  %s1 = inlined_call_operand.hbm [shape: bf16[256,256], index: 1, kind: input, shape index: {}]
  %s2 = inlined_call_operand.vmem [shape: f32[1,256], index: 2, kind: input, shape index: {}]
  %s3 = inlined_call_operand.vmem [shape: bf16[128,16], index: 3, kind: input, shape index: {}]
  %s4 = inlined_call_operand.vmem [shape: f32[1,16], index: 4, kind: input, shape index: {}]
  %s5 = inlined_call_operand.vmem [shape: bf16[128,16], index: 5, kind: input, shape index: {}]
  %s6 = inlined_call_operand.vmem [shape: f32[1,16], index: 6, kind: input, shape index: {}]
  %s7 = inlined_call_operand.vmem [shape: f32[32,16], index: 7, kind: output, shape index: {0}]
  %s8 = inlined_call_operand.vmem [shape: f32[32,8,16], index: 8, kind: output, shape index: {1}]
  %9 = xla_tuple %s7, %s8
  %s10 = sld [smem:[#allocation0]]
  $region77: #{tpu_custom_call.1} parent=0
    _
  %s12 = ssub.s32 1, %s10
  %s13 = scalar_select 0, %s12, %s10
  $region1: #{tpu_custom_call.1} parent=0
    #allocation2 [shape = 'u8[131072]{0}', space=vmem, size = 0x20000, scoped, tag = 'input window, operand 0']
    #allocation3 [shape = 's32[2]{0}', space=sflag, size = 0x8, scoped, tag = 'scoped memory for tpu_custom_call.1']
    #allocation4 [shape = 'u8[131072]{0}', space=vmem, size = 0x20000, scoped, tag = 'input window, operand 1, single buffered']
    #allocation5 [shape = 's32[1]{0}', space=sflag, size = 0x4, scoped, tag = 'scoped memory for tpu_custom_call.1']
    %14 = vsyncpa [#allocation3], 0
    %s15 = scalar_lea.sflag [#allocation3], 1
    %16 = vsyncpa %s15, 0
    %17 = vsyncpa [#allocation5], 0
    loop: start=0, step=1, limit=4
    $region2: #{tpu_custom_call.1} parent=1 // loop_pre_header
      _
    $region3: #{tpu_custom_call.1} parent=1 // loop_header
      %s19 = sphi 0, %s23
      %p20 = scmp.ge.s32.totalorder %s19, 4
      %s29 = sphi 0, %s31
      %s32 = sphi 0, %s29
      %s33 = sphi 0, %s32
      %s49 = sphi 0, %s33
      %s53 = sphi 0, %s53
      %s55 = sphi 0, %s53
      %s56 = sphi 0, %s55
      %s70 = sphi 0, %s56
      %s74 = sphi 0, %s74
      %s76 = sphi 0, %s74
      %s77 = sphi 0, %s76
      %s91 = sphi 0, %s77
      %s95 = sphi 0, %s95
      %s97 = sphi 0, %s95
      %s98 = sphi 0, %s97
      %s112 = sphi 0, %s98
      %s116 = sphi 0, %s116
      %s118 = sphi 0, %s116
      %s119 = sphi 0, %s118
      %s133 = sphi 0, %s119
      %s137 = sphi 0, %s137
      %s139 = sphi 0, %s137
      %s140 = sphi 0, %s139
      %s154 = sphi 0, %s140
      %s158 = sphi 0, %s158
      %s160 = sphi 0, %s158
      %s161 = sphi 0, %s160
      %s175 = sphi 0, %s161
      %s181 = sphi 0, %s183
      %s184 = sphi 0, %s181
      %s185 = sphi 0, %s184
      %s201 = sphi 0, %s185
      %s207 = sphi 0, %s209
      %s210 = sphi 0, %s207
      %s211 = sphi 0, %s210
      %s227 = sphi 0, %s211
    $region4: #{tpu_custom_call.1} parent=1 // loop_header_branch
      %22 = sbr.rel (%p20) target = $region8
    $region5: #{tpu_custom_call.1} parent=1 // loop_body
      %s24 = ssub.s32 %s19, 1
      %s25 = ssub.s32 %s19, 2
      %s26 = sadd.s32 %s19, 1
      %s27 = ssub.s32 %s19, %s26
      %p28 = scmp.eq.s32.totalorder %s27, 0
      %s30 = sadd.s32 %s29, 1
      %s31 = scalar_select %p28, %s29, %s30
      %p34 = pneg %p28
      %p35 = scmp.eq.s32.totalorder %s19, 1
      %p36 = por %p34, %p35
      %p37 = scmp.ne.s32.totalorder %s29, %s32
      %p38 = scmp.eq.s32.totalorder %s19, 0
      %p39 = por %p37, %p38
      %p40 = scmp.ne.s32.totalorder %s29, %s32
      %p41 = scmp.eq.s32.totalorder %s24, 1
      %p42 = por %p40, %p41
      %p43 = scmp.ne.s32.totalorder %s32, %s33
      %p44 = scmp.eq.s32.totalorder %s24, 0
      %p45 = por %p43, %p44
      %p46 = scmp.ne.s32.totalorder %s32, %s33
      %p47 = scmp.eq.s32.totalorder %s25, 1
      %p48 = por %p46, %p47
      %p50 = scmp.ne.s32.totalorder %s33, %s49
      %p51 = scmp.eq.s32.totalorder %s25, 0
      %p52 = por %p50, %p51
      %s54 = sadd.s32 %s53, 1
      %p57 = scmp.eq.s32.totalorder %s19, 1
      %p58 = scmp.ne.s32.totalorder %s53, %s55
      %p59 = scmp.eq.s32.totalorder %s19, 0
      %p60 = por %p58, %p59
      %p61 = scmp.ne.s32.totalorder %s53, %s55
      %p62 = scmp.eq.s32.totalorder %s24, 1
      %p63 = por %p61, %p62
      %p64 = scmp.ne.s32.totalorder %s55, %s56
      %p65 = scmp.eq.s32.totalorder %s24, 0
      %p66 = por %p64, %p65
      %p67 = scmp.ne.s32.totalorder %s55, %s56
      %p68 = scmp.eq.s32.totalorder %s25, 1
      %p69 = por %p67, %p68
      %p71 = scmp.ne.s32.totalorder %s56, %s70
      %p72 = scmp.eq.s32.totalorder %s25, 0
      %p73 = por %p71, %p72
      %s75 = sadd.s32 %s74, 1
      %p78 = scmp.eq.s32.totalorder %s19, 1
      %p79 = scmp.ne.s32.totalorder %s74, %s76
      %p80 = scmp.eq.s32.totalorder %s19, 0
      %p81 = por %p79, %p80
      %p82 = scmp.ne.s32.totalorder %s74, %s76
      %p83 = scmp.eq.s32.totalorder %s24, 1
      %p84 = por %p82, %p83
      %p85 = scmp.ne.s32.totalorder %s76, %s77
      %p86 = scmp.eq.s32.totalorder %s24, 0
      %p87 = por %p85, %p86
      %p88 = scmp.ne.s32.totalorder %s76, %s77
      %p89 = scmp.eq.s32.totalorder %s25, 1
      %p90 = por %p88, %p89
      %p92 = scmp.ne.s32.totalorder %s77, %s91
      %p93 = scmp.eq.s32.totalorder %s25, 0
      %p94 = por %p92, %p93
      %s96 = sadd.s32 %s95, 1
      %p99 = scmp.eq.s32.totalorder %s19, 1
      %p100 = scmp.ne.s32.totalorder %s95, %s97
      %p101 = scmp.eq.s32.totalorder %s19, 0
      %p102 = por %p100, %p101
      %p103 = scmp.ne.s32.totalorder %s95, %s97
      %p104 = scmp.eq.s32.totalorder %s24, 1
      %p105 = por %p103, %p104
      %p106 = scmp.ne.s32.totalorder %s97, %s98
      %p107 = scmp.eq.s32.totalorder %s24, 0
      %p108 = por %p106, %p107
      %p109 = scmp.ne.s32.totalorder %s97, %s98
      %p110 = scmp.eq.s32.totalorder %s25, 1
      %p111 = por %p109, %p110
      %p113 = scmp.ne.s32.totalorder %s98, %s112
      %p114 = scmp.eq.s32.totalorder %s25, 0
      %p115 = por %p113, %p114
      %s117 = sadd.s32 %s116, 1
      %p120 = scmp.eq.s32.totalorder %s19, 1
      %p121 = scmp.ne.s32.totalorder %s116, %s118
      %p122 = scmp.eq.s32.totalorder %s19, 0
      %p123 = por %p121, %p122
      %p124 = scmp.ne.s32.totalorder %s116, %s118
      %p125 = scmp.eq.s32.totalorder %s24, 1
      %p126 = por %p124, %p125
      %p127 = scmp.ne.s32.totalorder %s118, %s119
      %p128 = scmp.eq.s32.totalorder %s24, 0
      %p129 = por %p127, %p128
      %p130 = scmp.ne.s32.totalorder %s118, %s119
      %p131 = scmp.eq.s32.totalorder %s25, 1
      %p132 = por %p130, %p131
      %p134 = scmp.ne.s32.totalorder %s119, %s133
      %p135 = scmp.eq.s32.totalorder %s25, 0
      %p136 = por %p134, %p135
      %s138 = sadd.s32 %s137, 1
      %p141 = scmp.eq.s32.totalorder %s19, 1
      %p142 = scmp.ne.s32.totalorder %s137, %s139
      %p143 = scmp.eq.s32.totalorder %s19, 0
      %p144 = por %p142, %p143
      %p145 = scmp.ne.s32.totalorder %s137, %s139
      %p146 = scmp.eq.s32.totalorder %s24, 1
      %p147 = por %p145, %p146
      %p148 = scmp.ne.s32.totalorder %s139, %s140
      %p149 = scmp.eq.s32.totalorder %s24, 0
      %p150 = por %p148, %p149
      %p151 = scmp.ne.s32.totalorder %s139, %s140
      %p152 = scmp.eq.s32.totalorder %s25, 1
      %p153 = por %p151, %p152
      %p155 = scmp.ne.s32.totalorder %s140, %s154
      %p156 = scmp.eq.s32.totalorder %s25, 0
      %p157 = por %p155, %p156
      %s159 = sadd.s32 %s158, 1
      %p162 = scmp.eq.s32.totalorder %s19, 1
      %p163 = scmp.ne.s32.totalorder %s158, %s160
      %p164 = scmp.eq.s32.totalorder %s19, 0
      %p165 = por %p163, %p164
      %p166 = scmp.ne.s32.totalorder %s158, %s160
      %p167 = scmp.eq.s32.totalorder %s24, 1
      %p168 = por %p166, %p167
      %p169 = scmp.ne.s32.totalorder %s160, %s161
      %p170 = scmp.eq.s32.totalorder %s24, 0
      %p171 = por %p169, %p170
      %p172 = scmp.ne.s32.totalorder %s160, %s161
      %p173 = scmp.eq.s32.totalorder %s25, 1
      %p174 = por %p172, %p173
      %p176 = scmp.ne.s32.totalorder %s161, %s175
      %p177 = scmp.eq.s32.totalorder %s25, 0
      %p178 = por %p176, %p177
      %s179 = ssub.s32 %s19, %s26
      %p180 = scmp.eq.s32.totalorder %s179, 0
      %s182 = sadd.s32 %s181, 1
      %s183 = scalar_select %p180, %s181, %s182
      %p186 = pneg %p180
      %p187 = scmp.eq.s32.totalorder %s19, 1
      %p188 = por %p186, %p187
      %p189 = scmp.ne.s32.totalorder %s181, %s184
      %p190 = scmp.eq.s32.totalorder %s19, 0
      %p191 = por %p189, %p190
      %p192 = scmp.ne.s32.totalorder %s181, %s184
      %p193 = scmp.eq.s32.totalorder %s24, 1
      %p194 = por %p192, %p193
      %p195 = scmp.ne.s32.totalorder %s184, %s185
      %p196 = scmp.eq.s32.totalorder %s24, 0
      %p197 = por %p195, %p196
      %p198 = scmp.ne.s32.totalorder %s184, %s185
      %p199 = scmp.eq.s32.totalorder %s25, 1
      %p200 = por %p198, %p199
      %p202 = scmp.ne.s32.totalorder %s185, %s201
      %p203 = scmp.eq.s32.totalorder %s25, 0
      %p204 = por %p202, %p203
      %s205 = ssub.s32 %s19, %s26
      %p206 = scmp.eq.s32.totalorder %s205, 0
      %s208 = sadd.s32 %s207, 1
      %s209 = scalar_select %p206, %s207, %s208
      %p212 = pneg %p206
      %p213 = scmp.eq.s32.totalorder %s19, 1
      %p214 = por %p212, %p213
      %p215 = scmp.ne.s32.totalorder %s207, %s210
      %p216 = scmp.eq.s32.totalorder %s19, 0
      %p217 = por %p215, %p216
      %p218 = scmp.ne.s32.totalorder %s207, %s210
      %p219 = scmp.eq.s32.totalorder %s24, 1
      %p220 = por %p218, %p219
      %p221 = scmp.ne.s32.totalorder %s210, %s211
      %p222 = scmp.eq.s32.totalorder %s24, 0
      %p223 = por %p221, %p222
      %p224 = scmp.ne.s32.totalorder %s210, %s211
      %p225 = scmp.eq.s32.totalorder %s25, 1
      %p226 = por %p224, %p225
      %p228 = scmp.ne.s32.totalorder %s211, %s227
      %p229 = scmp.eq.s32.totalorder %s25, 0
      %p230 = por %p228, %p229
      %p231 = scmp.le.s32.totalorder 1, %s19
      %p232 = scmp.lt.s32.totalorder %s19, 3
      %p233 = pnand %p231, %p232
      %p234 = pneg %p233
      // Predicated region
      $region9: #{tpu_custom_call.1} parent=5 // pred_check
        _
      $region10: #{tpu_custom_call.1} parent=5 // pred_check_branch
        %236 = sbr.rel (%p233) target = $region12
      $region11: #{tpu_custom_call.1} parent=5 // pred_region
        %s237 = ssub.s32 %s19, 1
        // Predicated region
        $region13: #{tpu_custom_call.1} parent=11 // pred_check
          %p238 = pneg %p66
        $region14: #{tpu_custom_call.1} parent=11 // pred_check_branch
          %240 = sbr.rel (%p238) target = $region16
        $region15: #{tpu_custom_call.1} parent=11 // pred_region
          %s242 = ssub.s32 4096, 4096
          %243 = vsyncadd [#allocation5], %s242
          %s244 = sshll.u32 [#allocation4], 4
          %s245 = int_to_ptr.vmem [resolvable:$true] %s244
          %250 = dma.hbm_to_vmem [thread:$0]  %s1, 4096, %s245, [#allocation5], 128, 128, 8
        $region16: #{tpu_custom_call.1} parent=11 // pred_fallthru
          _
        // Predicated region
        $region17: #{tpu_custom_call.1} parent=11 // pred_check
          %p251 = pneg %p87
        $region18: #{tpu_custom_call.1} parent=11 // pred_check_branch
          %253 = sbr.rel (%p251) target = $region20
        $region19: #{tpu_custom_call.1} parent=11 // pred_region
          _
        $region20: #{tpu_custom_call.1} parent=11 // pred_fallthru
          _
        // Predicated region
        $region21: #{tpu_custom_call.1} parent=11 // pred_check
          %p254 = pneg %p108
        $region22: #{tpu_custom_call.1} parent=11 // pred_check_branch
          %256 = sbr.rel (%p254) target = $region24
        $region23: #{tpu_custom_call.1} parent=11 // pred_region
          _
        $region24: #{tpu_custom_call.1} parent=11 // pred_fallthru
          _
        // Predicated region
        $region25: #{tpu_custom_call.1} parent=11 // pred_check
          %p257 = pneg %p129
        $region26: #{tpu_custom_call.1} parent=11 // pred_check_branch
          %259 = sbr.rel (%p257) target = $region28
        $region27: #{tpu_custom_call.1} parent=11 // pred_region
          _
        $region28: #{tpu_custom_call.1} parent=11 // pred_fallthru
          _
        // Predicated region
        $region29: #{tpu_custom_call.1} parent=11 // pred_check
          %p260 = pneg %p150
        $region30: #{tpu_custom_call.1} parent=11 // pred_check_branch
          %262 = sbr.rel (%p260) target = $region32
        $region31: #{tpu_custom_call.1} parent=11 // pred_region
          _
        $region32: #{tpu_custom_call.1} parent=11 // pred_fallthru
          _
        // Predicated region
        $region33: #{tpu_custom_call.1} parent=11 // pred_check
          %p263 = pneg %p171
        $region34: #{tpu_custom_call.1} parent=11 // pred_check_branch
          %265 = sbr.rel (%p263) target = $region36
        $region35: #{tpu_custom_call.1} parent=11 // pred_region
          _
        $region36: #{tpu_custom_call.1} parent=11 // pred_fallthru
          _
      $region12: #{tpu_custom_call.1} parent=5 // pred_fallthru
        _
      %p266 = scmp.lt.s32.totalorder %s19, 2
      // Predicated region
      $region37: #{tpu_custom_call.1} parent=5 // pred_check
        %p267 = pneg %p266
      $region38: #{tpu_custom_call.1} parent=5 // pred_check_branch
        %269 = sbr.rel (%p267) target = $region40
      $region39: #{tpu_custom_call.1} parent=5 // pred_region
        // Predicated region
        $region41: #{tpu_custom_call.1} parent=39 // pred_check
          %p270 = pneg %p39
        $region42: #{tpu_custom_call.1} parent=39 // pred_check_branch
          %272 = sbr.rel (%p270) target = $region44
        $region43: #{tpu_custom_call.1} parent=39 // pred_region
          %s273 = sand.u32 %s29, 1
          %s274 = scalar_lea.sflag [#allocation3], %s273
          %s275 = sand.u32 %s29, 1
          %s276 = smul.addr %s275, 128
          %s277 = scalar_lea.vmem [#allocation2], %s276
          %s278 = smul.u32 16, %s19
          %s280 = ssub.s32 2048, 2048
          %281 = vsyncadd %s274, %s280
          %s282 = smul.addr %s278, 2
          %s283 = smul.addr %s282, 64
          %s284 = scalar_lea.hbm %s0, %s283
          %s285 = sshll.u32 %s277, 4
          %s286 = int_to_ptr.vmem [resolvable:$true] %s285
          %291 = dma.hbm_to_vmem [thread:$0]  %s284, 2048, %s286, %s274, 128, 128, 8
        $region44: #{tpu_custom_call.1} parent=39 // pred_fallthru
          _
      $region40: #{tpu_custom_call.1} parent=5 // pred_fallthru
        _
      %p292 = scmp.le.s32.totalorder 1, %s19
      %p293 = scmp.lt.s32.totalorder %s19, 3
      %p294 = pnand %p292, %p293
      %p295 = pneg %p294
      // Predicated region
      $region45: #{tpu_custom_call.1} parent=5 // pred_check
        _
      $region46: #{tpu_custom_call.1} parent=5 // pred_check_branch
        %297 = sbr.rel (%p294) target = $region48
      $region47: #{tpu_custom_call.1} parent=5 // pred_region
        %s298 = ssub.s32 %s19, 1
        %s299 = sand.u32 %s32, 1
        %s300 = scalar_lea.sflag [#allocation3], %s299
        %s301 = sand.u32 %s32, 1
        %s302 = smul.addr %s301, 128
        %s303 = scalar_lea.vmem [#allocation2], %s302
        // Predicated region
        $region49: #{tpu_custom_call.1} parent=47 // pred_check
          %p304 = pneg %p45
        $region50: #{tpu_custom_call.1} parent=47 // pred_check_branch
          %306 = sbr.rel (%p304) target = $region52
        $region51: #{tpu_custom_call.1} parent=47 // pred_region
          %307 = dma.done %s300, 2048
        $region52: #{tpu_custom_call.1} parent=47 // pred_fallthru
          _
        // Predicated region
        $region53: #{tpu_custom_call.1} parent=47 // pred_check
          %p308 = pneg %p66
        $region54: #{tpu_custom_call.1} parent=47 // pred_check_branch
          %310 = sbr.rel (%p308) target = $region56
        $region55: #{tpu_custom_call.1} parent=47 // pred_region
          %311 = dma.done [#allocation5], 4096
        $region56: #{tpu_custom_call.1} parent=47 // pred_fallthru
          _
        %s312 = sand.u32 %s32, 1
        %s313 = scalar_lea.sflag [#allocation3], %s312
        %s314 = sand.u32 %s32, 1
        %s315 = smul.addr %s314, 128
        %s316 = scalar_lea.vmem [#allocation2], %s315
        %p317 = pneg %p45
        %p318 = pneg %p42
        %p319 = pneg %p66
        %p320 = pneg %p63
        %p321 = pneg %p87
        %p322 = pneg %p84
        %p323 = pneg %p108
        %p324 = pneg %p105
        %p325 = pneg %p129
        %p326 = pneg %p126
        %p327 = pneg %p150
        %p328 = pneg %p147
        %p329 = pneg %p171
        %p330 = pneg %p168
        %p331 = pneg %p197
        %p332 = pneg %p194
        %s333 = smul.u32 2, %s24
        %p334 = scmp.lt.s32.totalorder %s333, 3
        %s335 = scalar_select %p334, %s333, 3
        %s336 = smul.addr %s335, 8
        %s337 = scalar_lea.vmem %s7, %s336
        %p338 = pneg %p223
        %p339 = pneg %p220
        %s340 = smul.u32 16, %s24
        %p341 = scmp.lt.s32.totalorder %s340, 31
        %s342 = scalar_select %p341, %s340, 31
        %s343 = smul.addr %s342, 8
        %s344 = scalar_lea.vmem %s8, %s343
        %s345 = smul.u32 16, %s24
        %s346 = smul.u32 2, %s24
        %p347 = scmp.lt.s32.totalorder %s346, 3
        %s348 = scalar_select %p347, %s346, 3
        %s349 = smul.addr %s348, 8
        %s350 = scalar_lea.vmem %s7, %s349
        %s351 = smul.u32 2, %s24
        %s352 = smul.u32 16, %s24
        %p353 = scmp.lt.s32.totalorder %s352, 31
        %s354 = scalar_select %p353, %s352, 31
        %s355 = smul.addr %s354, 8
        %s356 = scalar_lea.vmem %s8, %s355
        %s357 = smul.u32 16, %s24
        %v359 = vld [vmem:[%s303] sm:$0xff]
        %v360 = vld [vmem:[%s303 + $0x8] sm:$0xff]
        %v361 = vld [vmem:[%s303 + $0x10] sm:$0xff]
        %v362 = vld [vmem:[%s303 + $0x18] sm:$0xff]
        %v363 = vld [vmem:[%s303 + $0x20] sm:$0xff]
        %v364 = vld [vmem:[%s303 + $0x28] sm:$0xff]
        %v365 = vld [vmem:[%s303 + $0x30] sm:$0xff]
        %v366 = vld [vmem:[%s303 + $0x38] sm:$0xff]
        %v367 = vld [vmem:[%s303 + $0x40] sm:$0xff]
        %v368 = vld [vmem:[%s303 + $0x48] sm:$0xff]
        %v369 = vld [vmem:[%s303 + $0x50] sm:$0xff]
        %v370 = vld [vmem:[%s303 + $0x58] sm:$0xff]
        %v371 = vld [vmem:[%s303 + $0x60] sm:$0xff]
        %v372 = vld [vmem:[%s303 + $0x68] sm:$0xff]
        %v373 = vld [vmem:[%s303 + $0x70] sm:$0xff]
        %v374 = vld [vmem:[%s303 + $0x78] sm:$0xff]
        %v375 = vld [vmem:[#allocation4] sm:$0xff]
        %v376 = vld [vmem:[#allocation4 + $0x8] sm:$0xff]
        %v377 = vld [vmem:[#allocation4 + $0x10] sm:$0xff]
        %v378 = vld [vmem:[#allocation4 + $0x18] sm:$0xff]
        %v379 = vld [vmem:[#allocation4 + $0x20] sm:$0xff]
        %v380 = vld [vmem:[#allocation4 + $0x28] sm:$0xff]
        %v381 = vld [vmem:[#allocation4 + $0x30] sm:$0xff]
        %v382 = vld [vmem:[#allocation4 + $0x38] sm:$0xff]
        %v383 = vld [vmem:[#allocation4 + $0x40] sm:$0xff]
        %v384 = vld [vmem:[#allocation4 + $0x48] sm:$0xff]
        %v385 = vld [vmem:[#allocation4 + $0x50] sm:$0xff]
        %v386 = vld [vmem:[#allocation4 + $0x58] sm:$0xff]
        %v387 = vld [vmem:[#allocation4 + $0x60] sm:$0xff]
        %v388 = vld [vmem:[#allocation4 + $0x68] sm:$0xff]
        %v389 = vld [vmem:[#allocation4 + $0x70] sm:$0xff]
        %v390 = vld [vmem:[#allocation4 + $0x78] sm:$0xff]
        %v391 = vld [vmem:[#allocation4 + $0x80] sm:$0xff]
        %v392 = vld [vmem:[#allocation4 + $0x88] sm:$0xff]
        %v393 = vld [vmem:[#allocation4 + $0x90] sm:$0xff]
        %v394 = vld [vmem:[#allocation4 + $0x98] sm:$0xff]
        %v395 = vld [vmem:[#allocation4 + $0xa0] sm:$0xff]
        %v396 = vld [vmem:[#allocation4 + $0xa8] sm:$0xff]
        %v397 = vld [vmem:[#allocation4 + $0xb0] sm:$0xff]
        %v398 = vld [vmem:[#allocation4 + $0xb8] sm:$0xff]
        %v399 = vld [vmem:[#allocation4 + $0xc0] sm:$0xff]
        %v400 = vld [vmem:[#allocation4 + $0xc8] sm:$0xff]
        %v401 = vld [vmem:[#allocation4 + $0xd0] sm:$0xff]
        %v402 = vld [vmem:[#allocation4 + $0xd8] sm:$0xff]
        %v403 = vld [vmem:[#allocation4 + $0xe0] sm:$0xff]
        %v404 = vld [vmem:[#allocation4 + $0xe8] sm:$0xff]
        %v405 = vld [vmem:[#allocation4 + $0xf0] sm:$0xff]
        %v406 = vld [vmem:[#allocation4 + $0xf8] sm:$0xff]
        %v407 = vld [vmem:[%s2] sm:$0x3]
        %v409 = vlaneseq
        %v410 = vshrl.u32 %v409, 7
        %v411 = vsub.s32 0, %v410
        %v412 = vrot.slane %v407, %v411
        %v413 = vlaneseq
        %v414 = vshrl.u32 %v413, 7
        %v415 = vsub.s32 1, %v414
        %v416 = vrot.slane %v407, %v415
        %v435 = vunpack.c.l.b16 %v359
        %v436 = vunpack.c.h.b16 %v359
        %v437 = vunpack.c.l.b16 %v360
        %v438 = vunpack.c.h.b16 %v360
        %v439 = vunpack.c.l.b16 %v361
        %v440 = vunpack.c.h.b16 %v361
        %v441 = vunpack.c.l.b16 %v362
        %v442 = vunpack.c.h.b16 %v362
        %v443 = vunpack.c.l.b16 %v363
        %v444 = vunpack.c.h.b16 %v363
        %v445 = vunpack.c.l.b16 %v364
        %v446 = vunpack.c.h.b16 %v364
        %v447 = vunpack.c.l.b16 %v365
        %v448 = vunpack.c.h.b16 %v365
        %v449 = vunpack.c.l.b16 %v366
        %v450 = vunpack.c.h.b16 %v366
        %v451 = vunpack.c.l.b16 %v367
        %v452 = vunpack.c.h.b16 %v367
        %v453 = vunpack.c.l.b16 %v368
        %v454 = vunpack.c.h.b16 %v368
        %v455 = vunpack.c.l.b16 %v369
        %v456 = vunpack.c.h.b16 %v369
        %v457 = vunpack.c.l.b16 %v370
        %v458 = vunpack.c.h.b16 %v370
        %v459 = vunpack.c.l.b16 %v371
        %v460 = vunpack.c.h.b16 %v371
        %v461 = vunpack.c.l.b16 %v372
        %v462 = vunpack.c.h.b16 %v372
        %v463 = vunpack.c.l.b16 %v373
        %v464 = vunpack.c.h.b16 %v373
        %v465 = vunpack.c.l.b16 %v374
        %v466 = vunpack.c.h.b16 %v374
        %v467 = vpack.c.b16 %v437, %v435
        %v468 = vpack.c.b16 %v438, %v436
        %v469 = vpack.c.b16 %v441, %v439
        %v470 = vpack.c.b16 %v442, %v440
        %v471 = vpack.c.b16 %v445, %v443
        %v472 = vpack.c.b16 %v446, %v444
        %v473 = vpack.c.b16 %v449, %v447
        %v474 = vpack.c.b16 %v450, %v448
        %v475 = vpack.c.b16 %v453, %v451
        %v476 = vpack.c.b16 %v454, %v452
        %v477 = vpack.c.b16 %v457, %v455
        %v478 = vpack.c.b16 %v458, %v456
        %v479 = vpack.c.b16 %v461, %v459
        %v480 = vpack.c.b16 %v462, %v460
        %v481 = vpack.c.b16 %v465, %v463
        %v482 = vpack.c.b16 %v466, %v464
        %v531 = vunpack.c.l.b16 %v375
        %v532 = vunpack.c.h.b16 %v375
        %v533 = vunpack.c.l.b16 %v376
        %v534 = vunpack.c.h.b16 %v376
        %v535 = vunpack.c.l.b16 %v377
        %v536 = vunpack.c.h.b16 %v377
        %v537 = vunpack.c.l.b16 %v378
        %v538 = vunpack.c.h.b16 %v378
        %v539 = vunpack.c.l.b16 %v379
        %v540 = vunpack.c.h.b16 %v379
        %v541 = vunpack.c.l.b16 %v380
        %v542 = vunpack.c.h.b16 %v380
        %v543 = vunpack.c.l.b16 %v381
        %v544 = vunpack.c.h.b16 %v381
        %v545 = vunpack.c.l.b16 %v382
        %v546 = vunpack.c.h.b16 %v382
        %v547 = vunpack.c.l.b16 %v383
        %v548 = vunpack.c.h.b16 %v383
        %v549 = vunpack.c.l.b16 %v384
        %v550 = vunpack.c.h.b16 %v384
        %v551 = vunpack.c.l.b16 %v385
        %v552 = vunpack.c.h.b16 %v385
        %v553 = vunpack.c.l.b16 %v386
        %v554 = vunpack.c.h.b16 %v386
        %v555 = vunpack.c.l.b16 %v387
        %v556 = vunpack.c.h.b16 %v387
        %v557 = vunpack.c.l.b16 %v388
        %v558 = vunpack.c.h.b16 %v388
        %v559 = vunpack.c.l.b16 %v389
        %v560 = vunpack.c.h.b16 %v389
        %v561 = vunpack.c.l.b16 %v390
        %v562 = vunpack.c.h.b16 %v390
        %v563 = vunpack.c.l.b16 %v391
        %v564 = vunpack.c.h.b16 %v391
        %v565 = vunpack.c.l.b16 %v392
        %v566 = vunpack.c.h.b16 %v392
        %v567 = vunpack.c.l.b16 %v393
        %v568 = vunpack.c.h.b16 %v393
        %v569 = vunpack.c.l.b16 %v394
        %v570 = vunpack.c.h.b16 %v394
        %v571 = vunpack.c.l.b16 %v395
        %v572 = vunpack.c.h.b16 %v395
        %v573 = vunpack.c.l.b16 %v396
        %v574 = vunpack.c.h.b16 %v396
        %v575 = vunpack.c.l.b16 %v397
        %v576 = vunpack.c.h.b16 %v397
        %v577 = vunpack.c.l.b16 %v398
        %v578 = vunpack.c.h.b16 %v398
        %v579 = vunpack.c.l.b16 %v399
        %v580 = vunpack.c.h.b16 %v399
        %v581 = vunpack.c.l.b16 %v400
        %v582 = vunpack.c.h.b16 %v400
        %v583 = vunpack.c.l.b16 %v401
        %v584 = vunpack.c.h.b16 %v401
        %v585 = vunpack.c.l.b16 %v402
        %v586 = vunpack.c.h.b16 %v402
        %v587 = vunpack.c.l.b16 %v403
        %v588 = vunpack.c.h.b16 %v403
        %v589 = vunpack.c.l.b16 %v404
        %v590 = vunpack.c.h.b16 %v404
        %v591 = vunpack.c.l.b16 %v405
        %v592 = vunpack.c.h.b16 %v405
        %v593 = vunpack.c.l.b16 %v406
        %v594 = vunpack.c.h.b16 %v406
        %v595 = vpack.c.b16 %v533, %v531
        %v596 = vpack.c.b16 %v534, %v532
        %v597 = vpack.c.b16 %v537, %v535
        %v598 = vpack.c.b16 %v538, %v536
        %v599 = vpack.c.b16 %v541, %v539
        %v600 = vpack.c.b16 %v542, %v540
        %v601 = vpack.c.b16 %v545, %v543
        %v602 = vpack.c.b16 %v546, %v544
        %v603 = vpack.c.b16 %v549, %v547
        %v604 = vpack.c.b16 %v550, %v548
        %v605 = vpack.c.b16 %v553, %v551
        %v606 = vpack.c.b16 %v554, %v552
        %v607 = vpack.c.b16 %v557, %v555
        %v608 = vpack.c.b16 %v558, %v556
        %v609 = vpack.c.b16 %v561, %v559
        %v610 = vpack.c.b16 %v562, %v560
        %v611 = vpack.c.b16 %v565, %v563
        %v612 = vpack.c.b16 %v566, %v564
        %v613 = vpack.c.b16 %v569, %v567
        %v614 = vpack.c.b16 %v570, %v568
        %v615 = vpack.c.b16 %v573, %v571
        %v616 = vpack.c.b16 %v574, %v572
        %v617 = vpack.c.b16 %v577, %v575
        %v618 = vpack.c.b16 %v578, %v576
        %v619 = vpack.c.b16 %v581, %v579
        %v620 = vpack.c.b16 %v582, %v580
        %v621 = vpack.c.b16 %v585, %v583
        %v622 = vpack.c.b16 %v586, %v584
        %v623 = vpack.c.b16 %v589, %v587
        %v624 = vpack.c.b16 %v590, %v588
        %v625 = vpack.c.b16 %v593, %v591
        %v626 = vpack.c.b16 %v594, %v592
        %659 = vmatprep.subr.bf16.mxu0 %v596
        %660 = vmatpush1.bf16.msra.mxu0 %v595
        %661 = vmatprep.subr.bf16.mxu0 %v598
        %662 = vmatpush1.bf16.msra.mxu0 %v597
        %663 = vmatprep.subr.bf16.mxu0 %v600
        %664 = vmatpush1.bf16.msra.mxu0 %v599
        %665 = vmatprep.subr.bf16.mxu0 %v602
        %666 = vmatpush1.bf16.msra.mxu0 %v601
        %667 = vmatprep.subr.bf16.mxu0 %v604
        %668 = vmatpush1.bf16.msra.mxu0 %v603
        %669 = vmatprep.subr.bf16.mxu0 %v606
        %670 = vmatpush1.bf16.msra.mxu0 %v605
        %671 = vmatprep.subr.bf16.mxu0 %v608
        %672 = vmatpush1.bf16.msra.mxu0 %v607
        %673 = vmatprep.subr.bf16.mxu0 %v610
        %674 = vmatpush1.bf16.msra.mxu0 %v609
        %675 = vmatprep.subr.bf16.mxu0 %v612
        %676 = vmatpush1.bf16.msra.mxu0 %v611
        %677 = vmatprep.subr.bf16.mxu0 %v614
        %678 = vmatpush1.bf16.msra.mxu0 %v613
        %679 = vmatprep.subr.bf16.mxu0 %v616
        %680 = vmatpush1.bf16.msra.mxu0 %v615
        %681 = vmatprep.subr.bf16.mxu0 %v618
        %682 = vmatpush1.bf16.msra.mxu0 %v617
        %683 = vmatprep.subr.bf16.mxu0 %v620
        %684 = vmatpush1.bf16.msra.mxu0 %v619
        %685 = vmatprep.subr.bf16.mxu0 %v622
        %686 = vmatpush1.bf16.msra.mxu0 %v621
        %687 = vmatprep.subr.bf16.mxu0 %v624
        %688 = vmatpush1.bf16.msra.mxu0 %v623
        %689 = vmatprep.subr.bf16.mxu0 %v626
        %690 = vmatpush1.bf16.msra.mxu0 %v625
        %691 = vmatprep.mubr.bf16.mxu0 %v468
        %692 = vmatmul.mubr.bf16.gmra.mrb[0].mxu0 %v467
        %v693 = vpop.f32.mrb[0].mxu0
        %v694 = vadd.f32 %v412, %v693
        %v695 = vpop.f32.mrb[0].mxu0
        %v696 = vadd.f32 %v416, %v695
        %v697 = vpop.f32.mrb[0].mxu0
        %v698 = vadd.f32 %v412, %v697
        %v699 = vpop.f32.mrb[0].mxu0
        %v700 = vadd.f32 %v416, %v699
        %701 = vmatprep.mubr.bf16.mxu0 %v470
        %702 = vmatmul.mubr.bf16.gmra.mrb[0].mxu0 %v469
        %v703 = vpop.f32.mrb[0].mxu0
        %v704 = vadd.f32 %v412, %v703
        %v705 = vpop.f32.mrb[0].mxu0
        %v706 = vadd.f32 %v416, %v705
        %v707 = vpop.f32.mrb[0].mxu0
        %v708 = vadd.f32 %v412, %v707
        %v709 = vpop.f32.mrb[0].mxu0
        %v710 = vadd.f32 %v416, %v709
        %711 = vmatprep.mubr.bf16.mxu0 %v472
        %712 = vmatmul.mubr.bf16.gmra.mrb[0].mxu0 %v471
        %v713 = vpop.f32.mrb[0].mxu0
        %v714 = vadd.f32 %v412, %v713
        %v715 = vpop.f32.mrb[0].mxu0
        %v716 = vadd.f32 %v416, %v715
        %v717 = vpop.f32.mrb[0].mxu0
        %v718 = vadd.f32 %v412, %v717
        %v719 = vpop.f32.mrb[0].mxu0
        %v720 = vadd.f32 %v416, %v719
        %721 = vmatprep.mubr.bf16.mxu0 %v474
        %722 = vmatmul.mubr.bf16.gmra.mrb[0].mxu0 %v473
        %v723 = vpop.f32.mrb[0].mxu0
        %v724 = vadd.f32 %v412, %v723
        %v725 = vpop.f32.mrb[0].mxu0
        %v726 = vadd.f32 %v416, %v725
        %v727 = vpop.f32.mrb[0].mxu0
        %v728 = vadd.f32 %v412, %v727
        %v729 = vpop.f32.mrb[0].mxu0
        %v730 = vadd.f32 %v416, %v729
        %731 = vmatprep.mubr.bf16.mxu0 %v476
        %732 = vmatmul.mubr.bf16.gmra.mrb[0].mxu0 %v475
        %v733 = vpop.f32.mrb[0].mxu0
        %v734 = vadd.f32 %v412, %v733
        %v735 = vpop.f32.mrb[0].mxu0
        %v736 = vadd.f32 %v416, %v735
        %v737 = vpop.f32.mrb[0].mxu0
        %v738 = vadd.f32 %v412, %v737
        %v739 = vpop.f32.mrb[0].mxu0
        %v740 = vadd.f32 %v416, %v739
        %741 = vmatprep.mubr.bf16.mxu0 %v478
        %742 = vmatmul.mubr.bf16.gmra.mrb[0].mxu0 %v477
        %v743 = vpop.f32.mrb[0].mxu0
        %v744 = vadd.f32 %v412, %v743
        %v745 = vpop.f32.mrb[0].mxu0
        %v746 = vadd.f32 %v416, %v745
        %v747 = vpop.f32.mrb[0].mxu0
        %v748 = vadd.f32 %v412, %v747
        %v749 = vpop.f32.mrb[0].mxu0
        %v750 = vadd.f32 %v416, %v749
        %751 = vmatprep.mubr.bf16.mxu0 %v480
        %752 = vmatmul.mubr.bf16.gmra.mrb[0].mxu0 %v479
        %v753 = vpop.f32.mrb[0].mxu0
        %v754 = vadd.f32 %v412, %v753
        %v755 = vpop.f32.mrb[0].mxu0
        %v756 = vadd.f32 %v416, %v755
        %v757 = vpop.f32.mrb[0].mxu0
        %v758 = vadd.f32 %v412, %v757
        %v759 = vpop.f32.mrb[0].mxu0
        %v760 = vadd.f32 %v416, %v759
        %761 = vmatprep.mubr.bf16.mxu0 %v482
        %762 = vmatmul.mubr.bf16.gmra.mrb[0].mxu0 %v481
        %v763 = vpop.f32.mrb[0].mxu0
        %v764 = vadd.f32 %v412, %v763
        %v765 = vpop.f32.mrb[0].mxu0
        %v766 = vadd.f32 %v416, %v765
        %v767 = vpop.f32.mrb[0].mxu0
        %v768 = vadd.f32 %v412, %v767
        %v769 = vpop.f32.mrb[0].mxu0
        %v770 = vadd.f32 %v416, %v769
        %771 = vdwg.mxu0
        %v772 = vmax.f32 %v694, 0.0
        %v773 = vmax.f32 %v696, 0.0
        %v774 = vmax.f32 %v698, 0.0
        %v775 = vmax.f32 %v700, 0.0
        %v776 = vmax.f32 %v704, 0.0
        %v777 = vmax.f32 %v706, 0.0
        %v778 = vmax.f32 %v708, 0.0
        %v779 = vmax.f32 %v710, 0.0
        %v780 = vmax.f32 %v714, 0.0
        %v781 = vmax.f32 %v716, 0.0
        %v782 = vmax.f32 %v718, 0.0
        %v783 = vmax.f32 %v720, 0.0
        %v784 = vmax.f32 %v724, 0.0
        %v785 = vmax.f32 %v726, 0.0
        %v786 = vmax.f32 %v728, 0.0
        %v787 = vmax.f32 %v730, 0.0
        %v788 = vmax.f32 %v734, 0.0
        %v789 = vmax.f32 %v736, 0.0
        %v790 = vmax.f32 %v738, 0.0
        %v791 = vmax.f32 %v740, 0.0
        %v792 = vmax.f32 %v744, 0.0
        %v793 = vmax.f32 %v746, 0.0
        %v794 = vmax.f32 %v748, 0.0
        %v795 = vmax.f32 %v750, 0.0
        %v796 = vmax.f32 %v754, 0.0
        %v797 = vmax.f32 %v756, 0.0
        %v798 = vmax.f32 %v758, 0.0
        %v799 = vmax.f32 %v760, 0.0
        %v800 = vmax.f32 %v764, 0.0
        %v801 = vmax.f32 %v766, 0.0
        %v802 = vmax.f32 %v768, 0.0
        %v803 = vmax.f32 %v770, 0.0
        %v804 = vpack.c.bf16 %v774, %v772
        %v805 = vpack.c.bf16 %v778, %v776
        %v806 = vpack.c.bf16 %v782, %v780
        %v807 = vpack.c.bf16 %v786, %v784
        %v808 = vpack.c.bf16 %v790, %v788
        %v809 = vpack.c.bf16 %v794, %v792
        %v810 = vpack.c.bf16 %v798, %v796
        %v811 = vpack.c.bf16 %v802, %v800
        %v812 = vpack.c.bf16 %v775, %v773
        %v813 = vpack.c.bf16 %v779, %v777
        %v814 = vpack.c.bf16 %v783, %v781
        %v815 = vpack.c.bf16 %v787, %v785
        %v816 = vpack.c.bf16 %v791, %v789
        %v817 = vpack.c.bf16 %v795, %v793
        %v818 = vpack.c.bf16 %v799, %v797
        %v819 = vpack.c.bf16 %v803, %v801
        %v820 = vld [vmem:[%s3] sm:$0xf]
        %v821 = vld [vmem:[%s3 + $0x4] sm:$0xf]
        %v822 = vld [vmem:[%s3 + $0x8] sm:$0xf]
        %v823 = vld [vmem:[%s3 + $0xc] sm:$0xf]
        %v824 = vld [vmem:[%s3 + $0x10] sm:$0xf]
        %v825 = vld [vmem:[%s3 + $0x14] sm:$0xf]
        %v826 = vld [vmem:[%s3 + $0x18] sm:$0xf]
        %v827 = vld [vmem:[%s3 + $0x1c] sm:$0xf]
        %v828 = vld [vmem:[%s3 + $0x20] sm:$0xf]
        %v829 = vld [vmem:[%s3 + $0x24] sm:$0xf]
        %v830 = vld [vmem:[%s3 + $0x28] sm:$0xf]
        %v831 = vld [vmem:[%s3 + $0x2c] sm:$0xf]
        %v832 = vld [vmem:[%s3 + $0x30] sm:$0xf]
        %v833 = vld [vmem:[%s3 + $0x34] sm:$0xf]
        %v834 = vld [vmem:[%s3 + $0x38] sm:$0xf]
        %v835 = vld [vmem:[%s3 + $0x3c] sm:$0xf]
        %v836 = vld [vmem:[%s4] sm:$0x1]
        %v838 = vlaneseq
        %v839 = vshrl.u32 %v838, 7
        %v840 = vsub.s32 0, %v839
        %v841 = vrot.slane %v836, %v840
        %v859 = vunpack.c.l.b16 %v820
        %v860 = vunpack.c.l.b16 %v821
        %v861 = vunpack.c.l.b16 %v822
        %v862 = vunpack.c.l.b16 %v823
        %v863 = vunpack.c.l.b16 %v824
        %v864 = vunpack.c.l.b16 %v825
        %v865 = vunpack.c.l.b16 %v826
        %v866 = vunpack.c.l.b16 %v827
        %v867 = vunpack.c.l.b16 %v828
        %v868 = vunpack.c.l.b16 %v829
        %v869 = vunpack.c.l.b16 %v830
        %v870 = vunpack.c.l.b16 %v831
        %v871 = vunpack.c.l.b16 %v832
        %v872 = vunpack.c.l.b16 %v833
        %v873 = vunpack.c.l.b16 %v834
        %v874 = vunpack.c.l.b16 %v835
        %v875 = vpack.c.b16 %v860, %v859
        %v876 = vpack.c.b16 %v862, %v861
        %v877 = vpack.c.b16 %v864, %v863
        %v878 = vpack.c.b16 %v866, %v865
        %v879 = vpack.c.b16 %v868, %v867
        %v880 = vpack.c.b16 %v870, %v869
        %v881 = vpack.c.b16 %v872, %v871
        %v882 = vpack.c.b16 %v874, %v873
        %891 = vmatprep.subr.bf16.mxu0 0
        %892 = vmatpush1.bf16.msra.mxu0 %v875
        %893 = vmatprep.subr.bf16.mxu0 0
        %894 = vmatpush1.bf16.msra.mxu0 %v876
        %895 = vmatprep.subr.bf16.mxu0 0
        %896 = vmatpush1.bf16.msra.mxu0 %v877
        %897 = vmatprep.subr.bf16.mxu0 0
        %898 = vmatpush1.bf16.msra.mxu0 %v878
        %899 = vmatprep.subr.bf16.mxu0 0
        %900 = vmatpush1.bf16.msra.mxu0 %v879
        %901 = vmatprep.subr.bf16.mxu0 0
        %902 = vmatpush1.bf16.msra.mxu0 %v880
        %903 = vmatprep.subr.bf16.mxu0 0
        %904 = vmatpush1.bf16.msra.mxu0 %v881
        %905 = vmatprep.subr.bf16.mxu0 0
        %906 = vmatpush1.bf16.msra.mxu0 %v882
        %907 = vmatprep.subr.bf16.mxu0 0
        %908 = vmatpush1.bf16.msra.mxu0 0
        %909 = vmatprep.subr.bf16.mxu0 0
        %910 = vmatpush1.bf16.msra.mxu0 0
        %911 = vmatprep.subr.bf16.mxu0 0
        %912 = vmatpush1.bf16.msra.mxu0 0
        %913 = vmatprep.subr.bf16.mxu0 0
        %914 = vmatpush1.bf16.msra.mxu0 0
        %915 = vmatprep.subr.bf16.mxu0 0
        %916 = vmatpush1.bf16.msra.mxu0 0
        %917 = vmatprep.subr.bf16.mxu0 0
        %918 = vmatpush1.bf16.msra.mxu0 0
        %919 = vmatprep.subr.bf16.mxu0 0
        %920 = vmatpush1.bf16.msra.mxu0 0
        %921 = vmatprep.subr.bf16.mxu0 0
        %922 = vmatpush1.bf16.msra.mxu0 0
        %923 = vmatprep.mubr.bf16.mxu0 0
        %924 = vmatmul.mubr.bf16.gmra.mrb[0].mxu0 %v804
        %v925 = vpop.f32.mrb[0].mxu0
        %v926 = vadd.f32 %v841, %v925
        %v927 = vpop.f32.mrb[0].mxu0
        %v928 = vpop.f32.mrb[0].mxu0
        %v929 = vadd.f32 %v841, %v928
        %v930 = vpop.f32.mrb[0].mxu0
        %931 = vmatprep.mubr.bf16.mxu0 0
        %932 = vmatmul.mubr.bf16.gmra.mrb[0].mxu0 %v805
        %v933 = vpop.f32.mrb[0].mxu0
        %v934 = vadd.f32 %v841, %v933
        %v935 = vpop.f32.mrb[0].mxu0
        %v936 = vpop.f32.mrb[0].mxu0
        %v937 = vadd.f32 %v841, %v936
        %v938 = vpop.f32.mrb[0].mxu0
        %939 = vmatprep.mubr.bf16.mxu0 0
        %940 = vmatmul.mubr.bf16.gmra.mrb[0].mxu0 %v806
        %v941 = vpop.f32.mrb[0].mxu0
        %v942 = vadd.f32 %v841, %v941
        %v943 = vpop.f32.mrb[0].mxu0
        %v944 = vpop.f32.mrb[0].mxu0
        %v945 = vadd.f32 %v841, %v944
        %v946 = vpop.f32.mrb[0].mxu0
        %947 = vmatprep.mubr.bf16.mxu0 0
        %948 = vmatmul.mubr.bf16.gmra.mrb[0].mxu0 %v807
        %v949 = vpop.f32.mrb[0].mxu0
        %v950 = vadd.f32 %v841, %v949
        %v951 = vpop.f32.mrb[0].mxu0
        %v952 = vpop.f32.mrb[0].mxu0
        %v953 = vadd.f32 %v841, %v952
        %v954 = vpop.f32.mrb[0].mxu0
        %955 = vmatprep.mubr.bf16.mxu0 0
        %956 = vmatmul.mubr.bf16.gmra.mrb[0].mxu0 %v808
        %v957 = vpop.f32.mrb[0].mxu0
        %v958 = vadd.f32 %v841, %v957
        %v959 = vpop.f32.mrb[0].mxu0
        %v960 = vpop.f32.mrb[0].mxu0
        %v961 = vadd.f32 %v841, %v960
        %v962 = vpop.f32.mrb[0].mxu0
        %963 = vmatprep.mubr.bf16.mxu0 0
        %964 = vmatmul.mubr.bf16.gmra.mrb[0].mxu0 %v809
        %v965 = vpop.f32.mrb[0].mxu0
        %v966 = vadd.f32 %v841, %v965
        %v967 = vpop.f32.mrb[0].mxu0
        %v968 = vpop.f32.mrb[0].mxu0
        %v969 = vadd.f32 %v841, %v968
        %v970 = vpop.f32.mrb[0].mxu0
        %971 = vmatprep.mubr.bf16.mxu0 0
        %972 = vmatmul.mubr.bf16.gmra.mrb[0].mxu0 %v810
        %v973 = vpop.f32.mrb[0].mxu0
        %v974 = vadd.f32 %v841, %v973
        %v975 = vpop.f32.mrb[0].mxu0
        %v976 = vpop.f32.mrb[0].mxu0
        %v977 = vadd.f32 %v841, %v976
        %v978 = vpop.f32.mrb[0].mxu0
        %979 = vmatprep.mubr.bf16.mxu0 0
        %980 = vmatmul.mubr.bf16.gmra.mrb[0].mxu0 %v811
        %v981 = vpop.f32.mrb[0].mxu0
        %v982 = vadd.f32 %v841, %v981
        %v983 = vpop.f32.mrb[0].mxu0
        %v984 = vpop.f32.mrb[0].mxu0
        %v985 = vadd.f32 %v841, %v984
        %v986 = vpop.f32.mrb[0].mxu0
        %987 = vdwg.mxu0
        %v988 = vld [vmem:[%s5] sm:$0xf]
        %v989 = vld [vmem:[%s5 + $0x4] sm:$0xf]
        %v990 = vld [vmem:[%s5 + $0x8] sm:$0xf]
        %v991 = vld [vmem:[%s5 + $0xc] sm:$0xf]
        %v992 = vld [vmem:[%s5 + $0x10] sm:$0xf]
        %v993 = vld [vmem:[%s5 + $0x14] sm:$0xf]
        %v994 = vld [vmem:[%s5 + $0x18] sm:$0xf]
        %v995 = vld [vmem:[%s5 + $0x1c] sm:$0xf]
        %v996 = vld [vmem:[%s5 + $0x20] sm:$0xf]
        %v997 = vld [vmem:[%s5 + $0x24] sm:$0xf]
        %v998 = vld [vmem:[%s5 + $0x28] sm:$0xf]
        %v999 = vld [vmem:[%s5 + $0x2c] sm:$0xf]
        %v1000 = vld [vmem:[%s5 + $0x30] sm:$0xf]
        %v1001 = vld [vmem:[%s5 + $0x34] sm:$0xf]
        %v1002 = vld [vmem:[%s5 + $0x38] sm:$0xf]
        %v1003 = vld [vmem:[%s5 + $0x3c] sm:$0xf]
        %v1004 = vld [vmem:[%s6] sm:$0x1]
        %v1006 = vlaneseq
        %v1007 = vshrl.u32 %v1006, 7
        %v1008 = vsub.s32 0, %v1007
        %v1009 = vrot.slane %v1004, %v1008
        %v1027 = vunpack.c.l.b16 %v988
        %v1028 = vunpack.c.l.b16 %v989
        %v1029 = vunpack.c.l.b16 %v990
        %v1030 = vunpack.c.l.b16 %v991
        %v1031 = vunpack.c.l.b16 %v992
        %v1032 = vunpack.c.l.b16 %v993
        %v1033 = vunpack.c.l.b16 %v994
        %v1034 = vunpack.c.l.b16 %v995
        %v1035 = vunpack.c.l.b16 %v996
        %v1036 = vunpack.c.l.b16 %v997
        %v1037 = vunpack.c.l.b16 %v998
        %v1038 = vunpack.c.l.b16 %v999
        %v1039 = vunpack.c.l.b16 %v1000
        %v1040 = vunpack.c.l.b16 %v1001
        %v1041 = vunpack.c.l.b16 %v1002
        %v1042 = vunpack.c.l.b16 %v1003
        %v1043 = vpack.c.b16 %v1028, %v1027
        %v1044 = vpack.c.b16 %v1030, %v1029
        %v1045 = vpack.c.b16 %v1032, %v1031
        %v1046 = vpack.c.b16 %v1034, %v1033
        %v1047 = vpack.c.b16 %v1036, %v1035
        %v1048 = vpack.c.b16 %v1038, %v1037
        %v1049 = vpack.c.b16 %v1040, %v1039
        %v1050 = vpack.c.b16 %v1042, %v1041
        %1059 = vmatprep.subr.bf16.mxu0 0
        %1060 = vmatpush1.bf16.msra.mxu0 %v1043
        %1061 = vmatprep.subr.bf16.mxu0 0
        %1062 = vmatpush1.bf16.msra.mxu0 %v1044
        %1063 = vmatprep.subr.bf16.mxu0 0
        %1064 = vmatpush1.bf16.msra.mxu0 %v1045
        %1065 = vmatprep.subr.bf16.mxu0 0
        %1066 = vmatpush1.bf16.msra.mxu0 %v1046
        %1067 = vmatprep.subr.bf16.mxu0 0
        %1068 = vmatpush1.bf16.msra.mxu0 %v1047
        %1069 = vmatprep.subr.bf16.mxu0 0
        %1070 = vmatpush1.bf16.msra.mxu0 %v1048
        %1071 = vmatprep.subr.bf16.mxu0 0
        %1072 = vmatpush1.bf16.msra.mxu0 %v1049
        %1073 = vmatprep.subr.bf16.mxu0 0
        %1074 = vmatpush1.bf16.msra.mxu0 %v1050
        %1075 = vmatprep.subr.bf16.mxu0 0
        %1076 = vmatpush1.bf16.msra.mxu0 0
        %1077 = vmatprep.subr.bf16.mxu0 0
        %1078 = vmatpush1.bf16.msra.mxu0 0
        %1079 = vmatprep.subr.bf16.mxu0 0
        %1080 = vmatpush1.bf16.msra.mxu0 0
        %1081 = vmatprep.subr.bf16.mxu0 0
        %1082 = vmatpush1.bf16.msra.mxu0 0
        %1083 = vmatprep.subr.bf16.mxu0 0
        %1084 = vmatpush1.bf16.msra.mxu0 0
        %1085 = vmatprep.subr.bf16.mxu0 0
        %1086 = vmatpush1.bf16.msra.mxu0 0
        %1087 = vmatprep.subr.bf16.mxu0 0
        %1088 = vmatpush1.bf16.msra.mxu0 0
        %1089 = vmatprep.subr.bf16.mxu0 0
        %1090 = vmatpush1.bf16.msra.mxu0 0
        %1091 = vmatprep.mubr.bf16.mxu0 0
        %1092 = vmatmul.mubr.bf16.gmra.mrb[0].mxu0 %v812
        %v1093 = vpop.f32.mrb[0].mxu0
        %v1094 = vadd.f32 %v1009, %v1093
        %v1095 = vpop.f32.mrb[0].mxu0
        %v1096 = vpop.f32.mrb[0].mxu0
        %v1097 = vadd.f32 %v1009, %v1096
        %v1098 = vpop.f32.mrb[0].mxu0
        %1099 = vmatprep.mubr.bf16.mxu0 0
        %1100 = vmatmul.mubr.bf16.gmra.mrb[0].mxu0 %v813
        %v1101 = vpop.f32.mrb[0].mxu0
        %v1102 = vadd.f32 %v1009, %v1101
        %v1103 = vpop.f32.mrb[0].mxu0
        %v1104 = vpop.f32.mrb[0].mxu0
        %v1105 = vadd.f32 %v1009, %v1104
        %v1106 = vpop.f32.mrb[0].mxu0
        %1107 = vmatprep.mubr.bf16.mxu0 0
        %1108 = vmatmul.mubr.bf16.gmra.mrb[0].mxu0 %v814
        %v1109 = vpop.f32.mrb[0].mxu0
        %v1110 = vadd.f32 %v1009, %v1109
        %v1111 = vpop.f32.mrb[0].mxu0
        %v1112 = vpop.f32.mrb[0].mxu0
        %v1113 = vadd.f32 %v1009, %v1112
        %v1114 = vpop.f32.mrb[0].mxu0
        %1115 = vmatprep.mubr.bf16.mxu0 0
        %1116 = vmatmul.mubr.bf16.gmra.mrb[0].mxu0 %v815
        %v1117 = vpop.f32.mrb[0].mxu0
        %v1118 = vadd.f32 %v1009, %v1117
        %v1119 = vpop.f32.mrb[0].mxu0
        %v1120 = vpop.f32.mrb[0].mxu0
        %v1121 = vadd.f32 %v1009, %v1120
        %v1122 = vpop.f32.mrb[0].mxu0
        %1123 = vmatprep.mubr.bf16.mxu0 0
        %1124 = vmatmul.mubr.bf16.gmra.mrb[0].mxu0 %v816
        %v1125 = vpop.f32.mrb[0].mxu0
        %v1126 = vadd.f32 %v1009, %v1125
        %v1127 = vpop.f32.mrb[0].mxu0
        %v1128 = vpop.f32.mrb[0].mxu0
        %v1129 = vadd.f32 %v1009, %v1128
        %v1130 = vpop.f32.mrb[0].mxu0
        %1131 = vmatprep.mubr.bf16.mxu0 0
        %1132 = vmatmul.mubr.bf16.gmra.mrb[0].mxu0 %v817
        %v1133 = vpop.f32.mrb[0].mxu0
        %v1134 = vadd.f32 %v1009, %v1133
        %v1135 = vpop.f32.mrb[0].mxu0
        %v1136 = vpop.f32.mrb[0].mxu0
        %v1137 = vadd.f32 %v1009, %v1136
        %v1138 = vpop.f32.mrb[0].mxu0
        %1139 = vmatprep.mubr.bf16.mxu0 0
        %1140 = vmatmul.mubr.bf16.gmra.mrb[0].mxu0 %v818
        %v1141 = vpop.f32.mrb[0].mxu0
        %v1142 = vadd.f32 %v1009, %v1141
        %v1143 = vpop.f32.mrb[0].mxu0
        %v1144 = vpop.f32.mrb[0].mxu0
        %v1145 = vadd.f32 %v1009, %v1144
        %v1146 = vpop.f32.mrb[0].mxu0
        %1147 = vmatprep.mubr.bf16.mxu0 0
        %1148 = vmatmul.mubr.bf16.gmra.mrb[0].mxu0 %v819
        %v1149 = vpop.f32.mrb[0].mxu0
        %v1150 = vadd.f32 %v1009, %v1149
        %v1151 = vpop.f32.mrb[0].mxu0
        %v1152 = vpop.f32.mrb[0].mxu0
        %v1153 = vadd.f32 %v1009, %v1152
        %v1154 = vpop.f32.mrb[0].mxu0
        %1155 = vdwg.mxu0
        %vm1156 = vcmask 130048
        %v1157 = vsel %vm1156, %v1094, -inf
        %v1158 = vrot.slane %v1157, 4
        %v1159 = vmax.f32 %v1157, %v1158
        %v1160 = vrot.slane %v1159, 2
        %v1161 = vmax.f32 %v1159, %v1160
        %v1162 = vrot.slane %v1161, 1
        %v1163 = vmax.f32 %v1161, %v1162
        %v1164 = vsel %vm1156, %v1097, -inf
        %v1165 = vrot.slane %v1164, 4
        %v1166 = vmax.f32 %v1164, %v1165
        %v1167 = vrot.slane %v1166, 2
        %v1168 = vmax.f32 %v1166, %v1167
        %v1169 = vrot.slane %v1168, 1
        %v1170 = vmax.f32 %v1168, %v1169
        %v1171 = vsel %vm1156, %v1102, -inf
        %v1172 = vrot.slane %v1171, 4
        %v1173 = vmax.f32 %v1171, %v1172
        %v1174 = vrot.slane %v1173, 2
        %v1175 = vmax.f32 %v1173, %v1174
        %v1176 = vrot.slane %v1175, 1
        %v1177 = vmax.f32 %v1175, %v1176
        %v1178 = vsel %vm1156, %v1105, -inf
        %v1179 = vrot.slane %v1178, 4
        %v1180 = vmax.f32 %v1178, %v1179
        %v1181 = vrot.slane %v1180, 2
        %v1182 = vmax.f32 %v1180, %v1181
        %v1183 = vrot.slane %v1182, 1
        %v1184 = vmax.f32 %v1182, %v1183
        %v1185 = vsel %vm1156, %v1110, -inf
        %v1186 = vrot.slane %v1185, 4
        %v1187 = vmax.f32 %v1185, %v1186
        %v1188 = vrot.slane %v1187, 2
        %v1189 = vmax.f32 %v1187, %v1188
        %v1190 = vrot.slane %v1189, 1
        %v1191 = vmax.f32 %v1189, %v1190
        %v1192 = vsel %vm1156, %v1113, -inf
        %v1193 = vrot.slane %v1192, 4
        %v1194 = vmax.f32 %v1192, %v1193
        %v1195 = vrot.slane %v1194, 2
        %v1196 = vmax.f32 %v1194, %v1195
        %v1197 = vrot.slane %v1196, 1
        %v1198 = vmax.f32 %v1196, %v1197
        %v1199 = vsel %vm1156, %v1118, -inf
        %v1200 = vrot.slane %v1199, 4
        %v1201 = vmax.f32 %v1199, %v1200
        %v1202 = vrot.slane %v1201, 2
        %v1203 = vmax.f32 %v1201, %v1202
        %v1204 = vrot.slane %v1203, 1
        %v1205 = vmax.f32 %v1203, %v1204
        %v1206 = vsel %vm1156, %v1121, -inf
        %v1207 = vrot.slane %v1206, 4
        %v1208 = vmax.f32 %v1206, %v1207
        %v1209 = vrot.slane %v1208, 2
        %v1210 = vmax.f32 %v1208, %v1209
        %v1211 = vrot.slane %v1210, 1
        %v1212 = vmax.f32 %v1210, %v1211
        %v1213 = vsel %vm1156, %v1126, -inf
        %v1214 = vrot.slane %v1213, 4
        %v1215 = vmax.f32 %v1213, %v1214
        %v1216 = vrot.slane %v1215, 2
        %v1217 = vmax.f32 %v1215, %v1216
        %v1218 = vrot.slane %v1217, 1
        %v1219 = vmax.f32 %v1217, %v1218
        %v1220 = vsel %vm1156, %v1129, -inf
        %v1221 = vrot.slane %v1220, 4
        %v1222 = vmax.f32 %v1220, %v1221
        %v1223 = vrot.slane %v1222, 2
        %v1224 = vmax.f32 %v1222, %v1223
        %v1225 = vrot.slane %v1224, 1
        %v1226 = vmax.f32 %v1224, %v1225
        %v1227 = vsel %vm1156, %v1134, -inf
        %v1228 = vrot.slane %v1227, 4
        %v1229 = vmax.f32 %v1227, %v1228
        %v1230 = vrot.slane %v1229, 2
        %v1231 = vmax.f32 %v1229, %v1230
        %v1232 = vrot.slane %v1231, 1
        %v1233 = vmax.f32 %v1231, %v1232
        %v1234 = vsel %vm1156, %v1137, -inf
        %v1235 = vrot.slane %v1234, 4
        %v1236 = vmax.f32 %v1234, %v1235
        %v1237 = vrot.slane %v1236, 2
        %v1238 = vmax.f32 %v1236, %v1237
        %v1239 = vrot.slane %v1238, 1
        %v1240 = vmax.f32 %v1238, %v1239
        %v1241 = vsel %vm1156, %v1142, -inf
        %v1242 = vrot.slane %v1241, 4
        %v1243 = vmax.f32 %v1241, %v1242
        %v1244 = vrot.slane %v1243, 2
        %v1245 = vmax.f32 %v1243, %v1244
        %v1246 = vrot.slane %v1245, 1
        %v1247 = vmax.f32 %v1245, %v1246
        %v1248 = vsel %vm1156, %v1145, -inf
        %v1249 = vrot.slane %v1248, 4
        %v1250 = vmax.f32 %v1248, %v1249
        %v1251 = vrot.slane %v1250, 2
        %v1252 = vmax.f32 %v1250, %v1251
        %v1253 = vrot.slane %v1252, 1
        %v1254 = vmax.f32 %v1252, %v1253
        %v1255 = vsel %vm1156, %v1150, -inf
        %v1256 = vrot.slane %v1255, 4
        %v1257 = vmax.f32 %v1255, %v1256
        %v1258 = vrot.slane %v1257, 2
        %v1259 = vmax.f32 %v1257, %v1258
        %v1260 = vrot.slane %v1259, 1
        %v1261 = vmax.f32 %v1259, %v1260
        %v1262 = vsel %vm1156, %v1153, -inf
        %v1263 = vrot.slane %v1262, 4
        %v1264 = vmax.f32 %v1262, %v1263
        %v1265 = vrot.slane %v1264, 2
        %v1266 = vmax.f32 %v1264, %v1265
        %v1267 = vrot.slane %v1266, 1
        %v1268 = vmax.f32 %v1266, %v1267
        %v1269 = vsub.f32 %v1094, %v1163
        %v1270 = vsub.f32 %v1097, %v1170
        %v1271 = vsub.f32 %v1102, %v1177
        %v1272 = vsub.f32 %v1105, %v1184
        %v1273 = vsub.f32 %v1110, %v1191
        %v1274 = vsub.f32 %v1113, %v1198
        %v1275 = vsub.f32 %v1118, %v1205
        %v1276 = vsub.f32 %v1121, %v1212
        %v1277 = vsub.f32 %v1126, %v1219
        %v1278 = vsub.f32 %v1129, %v1226
        %v1279 = vsub.f32 %v1134, %v1233
        %v1280 = vsub.f32 %v1137, %v1240
        %v1281 = vsub.f32 %v1142, %v1247
        %v1282 = vsub.f32 %v1145, %v1254
        %v1283 = vsub.f32 %v1150, %v1261
        %v1284 = vsub.f32 %v1153, %v1268
        %v1285 = vmul.f32 %v1269, 1.442695
        %v1286 = vpow.pop %v1285
        %v1287 = vmul.f32 %v1270, 1.442695
        %v1288 = vpow.pop %v1287
        %v1289 = vmul.f32 %v1271, 1.442695
        %v1290 = vpow.pop %v1289
        %v1291 = vmul.f32 %v1272, 1.442695
        %v1292 = vpow.pop %v1291
        %v1293 = vmul.f32 %v1273, 1.442695
        %v1294 = vpow.pop %v1293
        %v1295 = vmul.f32 %v1274, 1.442695
        %v1296 = vpow.pop %v1295
        %v1297 = vmul.f32 %v1275, 1.442695
        %v1298 = vpow.pop %v1297
        %v1299 = vmul.f32 %v1276, 1.442695
        %v1300 = vpow.pop %v1299
        %v1301 = vmul.f32 %v1277, 1.442695
        %v1302 = vpow.pop %v1301
        %v1303 = vmul.f32 %v1278, 1.442695
        %v1304 = vpow.pop %v1303
        %v1305 = vmul.f32 %v1279, 1.442695
        %v1306 = vpow.pop %v1305
        %v1307 = vmul.f32 %v1280, 1.442695
        %v1308 = vpow.pop %v1307
        %v1309 = vmul.f32 %v1281, 1.442695
        %v1310 = vpow.pop %v1309
        %v1311 = vmul.f32 %v1282, 1.442695
        %v1312 = vpow.pop %v1311
        %v1313 = vmul.f32 %v1283, 1.442695
        %v1314 = vpow.pop %v1313
        %v1315 = vmul.f32 %v1284, 1.442695
        %v1316 = vpow.pop %v1315
        %v1317 = vsel %vm1156, %v1286, 0.0
        %v1318 = vrot.slane %v1317, 4
        %v1319 = vadd.f32 %v1317, %v1318
        %v1320 = vrot.slane %v1319, 2
        %v1321 = vadd.f32 %v1319, %v1320
        %v1322 = vrot.slane %v1321, 1
        %v1323 = vadd.f32 %v1321, %v1322
        %v1324 = vsel %vm1156, %v1288, 0.0
        %v1325 = vrot.slane %v1324, 4
        %v1326 = vadd.f32 %v1324, %v1325
        %v1327 = vrot.slane %v1326, 2
        %v1328 = vadd.f32 %v1326, %v1327
        %v1329 = vrot.slane %v1328, 1
        %v1330 = vadd.f32 %v1328, %v1329
        %v1331 = vsel %vm1156, %v1290, 0.0
        %v1332 = vrot.slane %v1331, 4
        %v1333 = vadd.f32 %v1331, %v1332
        %v1334 = vrot.slane %v1333, 2
        %v1335 = vadd.f32 %v1333, %v1334
        %v1336 = vrot.slane %v1335, 1
        %v1337 = vadd.f32 %v1335, %v1336
        %v1338 = vsel %vm1156, %v1292, 0.0
        %v1339 = vrot.slane %v1338, 4
        %v1340 = vadd.f32 %v1338, %v1339
        %v1341 = vrot.slane %v1340, 2
        %v1342 = vadd.f32 %v1340, %v1341
        %v1343 = vrot.slane %v1342, 1
        %v1344 = vadd.f32 %v1342, %v1343
        %v1345 = vsel %vm1156, %v1294, 0.0
        %v1346 = vrot.slane %v1345, 4
        %v1347 = vadd.f32 %v1345, %v1346
        %v1348 = vrot.slane %v1347, 2
        %v1349 = vadd.f32 %v1347, %v1348
        %v1350 = vrot.slane %v1349, 1
        %v1351 = vadd.f32 %v1349, %v1350
        %v1352 = vsel %vm1156, %v1296, 0.0
        %v1353 = vrot.slane %v1352, 4
        %v1354 = vadd.f32 %v1352, %v1353
        %v1355 = vrot.slane %v1354, 2
        %v1356 = vadd.f32 %v1354, %v1355
        %v1357 = vrot.slane %v1356, 1
        %v1358 = vadd.f32 %v1356, %v1357
        %v1359 = vsel %vm1156, %v1298, 0.0
        %v1360 = vrot.slane %v1359, 4
        %v1361 = vadd.f32 %v1359, %v1360
        %v1362 = vrot.slane %v1361, 2
        %v1363 = vadd.f32 %v1361, %v1362
        %v1364 = vrot.slane %v1363, 1
        %v1365 = vadd.f32 %v1363, %v1364
        %v1366 = vsel %vm1156, %v1300, 0.0
        %v1367 = vrot.slane %v1366, 4
        %v1368 = vadd.f32 %v1366, %v1367
        %v1369 = vrot.slane %v1368, 2
        %v1370 = vadd.f32 %v1368, %v1369
        %v1371 = vrot.slane %v1370, 1
        %v1372 = vadd.f32 %v1370, %v1371
        %v1373 = vsel %vm1156, %v1302, 0.0
        %v1374 = vrot.slane %v1373, 4
        %v1375 = vadd.f32 %v1373, %v1374
        %v1376 = vrot.slane %v1375, 2
        %v1377 = vadd.f32 %v1375, %v1376
        %v1378 = vrot.slane %v1377, 1
        %v1379 = vadd.f32 %v1377, %v1378
        %v1380 = vsel %vm1156, %v1304, 0.0
        %v1381 = vrot.slane %v1380, 4
        %v1382 = vadd.f32 %v1380, %v1381
        %v1383 = vrot.slane %v1382, 2
        %v1384 = vadd.f32 %v1382, %v1383
        %v1385 = vrot.slane %v1384, 1
        %v1386 = vadd.f32 %v1384, %v1385
        %v1387 = vsel %vm1156, %v1306, 0.0
        %v1388 = vrot.slane %v1387, 4
        %v1389 = vadd.f32 %v1387, %v1388
        %v1390 = vrot.slane %v1389, 2
        %v1391 = vadd.f32 %v1389, %v1390
        %v1392 = vrot.slane %v1391, 1
        %v1393 = vadd.f32 %v1391, %v1392
        %v1394 = vsel %vm1156, %v1308, 0.0
        %v1395 = vrot.slane %v1394, 4
        %v1396 = vadd.f32 %v1394, %v1395
        %v1397 = vrot.slane %v1396, 2
        %v1398 = vadd.f32 %v1396, %v1397
        %v1399 = vrot.slane %v1398, 1
        %v1400 = vadd.f32 %v1398, %v1399
        %v1401 = vsel %vm1156, %v1310, 0.0
        %v1402 = vrot.slane %v1401, 4
        %v1403 = vadd.f32 %v1401, %v1402
        %v1404 = vrot.slane %v1403, 2
        %v1405 = vadd.f32 %v1403, %v1404
        %v1406 = vrot.slane %v1405, 1
        %v1407 = vadd.f32 %v1405, %v1406
        %v1408 = vsel %vm1156, %v1312, 0.0
        %v1409 = vrot.slane %v1408, 4
        %v1410 = vadd.f32 %v1408, %v1409
        %v1411 = vrot.slane %v1410, 2
        %v1412 = vadd.f32 %v1410, %v1411
        %v1413 = vrot.slane %v1412, 1
        %v1414 = vadd.f32 %v1412, %v1413
        %v1415 = vsel %vm1156, %v1314, 0.0
        %v1416 = vrot.slane %v1415, 4
        %v1417 = vadd.f32 %v1415, %v1416
        %v1418 = vrot.slane %v1417, 2
        %v1419 = vadd.f32 %v1417, %v1418
        %v1420 = vrot.slane %v1419, 1
        %v1421 = vadd.f32 %v1419, %v1420
        %v1422 = vsel %vm1156, %v1316, 0.0
        %v1423 = vrot.slane %v1422, 4
        %v1424 = vadd.f32 %v1422, %v1423
        %v1425 = vrot.slane %v1424, 2
        %v1426 = vadd.f32 %v1424, %v1425
        %v1427 = vrot.slane %v1426, 1
        %v1428 = vadd.f32 %v1426, %v1427
        %v1429 = vrcp.pop %v1323
        %v1430 = vrcp.pop %v1330
        %v1431 = vrcp.pop %v1337
        %v1432 = vrcp.pop %v1344
        %v1433 = vrcp.pop %v1351
        %v1434 = vrcp.pop %v1358
        %v1435 = vrcp.pop %v1365
        %v1436 = vrcp.pop %v1372
        %v1437 = vrcp.pop %v1379
        %v1438 = vrcp.pop %v1386
        %v1439 = vrcp.pop %v1393
        %v1440 = vrcp.pop %v1400
        %v1441 = vrcp.pop %v1407
        %v1442 = vrcp.pop %v1414
        %v1443 = vrcp.pop %v1421
        %v1444 = vrcp.pop %v1428
        %v1445 = vmul.f32 %v1286, %v1429
        %v1446 = vmul.f32 %v1288, %v1430
        %v1447 = vmul.f32 %v1290, %v1431
        %v1448 = vmul.f32 %v1292, %v1432
        %v1449 = vmul.f32 %v1294, %v1433
        %v1450 = vmul.f32 %v1296, %v1434
        %v1451 = vmul.f32 %v1298, %v1435
        %v1452 = vmul.f32 %v1300, %v1436
        %v1453 = vmul.f32 %v1302, %v1437
        %v1454 = vmul.f32 %v1304, %v1438
        %v1455 = vmul.f32 %v1306, %v1439
        %v1456 = vmul.f32 %v1308, %v1440
        %v1457 = vmul.f32 %v1310, %v1441
        %v1458 = vmul.f32 %v1312, %v1442
        %v1459 = vmul.f32 %v1314, %v1443
        %v1460 = vmul.f32 %v1316, %v1444
        %v1461 = vxor.u32 %v926, 2147483648
        %v1462 = vxor.u32 %v929, 2147483648
        %v1463 = vxor.u32 %v934, 2147483648
        %v1464 = vxor.u32 %v937, 2147483648
        %v1465 = vxor.u32 %v942, 2147483648
        %v1466 = vxor.u32 %v945, 2147483648
        %v1467 = vxor.u32 %v950, 2147483648
        %v1468 = vxor.u32 %v953, 2147483648
        %v1469 = vxor.u32 %v958, 2147483648
        %v1470 = vxor.u32 %v961, 2147483648
        %v1471 = vxor.u32 %v966, 2147483648
        %v1472 = vxor.u32 %v969, 2147483648
        %v1473 = vxor.u32 %v974, 2147483648
        %v1474 = vxor.u32 %v977, 2147483648
        %v1475 = vxor.u32 %v982, 2147483648
        %v1476 = vxor.u32 %v985, 2147483648
        %v1477 = vmul.f32 %v1461, 1.442695
        %v1478 = vpow.pop %v1477
        %v1479 = vmul.f32 %v1462, 1.442695
        %v1480 = vpow.pop %v1479
        %v1481 = vmul.f32 %v1463, 1.442695
        %v1482 = vpow.pop %v1481
        %v1483 = vmul.f32 %v1464, 1.442695
        %v1484 = vpow.pop %v1483
        %v1485 = vmul.f32 %v1465, 1.442695
        %v1486 = vpow.pop %v1485
        %v1487 = vmul.f32 %v1466, 1.442695
        %v1488 = vpow.pop %v1487
        %v1489 = vmul.f32 %v1467, 1.442695
        %v1490 = vpow.pop %v1489
        %v1491 = vmul.f32 %v1468, 1.442695
        %v1492 = vpow.pop %v1491
        %v1493 = vmul.f32 %v1469, 1.442695
        %v1494 = vpow.pop %v1493
        %v1495 = vmul.f32 %v1470, 1.442695
        %v1496 = vpow.pop %v1495
        %v1497 = vmul.f32 %v1471, 1.442695
        %v1498 = vpow.pop %v1497
        %v1499 = vmul.f32 %v1472, 1.442695
        %v1500 = vpow.pop %v1499
        %v1501 = vmul.f32 %v1473, 1.442695
        %v1502 = vpow.pop %v1501
        %v1503 = vmul.f32 %v1474, 1.442695
        %v1504 = vpow.pop %v1503
        %v1505 = vmul.f32 %v1475, 1.442695
        %v1506 = vpow.pop %v1505
        %v1507 = vmul.f32 %v1476, 1.442695
        %v1508 = vpow.pop %v1507
        %v1509 = vadd.f32 %v1478, 1.0
        %v1510 = vadd.f32 %v1480, 1.0
        %v1511 = vadd.f32 %v1482, 1.0
        %v1512 = vadd.f32 %v1484, 1.0
        %v1513 = vadd.f32 %v1486, 1.0
        %v1514 = vadd.f32 %v1488, 1.0
        %v1515 = vadd.f32 %v1490, 1.0
        %v1516 = vadd.f32 %v1492, 1.0
        %v1517 = vadd.f32 %v1494, 1.0
        %v1518 = vadd.f32 %v1496, 1.0
        %v1519 = vadd.f32 %v1498, 1.0
        %v1520 = vadd.f32 %v1500, 1.0
        %v1521 = vadd.f32 %v1502, 1.0
        %v1522 = vadd.f32 %v1504, 1.0
        %v1523 = vadd.f32 %v1506, 1.0
        %v1524 = vadd.f32 %v1508, 1.0
        %v1525 = vrcp.pop %v1509
        %v1526 = vmul.f32 1.0, %v1525
        %v1527 = vrcp.pop %v1510
        %v1528 = vmul.f32 1.0, %v1527
        %v1529 = vrcp.pop %v1511
        %v1530 = vmul.f32 1.0, %v1529
        %v1531 = vrcp.pop %v1512
        %v1532 = vmul.f32 1.0, %v1531
        %v1533 = vrcp.pop %v1513
        %v1534 = vmul.f32 1.0, %v1533
        %v1535 = vrcp.pop %v1514
        %v1536 = vmul.f32 1.0, %v1535
        %v1537 = vrcp.pop %v1515
        %v1538 = vmul.f32 1.0, %v1537
        %v1539 = vrcp.pop %v1516
        %v1540 = vmul.f32 1.0, %v1539
        %v1541 = vrcp.pop %v1517
        %v1542 = vmul.f32 1.0, %v1541
        %v1543 = vrcp.pop %v1518
        %v1544 = vmul.f32 1.0, %v1543
        %v1545 = vrcp.pop %v1519
        %v1546 = vmul.f32 1.0, %v1545
        %v1547 = vrcp.pop %v1520
        %v1548 = vmul.f32 1.0, %v1547
        %v1549 = vrcp.pop %v1521
        %v1550 = vmul.f32 1.0, %v1549
        %v1551 = vrcp.pop %v1522
        %v1552 = vmul.f32 1.0, %v1551
        %v1553 = vrcp.pop %v1523
        %v1554 = vmul.f32 1.0, %v1553
        %v1555 = vrcp.pop %v1524
        %v1556 = vmul.f32 1.0, %v1555
        %v1557 = vmul.f32 %v1445, %v1526
        %v1558 = vmul.f32 %v1446, %v1528
        %v1559 = vmul.f32 %v1447, %v1530
        %v1560 = vmul.f32 %v1448, %v1532
        %v1561 = vmul.f32 %v1449, %v1534
        %v1562 = vmul.f32 %v1450, %v1536
        %v1563 = vmul.f32 %v1451, %v1538
        %v1564 = vmul.f32 %v1452, %v1540
        %v1565 = vmul.f32 %v1453, %v1542
        %v1566 = vmul.f32 %v1454, %v1544
        %v1567 = vmul.f32 %v1455, %v1546
        %v1568 = vmul.f32 %v1456, %v1548
        %v1569 = vmul.f32 %v1457, %v1550
        %v1570 = vmul.f32 %v1458, %v1552
        %v1571 = vmul.f32 %v1459, %v1554
        %v1572 = vmul.f32 %v1460, %v1556
        %1573 = vst.msk [vmem:[%s356] sm:$0xff] %vm1156, %v1557
        %1574 = vst.msk [vmem:[%s356 + $0x8] sm:$0xff] %vm1156, %v1558
        %1575 = vst.msk [vmem:[%s356 + $0x10] sm:$0xff] %vm1156, %v1559
        %1576 = vst.msk [vmem:[%s356 + $0x18] sm:$0xff] %vm1156, %v1560
        %1577 = vst.msk [vmem:[%s356 + $0x20] sm:$0xff] %vm1156, %v1561
        %1578 = vst.msk [vmem:[%s356 + $0x28] sm:$0xff] %vm1156, %v1562
        %1579 = vst.msk [vmem:[%s356 + $0x30] sm:$0xff] %vm1156, %v1563
        %1580 = vst.msk [vmem:[%s356 + $0x38] sm:$0xff] %vm1156, %v1564
        %1581 = vst.msk [vmem:[%s356 + $0x40] sm:$0xff] %vm1156, %v1565
        %1582 = vst.msk [vmem:[%s356 + $0x48] sm:$0xff] %vm1156, %v1566
        %1583 = vst.msk [vmem:[%s356 + $0x50] sm:$0xff] %vm1156, %v1567
        %1584 = vst.msk [vmem:[%s356 + $0x58] sm:$0xff] %vm1156, %v1568
        %1585 = vst.msk [vmem:[%s356 + $0x60] sm:$0xff] %vm1156, %v1569
        %1586 = vst.msk [vmem:[%s356 + $0x68] sm:$0xff] %vm1156, %v1570
        %1587 = vst.msk [vmem:[%s356 + $0x70] sm:$0xff] %vm1156, %v1571
        %1588 = vst.msk [vmem:[%s356 + $0x78] sm:$0xff] %vm1156, %v1572
        %v1589 = vsel %vm1156, %v1557, 0.0
        %v1590 = vrot.slane %v1589, 4
        %v1591 = vadd.f32 %v1589, %v1590
        %v1592 = vrot.slane %v1591, 2
        %v1593 = vadd.f32 %v1591, %v1592
        %v1594 = vrot.slane %v1593, 1
        %v1595 = vadd.f32 %v1593, %v1594
        %v1596 = vsel %vm1156, %v1558, 0.0
        %v1597 = vrot.slane %v1596, 4
        %v1598 = vadd.f32 %v1596, %v1597
        %v1599 = vrot.slane %v1598, 2
        %v1600 = vadd.f32 %v1598, %v1599
        %v1601 = vrot.slane %v1600, 1
        %v1602 = vadd.f32 %v1600, %v1601
        %v1603 = vsel %vm1156, %v1559, 0.0
        %v1604 = vrot.slane %v1603, 4
        %v1605 = vadd.f32 %v1603, %v1604
        %v1606 = vrot.slane %v1605, 2
        %v1607 = vadd.f32 %v1605, %v1606
        %v1608 = vrot.slane %v1607, 1
        %v1609 = vadd.f32 %v1607, %v1608
        %v1610 = vsel %vm1156, %v1560, 0.0
        %v1611 = vrot.slane %v1610, 4
        %v1612 = vadd.f32 %v1610, %v1611
        %v1613 = vrot.slane %v1612, 2
        %v1614 = vadd.f32 %v1612, %v1613
        %v1615 = vrot.slane %v1614, 1
        %v1616 = vadd.f32 %v1614, %v1615
        %v1617 = vsel %vm1156, %v1561, 0.0
        %v1618 = vrot.slane %v1617, 4
        %v1619 = vadd.f32 %v1617, %v1618
        %v1620 = vrot.slane %v1619, 2
        %v1621 = vadd.f32 %v1619, %v1620
        %v1622 = vrot.slane %v1621, 1
        %v1623 = vadd.f32 %v1621, %v1622
        %v1624 = vsel %vm1156, %v1562, 0.0
        %v1625 = vrot.slane %v1624, 4
        %v1626 = vadd.f32 %v1624, %v1625
        %v1627 = vrot.slane %v1626, 2
        %v1628 = vadd.f32 %v1626, %v1627
        %v1629 = vrot.slane %v1628, 1
        %v1630 = vadd.f32 %v1628, %v1629
        %v1631 = vsel %vm1156, %v1563, 0.0
        %v1632 = vrot.slane %v1631, 4
        %v1633 = vadd.f32 %v1631, %v1632
        %v1634 = vrot.slane %v1633, 2
        %v1635 = vadd.f32 %v1633, %v1634
        %v1636 = vrot.slane %v1635, 1
        %v1637 = vadd.f32 %v1635, %v1636
        %v1638 = vsel %vm1156, %v1564, 0.0
        %v1639 = vrot.slane %v1638, 4
        %v1640 = vadd.f32 %v1638, %v1639
        %v1641 = vrot.slane %v1640, 2
        %v1642 = vadd.f32 %v1640, %v1641
        %v1643 = vrot.slane %v1642, 1
        %v1644 = vadd.f32 %v1642, %v1643
        %v1645 = vsel %vm1156, %v1565, 0.0
        %v1646 = vrot.slane %v1645, 4
        %v1647 = vadd.f32 %v1645, %v1646
        %v1648 = vrot.slane %v1647, 2
        %v1649 = vadd.f32 %v1647, %v1648
        %v1650 = vrot.slane %v1649, 1
        %v1651 = vadd.f32 %v1649, %v1650
        %v1652 = vsel %vm1156, %v1566, 0.0
        %v1653 = vrot.slane %v1652, 4
        %v1654 = vadd.f32 %v1652, %v1653
        %v1655 = vrot.slane %v1654, 2
        %v1656 = vadd.f32 %v1654, %v1655
        %v1657 = vrot.slane %v1656, 1
        %v1658 = vadd.f32 %v1656, %v1657
        %v1659 = vsel %vm1156, %v1567, 0.0
        %v1660 = vrot.slane %v1659, 4
        %v1661 = vadd.f32 %v1659, %v1660
        %v1662 = vrot.slane %v1661, 2
        %v1663 = vadd.f32 %v1661, %v1662
        %v1664 = vrot.slane %v1663, 1
        %v1665 = vadd.f32 %v1663, %v1664
        %v1666 = vsel %vm1156, %v1568, 0.0
        %v1667 = vrot.slane %v1666, 4
        %v1668 = vadd.f32 %v1666, %v1667
        %v1669 = vrot.slane %v1668, 2
        %v1670 = vadd.f32 %v1668, %v1669
        %v1671 = vrot.slane %v1670, 1
        %v1672 = vadd.f32 %v1670, %v1671
        %v1673 = vsel %vm1156, %v1569, 0.0
        %v1674 = vrot.slane %v1673, 4
        %v1675 = vadd.f32 %v1673, %v1674
        %v1676 = vrot.slane %v1675, 2
        %v1677 = vadd.f32 %v1675, %v1676
        %v1678 = vrot.slane %v1677, 1
        %v1679 = vadd.f32 %v1677, %v1678
        %v1680 = vsel %vm1156, %v1570, 0.0
        %v1681 = vrot.slane %v1680, 4
        %v1682 = vadd.f32 %v1680, %v1681
        %v1683 = vrot.slane %v1682, 2
        %v1684 = vadd.f32 %v1682, %v1683
        %v1685 = vrot.slane %v1684, 1
        %v1686 = vadd.f32 %v1684, %v1685
        %v1687 = vsel %vm1156, %v1571, 0.0
        %v1688 = vrot.slane %v1687, 4
        %v1689 = vadd.f32 %v1687, %v1688
        %v1690 = vrot.slane %v1689, 2
        %v1691 = vadd.f32 %v1689, %v1690
        %v1692 = vrot.slane %v1691, 1
        %v1693 = vadd.f32 %v1691, %v1692
        %v1694 = vsel %vm1156, %v1572, 0.0
        %v1695 = vrot.slane %v1694, 4
        %v1696 = vadd.f32 %v1694, %v1695
        %v1697 = vrot.slane %v1696, 2
        %v1698 = vadd.f32 %v1696, %v1697
        %v1699 = vrot.slane %v1698, 1
        %v1700 = vadd.f32 %v1698, %v1699
        %vm1717 = vcmask 1041409
        %v1718 = vsel %vm1717, %v1602, %v1595
        %vm1719 = vcmask 1042434
        %v1720 = vsel %vm1719, %v1609, %v1718
        %vm1721 = vcmask 1043459
        %v1722 = vsel %vm1721, %v1616, %v1720
        %vm1723 = vcmask 1044484
        %v1724 = vsel %vm1723, %v1623, %v1722
        %vm1725 = vcmask 1045509
        %v1726 = vsel %vm1725, %v1630, %v1724
        %vm1727 = vcmask 1046534
        %v1728 = vsel %vm1727, %v1637, %v1726
        %vm1729 = vcmask 1047559
        %v1730 = vsel %vm1729, %v1644, %v1728
        %v1731 = vsel %vm1717, %v1658, %v1651
        %v1732 = vsel %vm1719, %v1665, %v1731
        %v1733 = vsel %vm1721, %v1672, %v1732
        %v1734 = vsel %vm1723, %v1679, %v1733
        %v1735 = vsel %vm1725, %v1686, %v1734
        %v1736 = vsel %vm1727, %v1693, %v1735
        %v1737 = vsel %vm1729, %v1700, %v1736
        %1740 = vst.msk [vmem:[%s350] sm:$0xff] %vm1156, %v1730
        %1741 = vst.msk [vmem:[%s350 + $0x8] sm:$0xff] %vm1156, %v1737
        %s1742 = smul.u32 2, %s24
        %p1743 = scmp.lt.s32.totalorder %s1742, 3
        %s1744 = scalar_select %p1743, %s1742, 3
        %s1745 = smul.addr %s1744, 8
        %s1746 = scalar_lea.vmem %s7, %s1745
        %s1747 = smul.u32 16, %s24
        %p1748 = scmp.lt.s32.totalorder %s1747, 31
        %s1749 = scalar_select %p1748, %s1747, 31
        %s1750 = smul.addr %s1749, 8
        %s1751 = scalar_lea.vmem %s8, %s1750
        // Predicated region
        $region57: #{tpu_custom_call.1} parent=47 // pred_check
          %p1752 = pneg %p194
        $region58: #{tpu_custom_call.1} parent=47 // pred_check_branch
          %1754 = sbr.rel (%p1752) target = $region60
        $region59: #{tpu_custom_call.1} parent=47 // pred_region
          %s1755 = smul.u32 2, %s24
        $region60: #{tpu_custom_call.1} parent=47 // pred_fallthru
          _
        // Predicated region
        $region61: #{tpu_custom_call.1} parent=47 // pred_check
          %p1756 = pneg %p220
        $region62: #{tpu_custom_call.1} parent=47 // pred_check_branch
          %1758 = sbr.rel (%p1756) target = $region64
        $region63: #{tpu_custom_call.1} parent=47 // pred_region
          %s1759 = smul.u32 16, %s24
        $region64: #{tpu_custom_call.1} parent=47 // pred_fallthru
          _
      $region48: #{tpu_custom_call.1} parent=5 // pred_fallthru
        _
      %p1760 = scmp.le.s32.totalorder 2, %s19
      // Predicated region
      $region65: #{tpu_custom_call.1} parent=5 // pred_check
        %p1761 = pneg %p1760
      $region66: #{tpu_custom_call.1} parent=5 // pred_check_branch
        %1763 = sbr.rel (%p1761) target = $region68
      $region67: #{tpu_custom_call.1} parent=5 // pred_region
        %s1764 = ssub.s32 %s19, 2
        // Predicated region
        $region69: #{tpu_custom_call.1} parent=67 // pred_check
          %p1765 = pneg %p200
        $region70: #{tpu_custom_call.1} parent=67 // pred_check_branch
          %1767 = sbr.rel (%p1765) target = $region72
        $region71: #{tpu_custom_call.1} parent=67 // pred_region
          %s1768 = smul.u32 2, %s25
          %p1769 = scmp.lt.s32.totalorder %s1768, 3
          %s1770 = scalar_select %p1769, %s1768, 3
          %s1771 = smul.addr %s1770, 8
          %s1772 = scalar_lea.vmem %s7, %s1771
        $region72: #{tpu_custom_call.1} parent=67 // pred_fallthru
          _
        // Predicated region
        $region73: #{tpu_custom_call.1} parent=67 // pred_check
          %p1773 = pneg %p226
        $region74: #{tpu_custom_call.1} parent=67 // pred_check_branch
          %1775 = sbr.rel (%p1773) target = $region76
        $region75: #{tpu_custom_call.1} parent=67 // pred_region
          %s1776 = smul.u32 16, %s25
          %p1777 = scmp.lt.s32.totalorder %s1776, 31
          %s1778 = scalar_select %p1777, %s1776, 31
          %s1779 = smul.addr %s1778, 8
          %s1780 = scalar_lea.vmem %s8, %s1779
        $region76: #{tpu_custom_call.1} parent=67 // pred_fallthru
          _
      $region68: #{tpu_custom_call.1} parent=5 // pred_fallthru
        _
    $region6: #{tpu_custom_call.1} parent=1 // loop_footer
      %s23 = sadd.s32 1, %s19
    $region7: #{tpu_custom_call.1} parent=1 // loop_footer_branch
      %18 = sbr.rel target = $region3
    $region8: #{tpu_custom_call.1} parent=1 // loop_exit
      _
    %1781 = vsyncpa [#allocation3], 1
    %s1782 = scalar_lea.sflag [#allocation3], 1
    %1783 = vsyncpa %s1782, 1
    %1784 = vsyncpa [#allocation5], 1

</llo_original>
